<compile_context>
chip_gen: v5e
topology: v5e:2x2
jax: 0.10.0
libtpu: 0.0.40
codegen_flags: <defaults>
</compile_context>

<pallas_src>
import numpy as np
import jax
import jax.numpy as jnp
from jax.experimental import pallas as pl
from jax.experimental.pallas import tpu as pltpu


# (Cin, Cout, b_in, b_out) -- exactly the schedule of S2ConvNet_deep
CONV_DEFS = [
    (1029, 20, 15, 15),
    (20, 16, 15, 8),
    (16, 16, 8, 8),
    (16, 24, 8, 4),
    (24, 24, 4, 4),
    (24, 32, 4, 2),
    (32, 64, 2, 2),
]


# ----------------------------------------------------------------------------
# Host-side constant operators (nearest-neighbour resample / quadrature)
# ----------------------------------------------------------------------------
def _resample_idx(n_in, n_out):
    return np.round(np.linspace(0.0, n_in - 1.0, n_out)).astype(np.int64)


def _so3_quadrature_weights(b):
    # Driscoll-Healy (SOFT) beta-quadrature weights, as in lie_learn.
    # TODO(synk): cross-check the global normalization constant against
    # lie_learn.spaces.S3.quadrature_weights (possible constant-factor offset).
    k = np.arange(b)
    return np.array([
        (2.0 / b) * np.sin(np.pi * (2 * j + 1) / (4 * b)) *
        np.sum(np.sin((2 * j + 1) * (2 * k + 1) * np.pi / (4 * b)) / (2 * k + 1))
        for j in range(2 * b)
    ], dtype=np.float64)


def _spatial_select_matrix(B, n_in, n_out):
    """0/1 row-selection matrix for nearest-neighbour bandwidth resampling on a
    flattened (batch, beta, alpha) row index; block-diagonal over batch."""
    idx = _resample_idx(n_in, n_out)
    S = np.zeros((B * n_out * n_out, B * n_in * n_in), dtype=np.float32)
    for b in range(B):
        for o2 in range(n_out):
            for o3 in range(n_out):
                r = b * n_out * n_out + o2 * n_out + o3
                c = b * n_in * n_in + idx[o2] * n_in + idx[o3]
                S[r, c] = 1.0
    return S


def _integrate_matrix(B, b_out):
    """so3_integrate as a matmul: Q[b, b*(2b)^2 + beta*(2b) + alpha] =
    w_beta[beta] * (2*b_out).  The (2*b_out) factor is the gamma sum (the
    approximated signal is constant along gamma, so gamma is never stored)."""
    m = 2 * b_out
    w = _so3_quadrature_weights(b_out)
    Q = np.zeros((B, B * m * m), dtype=np.float32)
    for b in range(B):
        for beta in range(m):
            for alpha in range(m):
                Q[b, b * m * m + beta * m + alpha] = w[beta] * m
    return Q


# ----------------------------------------------------------------------------
# Pallas kernel 1: Stage A (layers 0 and 1), channels-first, single input read
# ----------------------------------------------------------------------------
def _stage_a_kernel(x_ref, w0t_ref, b0_ref, w1t_ref, b1_ref, o_ref):
    # x_ref: (1, 1029, 900) f32, channels-first (the raw input layout), so the
    # input is never transposed / padded / re-cast through HBM.  Weights are
    # pre-transposed on the host -> no in-kernel transposes.
    x = x_ref[0]                                                          # (1029, 900)
    h = jnp.dot(w0t_ref[...], x, preferred_element_type=jnp.float32)     # (20, 900)
    h = jnp.maximum(h + b0_ref[...], 0.0)
    h = jnp.dot(w1t_ref[...], h, preferred_element_type=jnp.float32)     # (16, 900)
    o_ref[0] = jnp.maximum(h + b1_ref[...], 0.0)


def stage_a(x, w0t, b0, w1t, b1):
    B, cin, nb, na = x.shape
    S = nb * na
    x3 = x.reshape(B, cin, S)                    # pure metadata reshape
    c_out = w1t.shape[0]
    return pl.pallas_call(
        _stage_a_kernel,
        out_shape=jax.ShapeDtypeStruct((B, c_out, S), jnp.float32),
        grid=(B,),
        in_specs=[
            pl.BlockSpec((1, cin, S), lambda b: (b, 0, 0)),
            pl.BlockSpec(w0t.shape, lambda b: (0, 0)),
            pl.BlockSpec(b0.shape, lambda b: (0, 0)),
            pl.BlockSpec(w1t.shape, lambda b: (0, 0)),
            pl.BlockSpec(b1.shape, lambda b: (0, 0)),
        ],
        out_specs=pl.BlockSpec((1, c_out, S), lambda b: (b, 0, 0)),
        compiler_params=pltpu.CompilerParams(
            dimension_semantics=("parallel",),
            vmem_limit_bytes=32 * 1024 * 1024),
    )(x3, w0t, b0, w1t, b1)


# ----------------------------------------------------------------------------
# Pallas kernel 2: fused tail (layers 2..6, resamples, so3_integrate, head)
# ----------------------------------------------------------------------------
def _tail_kernel(h_ref,
                 w2_ref, b2_ref, w3_ref, b3_ref, w4_ref, b4_ref,
                 w5_ref, b5_ref, w6_ref, b6_ref,
                 s1_ref, s2_ref, q_ref,
                 wl1_ref, cl1_ref, wl2_ref, cl2_ref, wl3_ref, cl3_ref,
                 o_ref):
    def mix_relu(h, w_ref, b_ref):
        acc = jnp.dot(h, w_ref[...], preferred_element_type=jnp.float32)
        return jnp.maximum(acc + b_ref[...], 0.0)

    h = h_ref[...]                                                        # (B*256, 16)  b=8 grid
    h = mix_relu(h, w2_ref, b2_ref)                                       # SO3 conv 16->16
    h = jnp.dot(s1_ref[...], h, preferred_element_type=jnp.float32)       # resample b=8 -> b=4
    h = mix_relu(h, w3_ref, b3_ref)                                       # 16->24
    h = mix_relu(h, w4_ref, b4_ref)                                       # 24->24
    h = jnp.dot(s2_ref[...], h, preferred_element_type=jnp.float32)       # resample b=4 -> b=2
    h = mix_relu(h, w5_ref, b5_ref)                                       # 24->32
    h = mix_relu(h, w6_ref, b6_ref)                                       # 32->64
    feat = jnp.dot(q_ref[...], h, preferred_element_type=jnp.float32)     # so3_integrate -> (B, 64)

    # BatchNorm (eval-mode running statistics) was folded into the Linear
    # weights on the host, so the head is three plain affine layers.
    z = jnp.maximum(jnp.dot(feat, wl1_ref[...],
                            preferred_element_type=jnp.float32) + cl1_ref[...], 0.0)
    z = jnp.maximum(jnp.dot(z, wl2_ref[...],
                            preferred_element_type=jnp.float32) + cl2_ref[...], 0.0)
    o_ref[...] = jnp.dot(z, wl3_ref[...],
                         preferred_element_type=jnp.float32) + cl3_ref[...]


def tail_call(h2d, conv_tail, s1, s2, q, head, B):
    args = [h2d]
    for W, b in conv_tail:
        args += [W, b]
    args += [s1, s2, q]
    for W, c in head:
        args += [W, c]

    def _full(shape):
        nd = len(shape)
        return pl.BlockSpec(shape, lambda i, _nd=nd: (0,) * _nd)

    return pl.pallas_call(
        _tail_kernel,
        out_shape=jax.ShapeDtypeStruct((B, 2), jnp.float32),
        grid=(1,),
        in_specs=[_full(a.shape) for a in args],
        out_specs=_full((B, 2)),
    )(*args)


# ----------------------------------------------------------------------------
# Parameters and forward pass
# ----------------------------------------------------------------------------
def init_params(key):
    keys = iter(jax.random.split(key, 64))

    def uni(shape, bound):
        return jax.random.uniform(next(keys), shape, jnp.float32, -bound, bound)

    conv = []
    for cin, cout, _bi, _bo in CONV_DEFS:
        s = 1.0 / np.sqrt(cin)
        conv.append((uni((cin, cout), s), uni((cout,), s)))

    params = {
        # Stage-A weights stored pre-transposed (channels-first compute).
        "w0t": conv[0][0].T, "b0": conv[0][1].reshape(-1, 1),
        "w1t": conv[1][0].T, "b1": conv[1][1].reshape(-1, 1),
        "conv_tail": [(W, b.reshape(1, -1)) for (W, b) in conv[2:]],
        "bn": [],
        "lin": [],
    }
    for fin, fout in ((64, 64), (64, 32), (32, 2)):
        s = 1.0 / np.sqrt(fin)
        params["lin"].append((uni((fin, fout), s), uni((1, fout), s)))
        params["bn"].append((jnp.ones((fin,), jnp.float32),    # gamma
                             jnp.zeros((fin,), jnp.float32),   # beta
                             jnp.zeros((fin,), jnp.float32),   # running mean
                             jnp.ones((fin,), jnp.float32)))   # running var
    return params


def forward(params, x):
    B, cin, nb, na = x.shape
    m8 = 2 * CONV_DEFS[1][3]        # 16  (b=8 grid)
    m4 = 2 * CONV_DEFS[3][3]        # 8   (b=4 grid)
    m2 = 2 * CONV_DEFS[5][3]        # 4   (b=2 grid)
    c1 = params["w1t"].shape[0]     # 16 channels after layer 1

    # --- Stage A: layers 0+1 on the (beta, alpha) grid, input read once. ---
    h = stage_a(x, params["w0t"], params["b0"], params["w1t"], params["b1"])  # (B, 16, nb*na)

    # Bandwidth b=15 -> b=8 (nearest-neighbour) + channels-last row layout.
    # Tiny (<60 KB) XLA glue between the two Pallas calls.
    idx_b = jnp.asarray(_resample_idx(nb, m8).astype(np.int32))
    idx_a = jnp.asarray(_resample_idx(na, m8).astype(np.int32))
    h = h.reshape(B, c1, nb, na)
    h = jnp.take(h, idx_b, axis=2)
    h = jnp.take(h, idx_a, axis=3)                                  # (B, 16, 16, 16)
    h = jnp.transpose(h, (0, 2, 3, 1)).reshape(B * m8 * m8, c1)     # rows = (b, beta, alpha)

    # Constant resampling / integration operators (trace-time numpy constants).
    s1 = jnp.asarray(_spatial_select_matrix(B, m8, m4))             # b=8 -> b=4
    s2 = jnp.asarray(_spatial_select_matrix(B, m4, m2))             # b=4 -> b=2
    q = jnp.asarray(_integrate_matrix(B, m2 // 2))                  # so3_integrate (+ gamma sum)

    # Fold eval-mode BatchNorm (running statistics) into the following Linear.
    # (Training-mode batch statistics would differ; eval semantics match
    # model.eval() and avoid degenerate variance at tiny batch sizes.)
    head = []
    for (g, be, rm, rv), (W, c) in zip(params["bn"], params["lin"]):
        s = g / jnp.sqrt(rv + 1e-5)
        head.append((W * s[:, None], c + (be - rm * s)[None, :] @ W))

    # --- Fused tail: convs 2..6 + resamples + integrate + head, one kernel. ---
    return tail_call(h, params["conv_tail"], s1, s2, q, head, B)


if __name__ == "__main__":
    key = jax.random.PRNGKey(0)
    k_x, k_p = jax.random.split(key)
    B = 2
    # input implied by the module: [B, 1029, 2*15, 2*15]
    x = jax.random.normal(k_x, (B, 1029, 30, 30), dtype=jnp.float32)

    params = init_params(k_p)
    fwd = jax.jit(forward)
    out = jax.block_until_ready(fwd(params, x))
    assert out.shape == (B, 2) and out.dtype == jnp.float32
    print("KERNEL_OK")
</pallas_src>

<mosaic_0001>
module attributes {stable_mosaic.version = 11 : i64} {
  func.func @_stage_a_kernel(%arg0: i32, %arg1: memref<1x1029x900xf32, #tpu.memory_space<vmem>>, %arg2: memref<20x1029xf32, #tpu.memory_space<vmem>>, %arg3: memref<20x1xf32, #tpu.memory_space<vmem>>, %arg4: memref<16x20xf32, #tpu.memory_space<vmem>>, %arg5: memref<16x1xf32, #tpu.memory_space<vmem>>, %arg6: memref<1x16x900xf32, #tpu.memory_space<vmem>>) attributes {dimension_semantics = [#tpu.dimension_semantics<parallel>], iteration_bounds = array<i64: 2>, scalar_prefetch = 0 : i64, scratch_operands = 0 : i64, tpu.core_type = #tpu.core_type<tc>, window_params = [{transform_indices = @transform_0, window_bounds = array<i64: 1, 1029, 900>}, {pipeline_mode = #tpu.pipeline_mode<synchronous>, transform_indices = @transform_1, window_bounds = array<i64: 20, 1029>}, {pipeline_mode = #tpu.pipeline_mode<synchronous>, transform_indices = @transform_2, window_bounds = array<i64: 20, 1>}, {pipeline_mode = #tpu.pipeline_mode<synchronous>, transform_indices = @transform_3, window_bounds = array<i64: 16, 20>}, {pipeline_mode = #tpu.pipeline_mode<synchronous>, transform_indices = @transform_4, window_bounds = array<i64: 16, 1>}, {transform_indices = @transform_5, window_bounds = array<i64: 1, 16, 900>}]} {
    %c0 = arith.constant 0 : index
    %c0_0 = arith.constant 0 : index
    %c0_1 = arith.constant 0 : index
    %0 = vector.load %arg1[%c0, %c0_0, %c0_1] : memref<1x1029x900xf32, #tpu.memory_space<vmem>>, vector<1x1029x900xf32>
    %1 = vector.shape_cast %0 : vector<1x1029x900xf32> to vector<1029x900xf32>
    %c0_2 = arith.constant 0 : index
    %c0_3 = arith.constant 0 : index
    %2 = vector.load %arg2[%c0_2, %c0_3] : memref<20x1029xf32, #tpu.memory_space<vmem>>, vector<20x1029xf32>
    %cst = arith.constant dense<0.000000e+00> : vector<20x900xf32>
    %3 = tpu.matmul %2, %1, %cst {dimension_numbers = #tpu.dot_dimension_numbers<[1], [0], [0], [1], [0, 0, 1, 1], [], []>} : vector<20x1029xf32>, vector<1029x900xf32>, vector<20x900xf32> -> vector<20x900xf32>
    %c0_4 = arith.constant 0 : index
    %c0_5 = arith.constant 0 : index
    %4 = vector.load %arg3[%c0_4, %c0_5] : memref<20x1xf32, #tpu.memory_space<vmem>>, vector<20x1xf32>
    %5 = vector.broadcast %4 : vector<20x1xf32> to vector<20x900xf32>
    %6 = arith.addf %3, %5 : vector<20x900xf32>
    %cst_6 = arith.constant 0.000000e+00 : f32
    %7 = vector.broadcast %cst_6 : f32 to vector<20x900xf32>
    %8 = arith.maximumf %6, %7 : vector<20x900xf32>
    %c0_7 = arith.constant 0 : index
    %c0_8 = arith.constant 0 : index
    %9 = vector.load %arg4[%c0_7, %c0_8] : memref<16x20xf32, #tpu.memory_space<vmem>>, vector<16x20xf32>
    %cst_9 = arith.constant dense<0.000000e+00> : vector<16x900xf32>
    %10 = tpu.matmul %9, %8, %cst_9 {dimension_numbers = #tpu.dot_dimension_numbers<[1], [0], [0], [1], [0, 0, 1, 1], [], []>} : vector<16x20xf32>, vector<20x900xf32>, vector<16x900xf32> -> vector<16x900xf32>
    %c0_10 = arith.constant 0 : index
    %c0_11 = arith.constant 0 : index
    %11 = vector.load %arg5[%c0_10, %c0_11] : memref<16x1xf32, #tpu.memory_space<vmem>>, vector<16x1xf32>
    %12 = vector.broadcast %11 : vector<16x1xf32> to vector<16x900xf32>
    %13 = arith.addf %10, %12 : vector<16x900xf32>
    %cst_12 = arith.constant 0.000000e+00 : f32
    %14 = vector.broadcast %cst_12 : f32 to vector<16x900xf32>
    %15 = arith.maximumf %13, %14 : vector<16x900xf32>
    %c0_13 = arith.constant 0 : index
    %c0_14 = arith.constant 0 : index
    %c0_15 = arith.constant 0 : index
    %16 = vector.load %arg6[%c0_13, %c0_14, %c0_15] : memref<1x16x900xf32, #tpu.memory_space<vmem>>, vector<1x16x900xf32>
    %17 = vector.shape_cast %16 : vector<1x16x900xf32> to vector<16x900xf32>
    %18 = vector.shape_cast %15 : vector<16x900xf32> to vector<1x16x900xf32>
    tpu.vector_store %arg6[%c0_13, %c0_14, %c0_15], %18 {strides = array<i32>} : memref<1x16x900xf32, #tpu.memory_space<vmem>>, vector<1x16x900xf32>,
    return
  }
  func.func @transform_0(%arg0: i32) -> (i32, i32, i32) {
    %c0_i32 = arith.constant 0 : i32
    %c0_i32_0 = arith.constant 0 : i32
    %c0_i32_1 = arith.constant 0 : i32
    return %arg0, %c0_i32, %c0_i32_0 : i32, i32, i32
  }
  func.func @transform_1(%arg0: i32) -> (i32, i32) {
    %c0_i32 = arith.constant 0 : i32
    %c0_i32_0 = arith.constant 0 : i32
    %c0_i32_1 = arith.constant 0 : i32
    return %c0_i32, %c0_i32_0 : i32, i32
  }
  func.func @transform_2(%arg0: i32) -> (i32, i32) {
    %c0_i32 = arith.constant 0 : i32
    %c0_i32_0 = arith.constant 0 : i32
    %c0_i32_1 = arith.constant 0 : i32
    return %c0_i32, %c0_i32_0 : i32, i32
  }
  func.func @transform_3(%arg0: i32) -> (i32, i32) {
    %c0_i32 = arith.constant 0 : i32
    %c0_i32_0 = arith.constant 0 : i32
    %c0_i32_1 = arith.constant 0 : i32
    return %c0_i32, %c0_i32_0 : i32, i32
  }
  func.func @transform_4(%arg0: i32) -> (i32, i32) {
    %c0_i32 = arith.constant 0 : i32
    %c0_i32_0 = arith.constant 0 : i32
    %c0_i32_1 = arith.constant 0 : i32
    return %c0_i32, %c0_i32_0 : i32, i32
  }
  func.func @transform_5(%arg0: i32) -> (i32, i32, i32) {
    %c0_i32 = arith.constant 0 : i32
    %c0_i32_0 = arith.constant 0 : i32
    %c0_i32_1 = arith.constant 0 : i32
    return %arg0, %c0_i32, %c0_i32_0 : i32, i32, i32
  }
}

module attributes {stable_mosaic.version = 11 : i64} {
  func.func @_tail_kernel(%arg0: i32, %arg1: memref<512x16xf32, #tpu.memory_space<vmem>>, %arg2: memref<16x16xf32, #tpu.memory_space<vmem>>, %arg3: memref<1x16xf32, #tpu.memory_space<vmem>>, %arg4: memref<16x24xf32, #tpu.memory_space<vmem>>, %arg5: memref<1x24xf32, #tpu.memory_space<vmem>>, %arg6: memref<24x24xf32, #tpu.memory_space<vmem>>, %arg7: memref<1x24xf32, #tpu.memory_space<vmem>>, %arg8: memref<24x32xf32, #tpu.memory_space<vmem>>, %arg9: memref<1x32xf32, #tpu.memory_space<vmem>>, %arg10: memref<32x64xf32, #tpu.memory_space<vmem>>, %arg11: memref<1x64xf32, #tpu.memory_space<vmem>>, %arg12: memref<128x512xf32, #tpu.memory_space<vmem>>, %arg13: memref<32x128xf32, #tpu.memory_space<vmem>>, %arg14: memref<2x32xf32, #tpu.memory_space<vmem>>, %arg15: memref<64x64xf32, #tpu.memory_space<vmem>>, %arg16: memref<1x64xf32, #tpu.memory_space<vmem>>, %arg17: memref<64x32xf32, #tpu.memory_space<vmem>>, %arg18: memref<1x32xf32, #tpu.memory_space<vmem>>, %arg19: memref<32x2xf32, #tpu.memory_space<vmem>>, %arg20: memref<1x2xf32, #tpu.memory_space<vmem>>, %arg21: memref<2x2xf32, #tpu.memory_space<vmem>>) attributes {dimension_semantics = [#tpu.dimension_semantics<arbitrary>], iteration_bounds = array<i64: 1>, scalar_prefetch = 0 : i64, scratch_operands = 0 : i64, tpu.core_type = #tpu.core_type<tc>, window_params = [{pipeline_mode = #tpu.pipeline_mode<synchronous>, transform_indices = @transform_0, window_bounds = array<i64: 512, 16>}, {pipeline_mode = #tpu.pipeline_mode<synchronous>, transform_indices = @transform_1, window_bounds = array<i64: 16, 16>}, {pipeline_mode = #tpu.pipeline_mode<synchronous>, transform_indices = @transform_2, window_bounds = array<i64: 1, 16>}, {pipeline_mode = #tpu.pipeline_mode<synchronous>, transform_indices = @transform_3, window_bounds = array<i64: 16, 24>}, {pipeline_mode = #tpu.pipeline_mode<synchronous>, transform_indices = @transform_4, window_bounds = array<i64: 1, 24>}, {pipeline_mode = #tpu.pipeline_mode<synchronous>, transform_indices = @transform_5, window_bounds = array<i64: 24, 24>}, {pipeline_mode = #tpu.pipeline_mode<synchronous>, transform_indices = @transform_6, window_bounds = array<i64: 1, 24>}, {pipeline_mode = #tpu.pipeline_mode<synchronous>, transform_indices = @transform_7, window_bounds = array<i64: 24, 32>}, {pipeline_mode = #tpu.pipeline_mode<synchronous>, transform_indices = @transform_8, window_bounds = array<i64: 1, 32>}, {pipeline_mode = #tpu.pipeline_mode<synchronous>, transform_indices = @transform_9, window_bounds = array<i64: 32, 64>}, {pipeline_mode = #tpu.pipeline_mode<synchronous>, transform_indices = @transform_10, window_bounds = array<i64: 1, 64>}, {pipeline_mode = #tpu.pipeline_mode<synchronous>, transform_indices = @transform_11, window_bounds = array<i64: 128, 512>}, {pipeline_mode = #tpu.pipeline_mode<synchronous>, transform_indices = @transform_12, window_bounds = array<i64: 32, 128>}, {pipeline_mode = #tpu.pipeline_mode<synchronous>, transform_indices = @transform_13, window_bounds = array<i64: 2, 32>}, {pipeline_mode = #tpu.pipeline_mode<synchronous>, transform_indices = @transform_14, window_bounds = array<i64: 64, 64>}, {pipeline_mode = #tpu.pipeline_mode<synchronous>, transform_indices = @transform_15, window_bounds = array<i64: 1, 64>}, {pipeline_mode = #tpu.pipeline_mode<synchronous>, transform_indices = @transform_16, window_bounds = array<i64: 64, 32>}, {pipeline_mode = #tpu.pipeline_mode<synchronous>, transform_indices = @transform_17, window_bounds = array<i64: 1, 32>}, {pipeline_mode = #tpu.pipeline_mode<synchronous>, transform_indices = @transform_18, window_bounds = array<i64: 32, 2>}, {pipeline_mode = #tpu.pipeline_mode<synchronous>, transform_indices = @transform_19, window_bounds = array<i64: 1, 2>}, {pipeline_mode = #tpu.pipeline_mode<synchronous>, transform_indices = @transform_20, window_bounds = array<i64: 2, 2>}]} {
    %c0 = arith.constant 0 : index
    %c0_0 = arith.constant 0 : index
    %0 = vector.load %arg1[%c0, %c0_0] : memref<512x16xf32, #tpu.memory_space<vmem>>, vector<512x16xf32>
    %c0_1 = arith.constant 0 : index
    %c0_2 = arith.constant 0 : index
    %1 = vector.load %arg2[%c0_1, %c0_2] : memref<16x16xf32, #tpu.memory_space<vmem>>, vector<16x16xf32>
    %cst = arith.constant dense<0.000000e+00> : vector<512x16xf32>
    %2 = tpu.matmul %0, %1, %cst {dimension_numbers = #tpu.dot_dimension_numbers<[1], [0], [0], [1], [0, 0, 1, 1], [], []>} : vector<512x16xf32>, vector<16x16xf32>, vector<512x16xf32> -> vector<512x16xf32>
    %c0_3 = arith.constant 0 : index
    %c0_4 = arith.constant 0 : index
    %3 = vector.load %arg3[%c0_3, %c0_4] : memref<1x16xf32, #tpu.memory_space<vmem>>, vector<1x16xf32>
    %4 = vector.broadcast %3 : vector<1x16xf32> to vector<512x16xf32>
    %5 = arith.addf %2, %4 : vector<512x16xf32>
    %cst_5 = arith.constant 0.000000e+00 : f32
    %6 = vector.broadcast %cst_5 : f32 to vector<512x16xf32>
    %7 = arith.maximumf %5, %6 : vector<512x16xf32>
    %c0_6 = arith.constant 0 : index
    %c0_7 = arith.constant 0 : index
    %8 = vector.load %arg12[%c0_6, %c0_7] : memref<128x512xf32, #tpu.memory_space<vmem>>, vector<128x512xf32>
    %cst_8 = arith.constant dense<0.000000e+00> : vector<128x16xf32>
    %9 = tpu.matmul %8, %7, %cst_8 {dimension_numbers = #tpu.dot_dimension_numbers<[1], [0], [0], [1], [0, 0, 1, 1], [], []>} : vector<128x512xf32>, vector<512x16xf32>, vector<128x16xf32> -> vector<128x16xf32>
    %c0_9 = arith.constant 0 : index
    %c0_10 = arith.constant 0 : index
    %10 = vector.load %arg4[%c0_9, %c0_10] : memref<16x24xf32, #tpu.memory_space<vmem>>, vector<16x24xf32>
    %cst_11 = arith.constant dense<0.000000e+00> : vector<128x24xf32>
    %11 = tpu.matmul %9, %10, %cst_11 {dimension_numbers = #tpu.dot_dimension_numbers<[1], [0], [0], [1], [0, 0, 1, 1], [], []>} : vector<128x16xf32>, vector<16x24xf32>, vector<128x24xf32> -> vector<128x24xf32>
    %c0_12 = arith.constant 0 : index
    %c0_13 = arith.constant 0 : index
    %12 = vector.load %arg5[%c0_12, %c0_13] : memref<1x24xf32, #tpu.memory_space<vmem>>, vector<1x24xf32>
    %13 = vector.broadcast %12 : vector<1x24xf32> to vector<128x24xf32>
    %14 = arith.addf %11, %13 : vector<128x24xf32>
    %cst_14 = arith.constant 0.000000e+00 : f32
    %15 = vector.broadcast %cst_14 : f32 to vector<128x24xf32>
    %16 = arith.maximumf %14, %15 : vector<128x24xf32>
    %c0_15 = arith.constant 0 : index
    %c0_16 = arith.constant 0 : index
    %17 = vector.load %arg6[%c0_15, %c0_16] : memref<24x24xf32, #tpu.memory_space<vmem>>, vector<24x24xf32>
    %cst_17 = arith.constant dense<0.000000e+00> : vector<128x24xf32>
    %18 = tpu.matmul %16, %17, %cst_17 {dimension_numbers = #tpu.dot_dimension_numbers<[1], [0], [0], [1], [0, 0, 1, 1], [], []>} : vector<128x24xf32>, vector<24x24xf32>, vector<128x24xf32> -> vector<128x24xf32>
    %c0_18 = arith.constant 0 : index
    %c0_19 = arith.constant 0 : index
    %19 = vector.load %arg7[%c0_18, %c0_19] : memref<1x24xf32, #tpu.memory_space<vmem>>, vector<1x24xf32>
    %20 = vector.broadcast %19 : vector<1x24xf32> to vector<128x24xf32>
    %21 = arith.addf %18, %20 : vector<128x24xf32>
    %cst_20 = arith.constant 0.000000e+00 : f32
    %22 = vector.broadcast %cst_20 : f32 to vector<128x24xf32>
    %23 = arith.maximumf %21, %22 : vector<128x24xf32>
    %c0_21 = arith.constant 0 : index
    %c0_22 = arith.constant 0 : index
    %24 = vector.load %arg13[%c0_21, %c0_22] : memref<32x128xf32, #tpu.memory_space<vmem>>, vector<32x128xf32>
    %cst_23 = arith.constant dense<0.000000e+00> : vector<32x24xf32>
    %25 = tpu.matmul %24, %23, %cst_23 {dimension_numbers = #tpu.dot_dimension_numbers<[1], [0], [0], [1], [0, 0, 1, 1], [], []>} : vector<32x128xf32>, vector<128x24xf32>, vector<32x24xf32> -> vector<32x24xf32>
    %c0_24 = arith.constant 0 : index
    %c0_25 = arith.constant 0 : index
    %26 = vector.load %arg8[%c0_24, %c0_25] : memref<24x32xf32, #tpu.memory_space<vmem>>, vector<24x32xf32>
    %cst_26 = arith.constant dense<0.000000e+00> : vector<32x32xf32>
    %27 = tpu.matmul %25, %26, %cst_26 {dimension_numbers = #tpu.dot_dimension_numbers<[1], [0], [0], [1], [0, 0, 1, 1], [], []>} : vector<32x24xf32>, vector<24x32xf32>, vector<32x32xf32> -> vector<32x32xf32>
    %c0_27 = arith.constant 0 : index
    %c0_28 = arith.constant 0 : index
    %28 = vector.load %arg9[%c0_27, %c0_28] : memref<1x32xf32, #tpu.memory_space<vmem>>, vector<1x32xf32>
    %29 = vector.broadcast %28 : vector<1x32xf32> to vector<32x32xf32>
    %30 = arith.addf %27, %29 : vector<32x32xf32>
    %cst_29 = arith.constant 0.000000e+00 : f32
    %31 = vector.broadcast %cst_29 : f32 to vector<32x32xf32>
    %32 = arith.maximumf %30, %31 : vector<32x32xf32>
    %c0_30 = arith.constant 0 : index
    %c0_31 = arith.constant 0 : index
    %33 = vector.load %arg10[%c0_30, %c0_31] : memref<32x64xf32, #tpu.memory_space<vmem>>, vector<32x64xf32>
    %cst_32 = arith.constant dense<0.000000e+00> : vector<32x64xf32>
    %34 = tpu.matmul %32, %33, %cst_32 {dimension_numbers = #tpu.dot_dimension_numbers<[1], [0], [0], [1], [0, 0, 1, 1], [], []>} : vector<32x32xf32>, vector<32x64xf32>, vector<32x64xf32> -> vector<32x64xf32>
    %c0_33 = arith.constant 0 : index
    %c0_34 = arith.constant 0 : index
    %35 = vector.load %arg11[%c0_33, %c0_34] : memref<1x64xf32, #tpu.memory_space<vmem>>, vector<1x64xf32>
    %36 = vector.broadcast %35 : vector<1x64xf32> to vector<32x64xf32>
    %37 = arith.addf %34, %36 : vector<32x64xf32>
    %cst_35 = arith.constant 0.000000e+00 : f32
    %38 = vector.broadcast %cst_35 : f32 to vector<32x64xf32>
    %39 = arith.maximumf %37, %38 : vector<32x64xf32>
    %c0_36 = arith.constant 0 : index
    %c0_37 = arith.constant 0 : index
    %40 = vector.load %arg14[%c0_36, %c0_37] : memref<2x32xf32, #tpu.memory_space<vmem>>, vector<2x32xf32>
    %cst_38 = arith.constant dense<0.000000e+00> : vector<2x64xf32>
    %41 = tpu.matmul %40, %39, %cst_38 {dimension_numbers = #tpu.dot_dimension_numbers<[1], [0], [0], [1], [0, 0, 1, 1], [], []>} : vector<2x32xf32>, vector<32x64xf32>, vector<2x64xf32> -> vector<2x64xf32>
    %c0_39 = arith.constant 0 : index
    %c0_40 = arith.constant 0 : index
    %42 = vector.load %arg15[%c0_39, %c0_40] : memref<64x64xf32, #tpu.memory_space<vmem>>, vector<64x64xf32>
    %cst_41 = arith.constant dense<0.000000e+00> : vector<2x64xf32>
    %43 = tpu.matmul %41, %42, %cst_41 {dimension_numbers = #tpu.dot_dimension_numbers<[1], [0], [0], [1], [0, 0, 1, 1], [], []>} : vector<2x64xf32>, vector<64x64xf32>, vector<2x64xf32> -> vector<2x64xf32>
    %c0_42 = arith.constant 0 : index
    %c0_43 = arith.constant 0 : index
    %44 = vector.load %arg16[%c0_42, %c0_43] : memref<1x64xf32, #tpu.memory_space<vmem>>, vector<1x64xf32>
    %45 = vector.broadcast %44 : vector<1x64xf32> to vector<2x64xf32>
    %46 = arith.addf %43, %45 : vector<2x64xf32>
    %cst_44 = arith.constant 0.000000e+00 : f32
    %47 = vector.broadcast %cst_44 : f32 to vector<2x64xf32>
    %48 = arith.maximumf %46, %47 : vector<2x64xf32>
    %c0_45 = arith.constant 0 : index
    %c0_46 = arith.constant 0 : index
    %49 = vector.load %arg17[%c0_45, %c0_46] : memref<64x32xf32, #tpu.memory_space<vmem>>, vector<64x32xf32>
    %cst_47 = arith.constant dense<0.000000e+00> : vector<2x32xf32>
    %50 = tpu.matmul %48, %49, %cst_47 {dimension_numbers = #tpu.dot_dimension_numbers<[1], [0], [0], [1], [0, 0, 1, 1], [], []>} : vector<2x64xf32>, vector<64x32xf32>, vector<2x32xf32> -> vector<2x32xf32>
    %c0_48 = arith.constant 0 : index
    %c0_49 = arith.constant 0 : index
    %51 = vector.load %arg18[%c0_48, %c0_49] : memref<1x32xf32, #tpu.memory_space<vmem>>, vector<1x32xf32>
    %52 = vector.broadcast %51 : vector<1x32xf32> to vector<2x32xf32>
    %53 = arith.addf %50, %52 : vector<2x32xf32>
    %cst_50 = arith.constant 0.000000e+00 : f32
    %54 = vector.broadcast %cst_50 : f32 to vector<2x32xf32>
    %55 = arith.maximumf %53, %54 : vector<2x32xf32>
    %c0_51 = arith.constant 0 : index
    %c0_52 = arith.constant 0 : index
    %56 = vector.load %arg19[%c0_51, %c0_52] : memref<32x2xf32, #tpu.memory_space<vmem>>, vector<32x2xf32>
    %cst_53 = arith.constant dense<0.000000e+00> : vector<2x2xf32>
    %57 = tpu.matmul %55, %56, %cst_53 {dimension_numbers = #tpu.dot_dimension_numbers<[1], [0], [0], [1], [0, 0, 1, 1], [], []>} : vector<2x32xf32>, vector<32x2xf32>, vector<2x2xf32> -> vector<2x2xf32>
    %c0_54 = arith.constant 0 : index
    %c0_55 = arith.constant 0 : index
    %58 = vector.load %arg20[%c0_54, %c0_55] : memref<1x2xf32, #tpu.memory_space<vmem>>, vector<1x2xf32>
    %59 = vector.broadcast %58 : vector<1x2xf32> to vector<2x2xf32>
    %60 = arith.addf %57, %59 : vector<2x2xf32>
    %c0_56 = arith.constant 0 : index
    %c0_57 = arith.constant 0 : index
    %61 = vector.load %arg21[%c0_56, %c0_57] : memref<2x2xf32, #tpu.memory_space<vmem>>, vector<2x2xf32>
    tpu.vector_store %arg21[%c0_56, %c0_57], %60 {strides = array<i32>} : memref<2x2xf32, #tpu.memory_space<vmem>>, vector<2x2xf32>,
    return
  }
  func.func @transform_0(%arg0: i32) -> (i32, i32) {
    %c0_i32 = arith.constant 0 : i32
    %c0_i32_0 = arith.constant 0 : i32
    %c0_i32_1 = arith.constant 0 : i32
    return %c0_i32, %c0_i32_0 : i32, i32
  }
  func.func @transform_1(%arg0: i32) -> (i32, i32) {
    %c0_i32 = arith.constant 0 : i32
    %c0_i32_0 = arith.constant 0 : i32
    %c0_i32_1 = arith.constant 0 : i32
    return %c0_i32, %c0_i32_0 : i32, i32
  }
  func.func @transform_2(%arg0: i32) -> (i32, i32) {
    %c0_i32 = arith.constant 0 : i32
    %c0_i32_0 = arith.constant 0 : i32
    %c0_i32_1 = arith.constant 0 : i32
    return %c0_i32, %c0_i32_0 : i32, i32
  }
  func.func @transform_3(%arg0: i32) -> (i32, i32) {
    %c0_i32 = arith.constant 0 : i32
    %c0_i32_0 = arith.constant 0 : i32
    %c0_i32_1 = arith.constant 0 : i32
    return %c0_i32, %c0_i32_0 : i32, i32
  }
  func.func @transform_4(%arg0: i32) -> (i32, i32) {
    %c0_i32 = arith.constant 0 : i32
    %c0_i32_0 = arith.constant 0 : i32
    %c0_i32_1 = arith.constant 0 : i32
    return %c0_i32, %c0_i32_0 : i32, i32
  }
  func.func @transform_5(%arg0: i32) -> (i32, i32) {
    %c0_i32 = arith.constant 0 : i32
    %c0_i32_0 = arith.constant 0 : i32
    %c0_i32_1 = arith.constant 0 : i32
    return %c0_i32, %c0_i32_0 : i32, i32
  }
  func.func @transform_6(%arg0: i32) -> (i32, i32) {
    %c0_i32 = arith.constant 0 : i32
    %c0_i32_0 = arith.constant 0 : i32
    %c0_i32_1 = arith.constant 0 : i32
    return %c0_i32, %c0_i32_0 : i32, i32
  }
  func.func @transform_7(%arg0: i32) -> (i32, i32) {
    %c0_i32 = arith.constant 0 : i32
    %c0_i32_0 = arith.constant 0 : i32
    %c0_i32_1 = arith.constant 0 : i32
    return %c0_i32, %c0_i32_0 : i32, i32
  }
  func.func @transform_8(%arg0: i32) -> (i32, i32) {
    %c0_i32 = arith.constant 0 : i32
    %c0_i32_0 = arith.constant 0 : i32
    %c0_i32_1 = arith.constant 0 : i32
    return %c0_i32, %c0_i32_0 : i32, i32
  }
  func.func @transform_9(%arg0: i32) -> (i32, i32) {
    %c0_i32 = arith.constant 0 : i32
    %c0_i32_0 = arith.constant 0 : i32
    %c0_i32_1 = arith.constant 0 : i32
    return %c0_i32, %c0_i32_0 : i32, i32
  }
  func.func @transform_10(%arg0: i32) -> (i32, i32) {
    %c0_i32 = arith.constant 0 : i32
    %c0_i32_0 = arith.constant 0 : i32
    %c0_i32_1 = arith.constant 0 : i32
    return %c0_i32, %c0_i32_0 : i32, i32
  }
  func.func @transform_11(%arg0: i32) -> (i32, i32) {
    %c0_i32 = arith.constant 0 : i32
    %c0_i32_0 = arith.constant 0 : i32
    %c0_i32_1 = arith.constant 0 : i32
    return %c0_i32, %c0_i32_0 : i32, i32
  }
  func.func @transform_12(%arg0: i32) -> (i32, i32) {
    %c0_i32 = arith.constant 0 : i32
    %c0_i32_0 = arith.constant 0 : i32
    %c0_i32_1 = arith.constant 0 : i32
    return %c0_i32, %c0_i32_0 : i32, i32
  }
  func.func @transform_13(%arg0: i32) -> (i32, i32) {
    %c0_i32 = arith.constant 0 : i32
    %c0_i32_0 = arith.constant 0 : i32
    %c0_i32_1 = arith.constant 0 : i32
    return %c0_i32, %c0_i32_0 : i32, i32
  }
  func.func @transform_14(%arg0: i32) -> (i32, i32) {
    %c0_i32 = arith.constant 0 : i32
    %c0_i32_0 = arith.constant 0 : i32
    %c0_i32_1 = arith.constant 0 : i32
    return %c0_i32, %c0_i32_0 : i32, i32
  }
  func.func @transform_15(%arg0: i32) -> (i32, i32) {
    %c0_i32 = arith.constant 0 : i32
    %c0_i32_0 = arith.constant 0 : i32
    %c0_i32_1 = arith.constant 0 : i32
    return %c0_i32, %c0_i32_0 : i32, i32
  }
  func.func @transform_16(%arg0: i32) -> (i32, i32) {
    %c0_i32 = arith.constant 0 : i32
    %c0_i32_0 = arith.constant 0 : i32
    %c0_i32_1 = arith.constant 0 : i32
    return %c0_i32, %c0_i32_0 : i32, i32
  }
  func.func @transform_17(%arg0: i32) -> (i32, i32) {
    %c0_i32 = arith.constant 0 : i32
    %c0_i32_0 = arith.constant 0 : i32
    %c0_i32_1 = arith.constant 0 : i32
    return %c0_i32, %c0_i32_0 : i32, i32
  }
  func.func @transform_18(%arg0: i32) -> (i32, i32) {
    %c0_i32 = arith.constant 0 : i32
    %c0_i32_0 = arith.constant 0 : i32
    %c0_i32_1 = arith.constant 0 : i32
    return %c0_i32, %c0_i32_0 : i32, i32
  }
  func.func @transform_19(%arg0: i32) -> (i32, i32) {
    %c0_i32 = arith.constant 0 : i32
    %c0_i32_0 = arith.constant 0 : i32
    %c0_i32_1 = arith.constant 0 : i32
    return %c0_i32, %c0_i32_0 : i32, i32
  }
  func.func @transform_20(%arg0: i32) -> (i32, i32) {
    %c0_i32 = arith.constant 0 : i32
    %c0_i32_0 = arith.constant 0 : i32
    %c0_i32_1 = arith.constant 0 : i32
    return %c0_i32, %c0_i32_0 : i32, i32
  }
}

</mosaic_0001>

<llo_original>
// kernel: forward.2
$region0: #{forward.2}
  #allocation0 [shape = 'u32[]', space=smem, size = 0x4, offset = 0x4, fixed_abs, tag = 'smem constant byte address 0x4 - core index']
  #allocation1 [shape = 'u32[72,128]{1,0:T(1,128)}', space=vmem, size = 0x9000, scoped, tag = 'internal scratch']
  %s0 = inlined_call_operand.vmem [shape: f32[2,1029,900], index: 0, kind: input, shape index: {}]
  %s1 = inlined_call_operand.vmem [shape: f32[20,1029], index: 1, kind: input, shape index: {}]
  %s2 = inlined_call_operand.vmem [shape: f32[20,1], index: 2, kind: input, shape index: {}]
  %s3 = inlined_call_operand.vmem [shape: f32[16,20], index: 3, kind: input, shape index: {}]
  %s4 = inlined_call_operand.vmem [shape: f32[16,1], index: 4, kind: input, shape index: {}]
  %s5 = inlined_call_operand.vmem [shape: f32[2,16,900], index: 5, kind: output, shape index: {}]
  %s6 = sld [smem:[#allocation0]]
  $region53: #{forward.2} parent=0
    _
  %s8 = ssub.s32 1, %s6
  %s9 = scalar_select 0, %s8, %s6
  loop: start=0, step=1, limit=4
  $region2: #{forward.2} parent=0 // loop_pre_header
    _
  $region3: #{forward.2} parent=0 // loop_header
    %s11 = sphi 0, %s15
    %p12 = scmp.ge.s32.totalorder %s11, 4
    %s21 = sphi 0, %s23
    %s24 = sphi 0, %s21
    %s25 = sphi 0, %s24
    %s41 = sphi 0, %s25
    %s45 = sphi 0, %s45
    %s47 = sphi 0, %s45
    %s48 = sphi 0, %s47
    %s62 = sphi 0, %s48
    %s66 = sphi 0, %s66
    %s68 = sphi 0, %s66
    %s69 = sphi 0, %s68
    %s83 = sphi 0, %s69
    %s87 = sphi 0, %s87
    %s89 = sphi 0, %s87
    %s90 = sphi 0, %s89
    %s104 = sphi 0, %s90
    %s108 = sphi 0, %s108
    %s110 = sphi 0, %s108
    %s111 = sphi 0, %s110
    %s125 = sphi 0, %s111
    %s131 = sphi 0, %s133
    %s134 = sphi 0, %s131
    %s135 = sphi 0, %s134
    %s151 = sphi 0, %s135
  $region4: #{forward.2} parent=0 // loop_header_branch
    %14 = sbr.rel (%p12) target = $region8
  $region5: #{forward.2} parent=0 // loop_body
    %s16 = ssub.s32 %s11, 1
    %s17 = ssub.s32 %s11, 2
    %s18 = sadd.s32 %s11, 1
    %s19 = ssub.s32 %s11, %s18
    %p20 = scmp.eq.s32.totalorder %s19, 0
    %s22 = sadd.s32 %s21, 1
    %s23 = scalar_select %p20, %s21, %s22
    %p26 = pneg %p20
    %p27 = scmp.eq.s32.totalorder %s11, 1
    %p28 = por %p26, %p27
    %p29 = scmp.ne.s32.totalorder %s21, %s24
    %p30 = scmp.eq.s32.totalorder %s11, 0
    %p31 = por %p29, %p30
    %p32 = scmp.ne.s32.totalorder %s21, %s24
    %p33 = scmp.eq.s32.totalorder %s16, 1
    %p34 = por %p32, %p33
    %p35 = scmp.ne.s32.totalorder %s24, %s25
    %p36 = scmp.eq.s32.totalorder %s16, 0
    %p37 = por %p35, %p36
    %p38 = scmp.ne.s32.totalorder %s24, %s25
    %p39 = scmp.eq.s32.totalorder %s17, 1
    %p40 = por %p38, %p39
    %p42 = scmp.ne.s32.totalorder %s25, %s41
    %p43 = scmp.eq.s32.totalorder %s17, 0
    %p44 = por %p42, %p43
    %s46 = sadd.s32 %s45, 1
    %p49 = scmp.eq.s32.totalorder %s11, 1
    %p50 = scmp.ne.s32.totalorder %s45, %s47
    %p51 = scmp.eq.s32.totalorder %s11, 0
    %p52 = por %p50, %p51
    %p53 = scmp.ne.s32.totalorder %s45, %s47
    %p54 = scmp.eq.s32.totalorder %s16, 1
    %p55 = por %p53, %p54
    %p56 = scmp.ne.s32.totalorder %s47, %s48
    %p57 = scmp.eq.s32.totalorder %s16, 0
    %p58 = por %p56, %p57
    %p59 = scmp.ne.s32.totalorder %s47, %s48
    %p60 = scmp.eq.s32.totalorder %s17, 1
    %p61 = por %p59, %p60
    %p63 = scmp.ne.s32.totalorder %s48, %s62
    %p64 = scmp.eq.s32.totalorder %s17, 0
    %p65 = por %p63, %p64
    %s67 = sadd.s32 %s66, 1
    %p70 = scmp.eq.s32.totalorder %s11, 1
    %p71 = scmp.ne.s32.totalorder %s66, %s68
    %p72 = scmp.eq.s32.totalorder %s11, 0
    %p73 = por %p71, %p72
    %p74 = scmp.ne.s32.totalorder %s66, %s68
    %p75 = scmp.eq.s32.totalorder %s16, 1
    %p76 = por %p74, %p75
    %p77 = scmp.ne.s32.totalorder %s68, %s69
    %p78 = scmp.eq.s32.totalorder %s16, 0
    %p79 = por %p77, %p78
    %p80 = scmp.ne.s32.totalorder %s68, %s69
    %p81 = scmp.eq.s32.totalorder %s17, 1
    %p82 = por %p80, %p81
    %p84 = scmp.ne.s32.totalorder %s69, %s83
    %p85 = scmp.eq.s32.totalorder %s17, 0
    %p86 = por %p84, %p85
    %s88 = sadd.s32 %s87, 1
    %p91 = scmp.eq.s32.totalorder %s11, 1
    %p92 = scmp.ne.s32.totalorder %s87, %s89
    %p93 = scmp.eq.s32.totalorder %s11, 0
    %p94 = por %p92, %p93
    %p95 = scmp.ne.s32.totalorder %s87, %s89
    %p96 = scmp.eq.s32.totalorder %s16, 1
    %p97 = por %p95, %p96
    %p98 = scmp.ne.s32.totalorder %s89, %s90
    %p99 = scmp.eq.s32.totalorder %s16, 0
    %p100 = por %p98, %p99
    %p101 = scmp.ne.s32.totalorder %s89, %s90
    %p102 = scmp.eq.s32.totalorder %s17, 1
    %p103 = por %p101, %p102
    %p105 = scmp.ne.s32.totalorder %s90, %s104
    %p106 = scmp.eq.s32.totalorder %s17, 0
    %p107 = por %p105, %p106
    %s109 = sadd.s32 %s108, 1
    %p112 = scmp.eq.s32.totalorder %s11, 1
    %p113 = scmp.ne.s32.totalorder %s108, %s110
    %p114 = scmp.eq.s32.totalorder %s11, 0
    %p115 = por %p113, %p114
    %p116 = scmp.ne.s32.totalorder %s108, %s110
    %p117 = scmp.eq.s32.totalorder %s16, 1
    %p118 = por %p116, %p117
    %p119 = scmp.ne.s32.totalorder %s110, %s111
    %p120 = scmp.eq.s32.totalorder %s16, 0
    %p121 = por %p119, %p120
    %p122 = scmp.ne.s32.totalorder %s110, %s111
    %p123 = scmp.eq.s32.totalorder %s17, 1
    %p124 = por %p122, %p123
    %p126 = scmp.ne.s32.totalorder %s111, %s125
    %p127 = scmp.eq.s32.totalorder %s17, 0
    %p128 = por %p126, %p127
    %s129 = ssub.s32 %s11, %s18
    %p130 = scmp.eq.s32.totalorder %s129, 0
    %s132 = sadd.s32 %s131, 1
    %s133 = scalar_select %p130, %s131, %s132
    %p136 = pneg %p130
    %p137 = scmp.eq.s32.totalorder %s11, 1
    %p138 = por %p136, %p137
    %p139 = scmp.ne.s32.totalorder %s131, %s134
    %p140 = scmp.eq.s32.totalorder %s11, 0
    %p141 = por %p139, %p140
    %p142 = scmp.ne.s32.totalorder %s131, %s134
    %p143 = scmp.eq.s32.totalorder %s16, 1
    %p144 = por %p142, %p143
    %p145 = scmp.ne.s32.totalorder %s134, %s135
    %p146 = scmp.eq.s32.totalorder %s16, 0
    %p147 = por %p145, %p146
    %p148 = scmp.ne.s32.totalorder %s134, %s135
    %p149 = scmp.eq.s32.totalorder %s17, 1
    %p150 = por %p148, %p149
    %p152 = scmp.ne.s32.totalorder %s135, %s151
    %p153 = scmp.eq.s32.totalorder %s17, 0
    %p154 = por %p152, %p153
    %p155 = scmp.le.s32.totalorder 1, %s11
    %p156 = scmp.lt.s32.totalorder %s11, 3
    %p157 = pnand %p155, %p156
    %p158 = pneg %p157
    // Predicated region
    $region9: #{forward.2} parent=5 // pred_check
      _
    $region10: #{forward.2} parent=5 // pred_check_branch
      %160 = sbr.rel (%p157) target = $region12
    $region11: #{forward.2} parent=5 // pred_region
      %s161 = ssub.s32 %s11, 1
      // Predicated region
      $region13: #{forward.2} parent=11 // pred_check
        %p162 = pneg %p58
      $region14: #{forward.2} parent=11 // pred_check_branch
        %164 = sbr.rel (%p162) target = $region16
      $region15: #{forward.2} parent=11 // pred_region
        _
      $region16: #{forward.2} parent=11 // pred_fallthru
        _
      // Predicated region
      $region17: #{forward.2} parent=11 // pred_check
        %p165 = pneg %p79
      $region18: #{forward.2} parent=11 // pred_check_branch
        %167 = sbr.rel (%p165) target = $region20
      $region19: #{forward.2} parent=11 // pred_region
        _
      $region20: #{forward.2} parent=11 // pred_fallthru
        _
      // Predicated region
      $region21: #{forward.2} parent=11 // pred_check
        %p168 = pneg %p100
      $region22: #{forward.2} parent=11 // pred_check_branch
        %170 = sbr.rel (%p168) target = $region24
      $region23: #{forward.2} parent=11 // pred_region
        _
      $region24: #{forward.2} parent=11 // pred_fallthru
        _
      // Predicated region
      $region25: #{forward.2} parent=11 // pred_check
        %p171 = pneg %p121
      $region26: #{forward.2} parent=11 // pred_check_branch
        %173 = sbr.rel (%p171) target = $region28
      $region27: #{forward.2} parent=11 // pred_region
        _
      $region28: #{forward.2} parent=11 // pred_fallthru
        _
    $region12: #{forward.2} parent=5 // pred_fallthru
      _
    %p174 = scmp.lt.s32.totalorder %s11, 2
    // Predicated region
    $region29: #{forward.2} parent=5 // pred_check
      %p175 = pneg %p174
    $region30: #{forward.2} parent=5 // pred_check_branch
      %177 = sbr.rel (%p175) target = $region32
    $region31: #{forward.2} parent=5 // pred_region
      // Predicated region
      $region33: #{forward.2} parent=31 // pred_check
        %p178 = pneg %p31
      $region34: #{forward.2} parent=31 // pred_check_branch
        %180 = sbr.rel (%p178) target = $region36
      $region35: #{forward.2} parent=31 // pred_region
        %p181 = scmp.lt.s32.totalorder %s11, 1
        %s182 = scalar_select %p181, %s11, 1
        %s183 = smul.addr %s182, 1032
        %s184 = smul.addr %s183, 8
        %s185 = scalar_lea.vmem %s0, %s184
      $region36: #{forward.2} parent=31 // pred_fallthru
        _
    $region32: #{forward.2} parent=5 // pred_fallthru
      _
    %p186 = scmp.le.s32.totalorder 1, %s11
    %p187 = scmp.lt.s32.totalorder %s11, 3
    %p188 = pnand %p186, %p187
    %p189 = pneg %p188
    // Predicated region
    $region37: #{forward.2} parent=5 // pred_check
      _
    $region38: #{forward.2} parent=5 // pred_check_branch
      %191 = sbr.rel (%p188) target = $region40
    $region39: #{forward.2} parent=5 // pred_region
      %s192 = ssub.s32 %s11, 1
      %p193 = scmp.lt.s32.totalorder %s16, 1
      %s194 = scalar_select %p193, %s16, 1
      %s195 = smul.addr %s194, 1032
      %s196 = smul.addr %s195, 8
      %s197 = scalar_lea.vmem %s0, %s196
      %p198 = pneg %p37
      %p199 = pneg %p34
      %p200 = pneg %p58
      %p201 = pneg %p55
      %p202 = pneg %p79
      %p203 = pneg %p76
      %p204 = pneg %p100
      %p205 = pneg %p97
      %p206 = pneg %p121
      %p207 = pneg %p118
      %p208 = pneg %p147
      %p209 = pneg %p144
      %p210 = scmp.lt.s32.totalorder %s16, 1
      %s211 = scalar_select %p210, %s16, 1
      %s212 = smul.addr %s211, 16
      %s213 = smul.addr %s212, 8
      %s214 = scalar_lea.vmem %s5, %s213
      %p215 = scmp.lt.s32.totalorder %s16, 1
      %s216 = scalar_select %p215, %s16, 1
      %s217 = smul.addr %s216, 1032
      %s218 = smul.addr %s217, 8
      %s219 = scalar_lea.vmem %s0, %s218
      %p220 = scmp.lt.s32.totalorder %s16, 1
      %s221 = scalar_select %p220, %s16, 1
      %s222 = smul.addr %s221, 16
      %s223 = smul.addr %s222, 8
      %s224 = scalar_lea.vmem %s5, %s223
      %v225 = vld [vmem:[%s219] sm:$0xff]
      %v226 = vld [vmem:[%s219 + $0x8] sm:$0xff]
      %v227 = vld [vmem:[%s219 + $0x10] sm:$0xff]
      %v228 = vld [vmem:[%s219 + $0x18] sm:$0xff]
      %v229 = vld [vmem:[%s219 + $0x20] sm:$0xff]
      %v230 = vld [vmem:[%s219 + $0x28] sm:$0xff]
      %v231 = vld [vmem:[%s219 + $0x30] sm:$0xff]
      %v232 = vld [vmem:[%s219 + $0x38] sm:$0xff]
      %v233 = vld [vmem:[%s219 + $0x40] sm:$0xff]
      %v234 = vld [vmem:[%s219 + $0x48] sm:$0xff]
      %v235 = vld [vmem:[%s219 + $0x50] sm:$0xff]
      %v236 = vld [vmem:[%s219 + $0x58] sm:$0xff]
      %v237 = vld [vmem:[%s219 + $0x60] sm:$0xff]
      %v238 = vld [vmem:[%s219 + $0x68] sm:$0xff]
      %v239 = vld [vmem:[%s219 + $0x70] sm:$0xff]
      %v240 = vld [vmem:[%s219 + $0x78] sm:$0xff]
      %v241 = vld [vmem:[%s219 + $0x80] sm:$0xff]
      %v242 = vld [vmem:[%s219 + $0x88] sm:$0xff]
      %v243 = vld [vmem:[%s219 + $0x90] sm:$0xff]
      %v244 = vld [vmem:[%s219 + $0x98] sm:$0xff]
      %v245 = vld [vmem:[%s219 + $0xa0] sm:$0xff]
      %v246 = vld [vmem:[%s219 + $0xa8] sm:$0xff]
      %v247 = vld [vmem:[%s219 + $0xb0] sm:$0xff]
      %v248 = vld [vmem:[%s219 + $0xb8] sm:$0xff]
      %v249 = vld [vmem:[%s219 + $0xc0] sm:$0xff]
      %v250 = vld [vmem:[%s219 + $0xc8] sm:$0xff]
      %v251 = vld [vmem:[%s219 + $0xd0] sm:$0xff]
      %v252 = vld [vmem:[%s219 + $0xd8] sm:$0xff]
      %v253 = vld [vmem:[%s219 + $0xe0] sm:$0xff]
      %v254 = vld [vmem:[%s219 + $0xe8] sm:$0xff]
      %v255 = vld [vmem:[%s219 + $0xf0] sm:$0xff]
      %v256 = vld [vmem:[%s219 + $0xf8] sm:$0xff]
      %v257 = vld [vmem:[%s219 + $0x100] sm:$0xff]
      %v258 = vld [vmem:[%s219 + $0x108] sm:$0xff]
      %v259 = vld [vmem:[%s219 + $0x110] sm:$0xff]
      %v260 = vld [vmem:[%s219 + $0x118] sm:$0xff]
      %v261 = vld [vmem:[%s219 + $0x120] sm:$0xff]
      %v262 = vld [vmem:[%s219 + $0x128] sm:$0xff]
      %v263 = vld [vmem:[%s219 + $0x130] sm:$0xff]
      %v264 = vld [vmem:[%s219 + $0x138] sm:$0xff]
      %v265 = vld [vmem:[%s219 + $0x140] sm:$0xff]
      %v266 = vld [vmem:[%s219 + $0x148] sm:$0xff]
      %v267 = vld [vmem:[%s219 + $0x150] sm:$0xff]
      %v268 = vld [vmem:[%s219 + $0x158] sm:$0xff]
      %v269 = vld [vmem:[%s219 + $0x160] sm:$0xff]
      %v270 = vld [vmem:[%s219 + $0x168] sm:$0xff]
      %v271 = vld [vmem:[%s219 + $0x170] sm:$0xff]
      %v272 = vld [vmem:[%s219 + $0x178] sm:$0xff]
      %v273 = vld [vmem:[%s219 + $0x180] sm:$0xff]
      %v274 = vld [vmem:[%s219 + $0x188] sm:$0xff]
      %v275 = vld [vmem:[%s219 + $0x190] sm:$0xff]
      %v276 = vld [vmem:[%s219 + $0x198] sm:$0xff]
      %v277 = vld [vmem:[%s219 + $0x1a0] sm:$0xff]
      %v278 = vld [vmem:[%s219 + $0x1a8] sm:$0xff]
      %v279 = vld [vmem:[%s219 + $0x1b0] sm:$0xff]
      %v280 = vld [vmem:[%s219 + $0x1b8] sm:$0xff]
      %v281 = vld [vmem:[%s219 + $0x1c0] sm:$0xff]
      %v282 = vld [vmem:[%s219 + $0x1c8] sm:$0xff]
      %v283 = vld [vmem:[%s219 + $0x1d0] sm:$0xff]
      %v284 = vld [vmem:[%s219 + $0x1d8] sm:$0xff]
      %v285 = vld [vmem:[%s219 + $0x1e0] sm:$0xff]
      %v286 = vld [vmem:[%s219 + $0x1e8] sm:$0xff]
      %v287 = vld [vmem:[%s219 + $0x1f0] sm:$0xff]
      %v288 = vld [vmem:[%s219 + $0x1f8] sm:$0xff]
      %v289 = vld [vmem:[%s219 + $0x200] sm:$0xff]
      %v290 = vld [vmem:[%s219 + $0x208] sm:$0xff]
      %v291 = vld [vmem:[%s219 + $0x210] sm:$0xff]
      %v292 = vld [vmem:[%s219 + $0x218] sm:$0xff]
      %v293 = vld [vmem:[%s219 + $0x220] sm:$0xff]
      %v294 = vld [vmem:[%s219 + $0x228] sm:$0xff]
      %v295 = vld [vmem:[%s219 + $0x230] sm:$0xff]
      %v296 = vld [vmem:[%s219 + $0x238] sm:$0xff]
      %v297 = vld [vmem:[%s219 + $0x240] sm:$0xff]
      %v298 = vld [vmem:[%s219 + $0x248] sm:$0xff]
      %v299 = vld [vmem:[%s219 + $0x250] sm:$0xff]
      %v300 = vld [vmem:[%s219 + $0x258] sm:$0xff]
      %v301 = vld [vmem:[%s219 + $0x260] sm:$0xff]
      %v302 = vld [vmem:[%s219 + $0x268] sm:$0xff]
      %v303 = vld [vmem:[%s219 + $0x270] sm:$0xff]
      %v304 = vld [vmem:[%s219 + $0x278] sm:$0xff]
      %v305 = vld [vmem:[%s219 + $0x280] sm:$0xff]
      %v306 = vld [vmem:[%s219 + $0x288] sm:$0xff]
      %v307 = vld [vmem:[%s219 + $0x290] sm:$0xff]
      %v308 = vld [vmem:[%s219 + $0x298] sm:$0xff]
      %v309 = vld [vmem:[%s219 + $0x2a0] sm:$0xff]
      %v310 = vld [vmem:[%s219 + $0x2a8] sm:$0xff]
      %v311 = vld [vmem:[%s219 + $0x2b0] sm:$0xff]
      %v312 = vld [vmem:[%s219 + $0x2b8] sm:$0xff]
      %v313 = vld [vmem:[%s219 + $0x2c0] sm:$0xff]
      %v314 = vld [vmem:[%s219 + $0x2c8] sm:$0xff]
      %v315 = vld [vmem:[%s219 + $0x2d0] sm:$0xff]
      %v316 = vld [vmem:[%s219 + $0x2d8] sm:$0xff]
      %v317 = vld [vmem:[%s219 + $0x2e0] sm:$0xff]
      %v318 = vld [vmem:[%s219 + $0x2e8] sm:$0xff]
      %v319 = vld [vmem:[%s219 + $0x2f0] sm:$0xff]
      %v320 = vld [vmem:[%s219 + $0x2f8] sm:$0xff]
      %v321 = vld [vmem:[%s219 + $0x300] sm:$0xff]
      %v322 = vld [vmem:[%s219 + $0x308] sm:$0xff]
      %v323 = vld [vmem:[%s219 + $0x310] sm:$0xff]
      %v324 = vld [vmem:[%s219 + $0x318] sm:$0xff]
      %v325 = vld [vmem:[%s219 + $0x320] sm:$0xff]
      %v326 = vld [vmem:[%s219 + $0x328] sm:$0xff]
      %v327 = vld [vmem:[%s219 + $0x330] sm:$0xff]
      %v328 = vld [vmem:[%s219 + $0x338] sm:$0xff]
      %v329 = vld [vmem:[%s219 + $0x340] sm:$0xff]
      %v330 = vld [vmem:[%s219 + $0x348] sm:$0xff]
      %v331 = vld [vmem:[%s219 + $0x350] sm:$0xff]
      %v332 = vld [vmem:[%s219 + $0x358] sm:$0xff]
      %v333 = vld [vmem:[%s219 + $0x360] sm:$0xff]
      %v334 = vld [vmem:[%s219 + $0x368] sm:$0xff]
      %v335 = vld [vmem:[%s219 + $0x370] sm:$0xff]
      %v336 = vld [vmem:[%s219 + $0x378] sm:$0xff]
      %v337 = vld [vmem:[%s219 + $0x380] sm:$0xff]
      %v338 = vld [vmem:[%s219 + $0x388] sm:$0xff]
      %v339 = vld [vmem:[%s219 + $0x390] sm:$0xff]
      %v340 = vld [vmem:[%s219 + $0x398] sm:$0xff]
      %v341 = vld [vmem:[%s219 + $0x3a0] sm:$0xff]
      %v342 = vld [vmem:[%s219 + $0x3a8] sm:$0xff]
      %v343 = vld [vmem:[%s219 + $0x3b0] sm:$0xff]
      %v344 = vld [vmem:[%s219 + $0x3b8] sm:$0xff]
      %v345 = vld [vmem:[%s219 + $0x3c0] sm:$0xff]
      %v346 = vld [vmem:[%s219 + $0x3c8] sm:$0xff]
      %v347 = vld [vmem:[%s219 + $0x3d0] sm:$0xff]
      %v348 = vld [vmem:[%s219 + $0x3d8] sm:$0xff]
      %v349 = vld [vmem:[%s219 + $0x3e0] sm:$0xff]
      %v350 = vld [vmem:[%s219 + $0x3e8] sm:$0xff]
      %v351 = vld [vmem:[%s219 + $0x3f0] sm:$0xff]
      %v352 = vld [vmem:[%s219 + $0x3f8] sm:$0xff]
      %v353 = vld [vmem:[%s219 + $0x400] sm:$0xff]
      %v354 = vld [vmem:[%s219 + $0x408] sm:$0xff]
      %v355 = vld [vmem:[%s219 + $0x410] sm:$0xff]
      %v356 = vld [vmem:[%s219 + $0x418] sm:$0xff]
      %v357 = vld [vmem:[%s219 + $0x420] sm:$0xff]
      %v358 = vld [vmem:[%s219 + $0x428] sm:$0xff]
      %v359 = vld [vmem:[%s219 + $0x430] sm:$0xff]
      %v360 = vld [vmem:[%s219 + $0x438] sm:$0xff]
      %v361 = vld [vmem:[%s219 + $0x440] sm:$0xff]
      %v362 = vld [vmem:[%s219 + $0x448] sm:$0xff]
      %v363 = vld [vmem:[%s219 + $0x450] sm:$0xff]
      %v364 = vld [vmem:[%s219 + $0x458] sm:$0xff]
      %v365 = vld [vmem:[%s219 + $0x460] sm:$0xff]
      %v366 = vld [vmem:[%s219 + $0x468] sm:$0xff]
      %v367 = vld [vmem:[%s219 + $0x470] sm:$0xff]
      %v368 = vld [vmem:[%s219 + $0x478] sm:$0xff]
      %v369 = vld [vmem:[%s219 + $0x480] sm:$0xff]
      %v370 = vld [vmem:[%s219 + $0x488] sm:$0xff]
      %v371 = vld [vmem:[%s219 + $0x490] sm:$0xff]
      %v372 = vld [vmem:[%s219 + $0x498] sm:$0xff]
      %v373 = vld [vmem:[%s219 + $0x4a0] sm:$0xff]
      %v374 = vld [vmem:[%s219 + $0x4a8] sm:$0xff]
      %v375 = vld [vmem:[%s219 + $0x4b0] sm:$0xff]
      %v376 = vld [vmem:[%s219 + $0x4b8] sm:$0xff]
      %v377 = vld [vmem:[%s219 + $0x4c0] sm:$0xff]
      %v378 = vld [vmem:[%s219 + $0x4c8] sm:$0xff]
      %v379 = vld [vmem:[%s219 + $0x4d0] sm:$0xff]
      %v380 = vld [vmem:[%s219 + $0x4d8] sm:$0xff]
      %v381 = vld [vmem:[%s219 + $0x4e0] sm:$0xff]
      %v382 = vld [vmem:[%s219 + $0x4e8] sm:$0xff]
      %v383 = vld [vmem:[%s219 + $0x4f0] sm:$0xff]
      %v384 = vld [vmem:[%s219 + $0x4f8] sm:$0xff]
      %v385 = vld [vmem:[%s219 + $0x500] sm:$0xff]
      %v386 = vld [vmem:[%s219 + $0x508] sm:$0xff]
      %v387 = vld [vmem:[%s219 + $0x510] sm:$0xff]
      %v388 = vld [vmem:[%s219 + $0x518] sm:$0xff]
      %v389 = vld [vmem:[%s219 + $0x520] sm:$0xff]
      %v390 = vld [vmem:[%s219 + $0x528] sm:$0xff]
      %v391 = vld [vmem:[%s219 + $0x530] sm:$0xff]
      %v392 = vld [vmem:[%s219 + $0x538] sm:$0xff]
      %v393 = vld [vmem:[%s219 + $0x540] sm:$0xff]
      %v394 = vld [vmem:[%s219 + $0x548] sm:$0xff]
      %v395 = vld [vmem:[%s219 + $0x550] sm:$0xff]
      %v396 = vld [vmem:[%s219 + $0x558] sm:$0xff]
      %v397 = vld [vmem:[%s219 + $0x560] sm:$0xff]
      %v398 = vld [vmem:[%s219 + $0x568] sm:$0xff]
      %v399 = vld [vmem:[%s219 + $0x570] sm:$0xff]
      %v400 = vld [vmem:[%s219 + $0x578] sm:$0xff]
      %v401 = vld [vmem:[%s219 + $0x580] sm:$0xff]
      %v402 = vld [vmem:[%s219 + $0x588] sm:$0xff]
      %v403 = vld [vmem:[%s219 + $0x590] sm:$0xff]
      %v404 = vld [vmem:[%s219 + $0x598] sm:$0xff]
      %v405 = vld [vmem:[%s219 + $0x5a0] sm:$0xff]
      %v406 = vld [vmem:[%s219 + $0x5a8] sm:$0xff]
      %v407 = vld [vmem:[%s219 + $0x5b0] sm:$0xff]
      %v408 = vld [vmem:[%s219 + $0x5b8] sm:$0xff]
      %v409 = vld [vmem:[%s219 + $0x5c0] sm:$0xff]
      %v410 = vld [vmem:[%s219 + $0x5c8] sm:$0xff]
      %v411 = vld [vmem:[%s219 + $0x5d0] sm:$0xff]
      %v412 = vld [vmem:[%s219 + $0x5d8] sm:$0xff]
      %v413 = vld [vmem:[%s219 + $0x5e0] sm:$0xff]
      %v414 = vld [vmem:[%s219 + $0x5e8] sm:$0xff]
      %v415 = vld [vmem:[%s219 + $0x5f0] sm:$0xff]
      %v416 = vld [vmem:[%s219 + $0x5f8] sm:$0xff]
      %v417 = vld [vmem:[%s219 + $0x600] sm:$0xff]
      %v418 = vld [vmem:[%s219 + $0x608] sm:$0xff]
      %v419 = vld [vmem:[%s219 + $0x610] sm:$0xff]
      %v420 = vld [vmem:[%s219 + $0x618] sm:$0xff]
      %v421 = vld [vmem:[%s219 + $0x620] sm:$0xff]
      %v422 = vld [vmem:[%s219 + $0x628] sm:$0xff]
      %v423 = vld [vmem:[%s219 + $0x630] sm:$0xff]
      %v424 = vld [vmem:[%s219 + $0x638] sm:$0xff]
      %v425 = vld [vmem:[%s219 + $0x640] sm:$0xff]
      %v426 = vld [vmem:[%s219 + $0x648] sm:$0xff]
      %v427 = vld [vmem:[%s219 + $0x650] sm:$0xff]
      %v428 = vld [vmem:[%s219 + $0x658] sm:$0xff]
      %v429 = vld [vmem:[%s219 + $0x660] sm:$0xff]
      %v430 = vld [vmem:[%s219 + $0x668] sm:$0xff]
      %v431 = vld [vmem:[%s219 + $0x670] sm:$0xff]
      %v432 = vld [vmem:[%s219 + $0x678] sm:$0xff]
      %v433 = vld [vmem:[%s219 + $0x680] sm:$0xff]
      %v434 = vld [vmem:[%s219 + $0x688] sm:$0xff]
      %v435 = vld [vmem:[%s219 + $0x690] sm:$0xff]
      %v436 = vld [vmem:[%s219 + $0x698] sm:$0xff]
      %v437 = vld [vmem:[%s219 + $0x6a0] sm:$0xff]
      %v438 = vld [vmem:[%s219 + $0x6a8] sm:$0xff]
      %v439 = vld [vmem:[%s219 + $0x6b0] sm:$0xff]
      %v440 = vld [vmem:[%s219 + $0x6b8] sm:$0xff]
      %v441 = vld [vmem:[%s219 + $0x6c0] sm:$0xff]
      %v442 = vld [vmem:[%s219 + $0x6c8] sm:$0xff]
      %v443 = vld [vmem:[%s219 + $0x6d0] sm:$0xff]
      %v444 = vld [vmem:[%s219 + $0x6d8] sm:$0xff]
      %v445 = vld [vmem:[%s219 + $0x6e0] sm:$0xff]
      %v446 = vld [vmem:[%s219 + $0x6e8] sm:$0xff]
      %v447 = vld [vmem:[%s219 + $0x6f0] sm:$0xff]
      %v448 = vld [vmem:[%s219 + $0x6f8] sm:$0xff]
      %v449 = vld [vmem:[%s219 + $0x700] sm:$0xff]
      %v450 = vld [vmem:[%s219 + $0x708] sm:$0xff]
      %v451 = vld [vmem:[%s219 + $0x710] sm:$0xff]
      %v452 = vld [vmem:[%s219 + $0x718] sm:$0xff]
      %v453 = vld [vmem:[%s219 + $0x720] sm:$0xff]
      %v454 = vld [vmem:[%s219 + $0x728] sm:$0xff]
      %v455 = vld [vmem:[%s219 + $0x730] sm:$0xff]
      %v456 = vld [vmem:[%s219 + $0x738] sm:$0xff]
      %v457 = vld [vmem:[%s219 + $0x740] sm:$0xff]
      %v458 = vld [vmem:[%s219 + $0x748] sm:$0xff]
      %v459 = vld [vmem:[%s219 + $0x750] sm:$0xff]
      %v460 = vld [vmem:[%s219 + $0x758] sm:$0xff]
      %v461 = vld [vmem:[%s219 + $0x760] sm:$0xff]
      %v462 = vld [vmem:[%s219 + $0x768] sm:$0xff]
      %v463 = vld [vmem:[%s219 + $0x770] sm:$0xff]
      %v464 = vld [vmem:[%s219 + $0x778] sm:$0xff]
      %v465 = vld [vmem:[%s219 + $0x780] sm:$0xff]
      %v466 = vld [vmem:[%s219 + $0x788] sm:$0xff]
      %v467 = vld [vmem:[%s219 + $0x790] sm:$0xff]
      %v468 = vld [vmem:[%s219 + $0x798] sm:$0xff]
      %v469 = vld [vmem:[%s219 + $0x7a0] sm:$0xff]
      %v470 = vld [vmem:[%s219 + $0x7a8] sm:$0xff]
      %v471 = vld [vmem:[%s219 + $0x7b0] sm:$0xff]
      %v472 = vld [vmem:[%s219 + $0x7b8] sm:$0xff]
      %v473 = vld [vmem:[%s219 + $0x7c0] sm:$0xff]
      %v474 = vld [vmem:[%s219 + $0x7c8] sm:$0xff]
      %v475 = vld [vmem:[%s219 + $0x7d0] sm:$0xff]
      %v476 = vld [vmem:[%s219 + $0x7d8] sm:$0xff]
      %v477 = vld [vmem:[%s219 + $0x7e0] sm:$0xff]
      %v478 = vld [vmem:[%s219 + $0x7e8] sm:$0xff]
      %v479 = vld [vmem:[%s219 + $0x7f0] sm:$0xff]
      %v480 = vld [vmem:[%s219 + $0x7f8] sm:$0xff]
      %v481 = vld [vmem:[%s219 + $0x800] sm:$0xff]
      %v482 = vld [vmem:[%s219 + $0x808] sm:$0xff]
      %v483 = vld [vmem:[%s219 + $0x810] sm:$0xff]
      %v484 = vld [vmem:[%s219 + $0x818] sm:$0xff]
      %v485 = vld [vmem:[%s219 + $0x820] sm:$0xff]
      %v486 = vld [vmem:[%s219 + $0x828] sm:$0xff]
      %v487 = vld [vmem:[%s219 + $0x830] sm:$0xff]
      %v488 = vld [vmem:[%s219 + $0x838] sm:$0xff]
      %v489 = vld [vmem:[%s219 + $0x840] sm:$0xff]
      %v490 = vld [vmem:[%s219 + $0x848] sm:$0xff]
      %v491 = vld [vmem:[%s219 + $0x850] sm:$0xff]
      %v492 = vld [vmem:[%s219 + $0x858] sm:$0xff]
      %v493 = vld [vmem:[%s219 + $0x860] sm:$0xff]
      %v494 = vld [vmem:[%s219 + $0x868] sm:$0xff]
      %v495 = vld [vmem:[%s219 + $0x870] sm:$0xff]
      %v496 = vld [vmem:[%s219 + $0x878] sm:$0xff]
      %v497 = vld [vmem:[%s219 + $0x880] sm:$0xff]
      %v498 = vld [vmem:[%s219 + $0x888] sm:$0xff]
      %v499 = vld [vmem:[%s219 + $0x890] sm:$0xff]
      %v500 = vld [vmem:[%s219 + $0x898] sm:$0xff]
      %v501 = vld [vmem:[%s219 + $0x8a0] sm:$0xff]
      %v502 = vld [vmem:[%s219 + $0x8a8] sm:$0xff]
      %v503 = vld [vmem:[%s219 + $0x8b0] sm:$0xff]
      %v504 = vld [vmem:[%s219 + $0x8b8] sm:$0xff]
      %v505 = vld [vmem:[%s219 + $0x8c0] sm:$0xff]
      %v506 = vld [vmem:[%s219 + $0x8c8] sm:$0xff]
      %v507 = vld [vmem:[%s219 + $0x8d0] sm:$0xff]
      %v508 = vld [vmem:[%s219 + $0x8d8] sm:$0xff]
      %v509 = vld [vmem:[%s219 + $0x8e0] sm:$0xff]
      %v510 = vld [vmem:[%s219 + $0x8e8] sm:$0xff]
      %v511 = vld [vmem:[%s219 + $0x8f0] sm:$0xff]
      %v512 = vld [vmem:[%s219 + $0x8f8] sm:$0xff]
      %v513 = vld [vmem:[%s219 + $0x900] sm:$0xff]
      %v514 = vld [vmem:[%s219 + $0x908] sm:$0xff]
      %v515 = vld [vmem:[%s219 + $0x910] sm:$0xff]
      %v516 = vld [vmem:[%s219 + $0x918] sm:$0xff]
      %v517 = vld [vmem:[%s219 + $0x920] sm:$0xff]
      %v518 = vld [vmem:[%s219 + $0x928] sm:$0xff]
      %v519 = vld [vmem:[%s219 + $0x930] sm:$0xff]
      %v520 = vld [vmem:[%s219 + $0x938] sm:$0xff]
      %v521 = vld [vmem:[%s219 + $0x940] sm:$0xff]
      %v522 = vld [vmem:[%s219 + $0x948] sm:$0xff]
      %v523 = vld [vmem:[%s219 + $0x950] sm:$0xff]
      %v524 = vld [vmem:[%s219 + $0x958] sm:$0xff]
      %v525 = vld [vmem:[%s219 + $0x960] sm:$0xff]
      %v526 = vld [vmem:[%s219 + $0x968] sm:$0xff]
      %v527 = vld [vmem:[%s219 + $0x970] sm:$0xff]
      %v528 = vld [vmem:[%s219 + $0x978] sm:$0xff]
      %v529 = vld [vmem:[%s219 + $0x980] sm:$0xff]
      %v530 = vld [vmem:[%s219 + $0x988] sm:$0xff]
      %v531 = vld [vmem:[%s219 + $0x990] sm:$0xff]
      %v532 = vld [vmem:[%s219 + $0x998] sm:$0xff]
      %v533 = vld [vmem:[%s219 + $0x9a0] sm:$0xff]
      %v534 = vld [vmem:[%s219 + $0x9a8] sm:$0xff]
      %v535 = vld [vmem:[%s219 + $0x9b0] sm:$0xff]
      %v536 = vld [vmem:[%s219 + $0x9b8] sm:$0xff]
      %v537 = vld [vmem:[%s219 + $0x9c0] sm:$0xff]
      %v538 = vld [vmem:[%s219 + $0x9c8] sm:$0xff]
      %v539 = vld [vmem:[%s219 + $0x9d0] sm:$0xff]
      %v540 = vld [vmem:[%s219 + $0x9d8] sm:$0xff]
      %v541 = vld [vmem:[%s219 + $0x9e0] sm:$0xff]
      %v542 = vld [vmem:[%s219 + $0x9e8] sm:$0xff]
      %v543 = vld [vmem:[%s219 + $0x9f0] sm:$0xff]
      %v544 = vld [vmem:[%s219 + $0x9f8] sm:$0xff]
      %v545 = vld [vmem:[%s219 + $0xa00] sm:$0xff]
      %v546 = vld [vmem:[%s219 + $0xa08] sm:$0xff]
      %v547 = vld [vmem:[%s219 + $0xa10] sm:$0xff]
      %v548 = vld [vmem:[%s219 + $0xa18] sm:$0xff]
      %v549 = vld [vmem:[%s219 + $0xa20] sm:$0xff]
      %v550 = vld [vmem:[%s219 + $0xa28] sm:$0xff]
      %v551 = vld [vmem:[%s219 + $0xa30] sm:$0xff]
      %v552 = vld [vmem:[%s219 + $0xa38] sm:$0xff]
      %v553 = vld [vmem:[%s219 + $0xa40] sm:$0xff]
      %v554 = vld [vmem:[%s219 + $0xa48] sm:$0xff]
      %v555 = vld [vmem:[%s219 + $0xa50] sm:$0xff]
      %v556 = vld [vmem:[%s219 + $0xa58] sm:$0xff]
      %v557 = vld [vmem:[%s219 + $0xa60] sm:$0xff]
      %v558 = vld [vmem:[%s219 + $0xa68] sm:$0xff]
      %v559 = vld [vmem:[%s219 + $0xa70] sm:$0xff]
      %v560 = vld [vmem:[%s219 + $0xa78] sm:$0xff]
      %v561 = vld [vmem:[%s219 + $0xa80] sm:$0xff]
      %v562 = vld [vmem:[%s219 + $0xa88] sm:$0xff]
      %v563 = vld [vmem:[%s219 + $0xa90] sm:$0xff]
      %v564 = vld [vmem:[%s219 + $0xa98] sm:$0xff]
      %v565 = vld [vmem:[%s219 + $0xaa0] sm:$0xff]
      %v566 = vld [vmem:[%s219 + $0xaa8] sm:$0xff]
      %v567 = vld [vmem:[%s219 + $0xab0] sm:$0xff]
      %v568 = vld [vmem:[%s219 + $0xab8] sm:$0xff]
      %v569 = vld [vmem:[%s219 + $0xac0] sm:$0xff]
      %v570 = vld [vmem:[%s219 + $0xac8] sm:$0xff]
      %v571 = vld [vmem:[%s219 + $0xad0] sm:$0xff]
      %v572 = vld [vmem:[%s219 + $0xad8] sm:$0xff]
      %v573 = vld [vmem:[%s219 + $0xae0] sm:$0xff]
      %v574 = vld [vmem:[%s219 + $0xae8] sm:$0xff]
      %v575 = vld [vmem:[%s219 + $0xaf0] sm:$0xff]
      %v576 = vld [vmem:[%s219 + $0xaf8] sm:$0xff]
      %v577 = vld [vmem:[%s219 + $0xb00] sm:$0xff]
      %v578 = vld [vmem:[%s219 + $0xb08] sm:$0xff]
      %v579 = vld [vmem:[%s219 + $0xb10] sm:$0xff]
      %v580 = vld [vmem:[%s219 + $0xb18] sm:$0xff]
      %v581 = vld [vmem:[%s219 + $0xb20] sm:$0xff]
      %v582 = vld [vmem:[%s219 + $0xb28] sm:$0xff]
      %v583 = vld [vmem:[%s219 + $0xb30] sm:$0xff]
      %v584 = vld [vmem:[%s219 + $0xb38] sm:$0xff]
      %v585 = vld [vmem:[%s219 + $0xb40] sm:$0xff]
      %v586 = vld [vmem:[%s219 + $0xb48] sm:$0xff]
      %v587 = vld [vmem:[%s219 + $0xb50] sm:$0xff]
      %v588 = vld [vmem:[%s219 + $0xb58] sm:$0xff]
      %v589 = vld [vmem:[%s219 + $0xb60] sm:$0xff]
      %v590 = vld [vmem:[%s219 + $0xb68] sm:$0xff]
      %v591 = vld [vmem:[%s219 + $0xb70] sm:$0xff]
      %v592 = vld [vmem:[%s219 + $0xb78] sm:$0xff]
      %v593 = vld [vmem:[%s219 + $0xb80] sm:$0xff]
      %v594 = vld [vmem:[%s219 + $0xb88] sm:$0xff]
      %v595 = vld [vmem:[%s219 + $0xb90] sm:$0xff]
      %v596 = vld [vmem:[%s219 + $0xb98] sm:$0xff]
      %v597 = vld [vmem:[%s219 + $0xba0] sm:$0xff]
      %v598 = vld [vmem:[%s219 + $0xba8] sm:$0xff]
      %v599 = vld [vmem:[%s219 + $0xbb0] sm:$0xff]
      %v600 = vld [vmem:[%s219 + $0xbb8] sm:$0xff]
      %v601 = vld [vmem:[%s219 + $0xbc0] sm:$0xff]
      %v602 = vld [vmem:[%s219 + $0xbc8] sm:$0xff]
      %v603 = vld [vmem:[%s219 + $0xbd0] sm:$0xff]
      %v604 = vld [vmem:[%s219 + $0xbd8] sm:$0xff]
      %v605 = vld [vmem:[%s219 + $0xbe0] sm:$0xff]
      %v606 = vld [vmem:[%s219 + $0xbe8] sm:$0xff]
      %v607 = vld [vmem:[%s219 + $0xbf0] sm:$0xff]
      %v608 = vld [vmem:[%s219 + $0xbf8] sm:$0xff]
      %v609 = vld [vmem:[%s219 + $0xc00] sm:$0xff]
      %v610 = vld [vmem:[%s219 + $0xc08] sm:$0xff]
      %v611 = vld [vmem:[%s219 + $0xc10] sm:$0xff]
      %v612 = vld [vmem:[%s219 + $0xc18] sm:$0xff]
      %v613 = vld [vmem:[%s219 + $0xc20] sm:$0xff]
      %v614 = vld [vmem:[%s219 + $0xc28] sm:$0xff]
      %v615 = vld [vmem:[%s219 + $0xc30] sm:$0xff]
      %v616 = vld [vmem:[%s219 + $0xc38] sm:$0xff]
      %v617 = vld [vmem:[%s219 + $0xc40] sm:$0xff]
      %v618 = vld [vmem:[%s219 + $0xc48] sm:$0xff]
      %v619 = vld [vmem:[%s219 + $0xc50] sm:$0xff]
      %v620 = vld [vmem:[%s219 + $0xc58] sm:$0xff]
      %v621 = vld [vmem:[%s219 + $0xc60] sm:$0xff]
      %v622 = vld [vmem:[%s219 + $0xc68] sm:$0xff]
      %v623 = vld [vmem:[%s219 + $0xc70] sm:$0xff]
      %v624 = vld [vmem:[%s219 + $0xc78] sm:$0xff]
      %v625 = vld [vmem:[%s219 + $0xc80] sm:$0xff]
      %v626 = vld [vmem:[%s219 + $0xc88] sm:$0xff]
      %v627 = vld [vmem:[%s219 + $0xc90] sm:$0xff]
      %v628 = vld [vmem:[%s219 + $0xc98] sm:$0xff]
      %v629 = vld [vmem:[%s219 + $0xca0] sm:$0xff]
      %v630 = vld [vmem:[%s219 + $0xca8] sm:$0xff]
      %v631 = vld [vmem:[%s219 + $0xcb0] sm:$0xff]
      %v632 = vld [vmem:[%s219 + $0xcb8] sm:$0xff]
      %v633 = vld [vmem:[%s219 + $0xcc0] sm:$0xff]
      %v634 = vld [vmem:[%s219 + $0xcc8] sm:$0xff]
      %v635 = vld [vmem:[%s219 + $0xcd0] sm:$0xff]
      %v636 = vld [vmem:[%s219 + $0xcd8] sm:$0xff]
      %v637 = vld [vmem:[%s219 + $0xce0] sm:$0xff]
      %v638 = vld [vmem:[%s219 + $0xce8] sm:$0xff]
      %v639 = vld [vmem:[%s219 + $0xcf0] sm:$0xff]
      %v640 = vld [vmem:[%s219 + $0xcf8] sm:$0xff]
      %v641 = vld [vmem:[%s219 + $0xd00] sm:$0xff]
      %v642 = vld [vmem:[%s219 + $0xd08] sm:$0xff]
      %v643 = vld [vmem:[%s219 + $0xd10] sm:$0xff]
      %v644 = vld [vmem:[%s219 + $0xd18] sm:$0xff]
      %v645 = vld [vmem:[%s219 + $0xd20] sm:$0xff]
      %v646 = vld [vmem:[%s219 + $0xd28] sm:$0xff]
      %v647 = vld [vmem:[%s219 + $0xd30] sm:$0xff]
      %v648 = vld [vmem:[%s219 + $0xd38] sm:$0xff]
      %v649 = vld [vmem:[%s219 + $0xd40] sm:$0xff]
      %v650 = vld [vmem:[%s219 + $0xd48] sm:$0xff]
      %v651 = vld [vmem:[%s219 + $0xd50] sm:$0xff]
      %v652 = vld [vmem:[%s219 + $0xd58] sm:$0xff]
      %v653 = vld [vmem:[%s219 + $0xd60] sm:$0xff]
      %v654 = vld [vmem:[%s219 + $0xd68] sm:$0xff]
      %v655 = vld [vmem:[%s219 + $0xd70] sm:$0xff]
      %v656 = vld [vmem:[%s219 + $0xd78] sm:$0xff]
      %v657 = vld [vmem:[%s219 + $0xd80] sm:$0xff]
      %v658 = vld [vmem:[%s219 + $0xd88] sm:$0xff]
      %v659 = vld [vmem:[%s219 + $0xd90] sm:$0xff]
      %v660 = vld [vmem:[%s219 + $0xd98] sm:$0xff]
      %v661 = vld [vmem:[%s219 + $0xda0] sm:$0xff]
      %v662 = vld [vmem:[%s219 + $0xda8] sm:$0xff]
      %v663 = vld [vmem:[%s219 + $0xdb0] sm:$0xff]
      %v664 = vld [vmem:[%s219 + $0xdb8] sm:$0xff]
      %v665 = vld [vmem:[%s219 + $0xdc0] sm:$0xff]
      %v666 = vld [vmem:[%s219 + $0xdc8] sm:$0xff]
      %v667 = vld [vmem:[%s219 + $0xdd0] sm:$0xff]
      %v668 = vld [vmem:[%s219 + $0xdd8] sm:$0xff]
      %v669 = vld [vmem:[%s219 + $0xde0] sm:$0xff]
      %v670 = vld [vmem:[%s219 + $0xde8] sm:$0xff]
      %v671 = vld [vmem:[%s219 + $0xdf0] sm:$0xff]
      %v672 = vld [vmem:[%s219 + $0xdf8] sm:$0xff]
      %v673 = vld [vmem:[%s219 + $0xe00] sm:$0xff]
      %v674 = vld [vmem:[%s219 + $0xe08] sm:$0xff]
      %v675 = vld [vmem:[%s219 + $0xe10] sm:$0xff]
      %v676 = vld [vmem:[%s219 + $0xe18] sm:$0xff]
      %v677 = vld [vmem:[%s219 + $0xe20] sm:$0xff]
      %v678 = vld [vmem:[%s219 + $0xe28] sm:$0xff]
      %v679 = vld [vmem:[%s219 + $0xe30] sm:$0xff]
      %v680 = vld [vmem:[%s219 + $0xe38] sm:$0xff]
      %v681 = vld [vmem:[%s219 + $0xe40] sm:$0xff]
      %v682 = vld [vmem:[%s219 + $0xe48] sm:$0xff]
      %v683 = vld [vmem:[%s219 + $0xe50] sm:$0xff]
      %v684 = vld [vmem:[%s219 + $0xe58] sm:$0xff]
      %v685 = vld [vmem:[%s219 + $0xe60] sm:$0xff]
      %v686 = vld [vmem:[%s219 + $0xe68] sm:$0xff]
      %v687 = vld [vmem:[%s219 + $0xe70] sm:$0xff]
      %v688 = vld [vmem:[%s219 + $0xe78] sm:$0xff]
      %v689 = vld [vmem:[%s219 + $0xe80] sm:$0xff]
      %v690 = vld [vmem:[%s219 + $0xe88] sm:$0xff]
      %v691 = vld [vmem:[%s219 + $0xe90] sm:$0xff]
      %v692 = vld [vmem:[%s219 + $0xe98] sm:$0xff]
      %v693 = vld [vmem:[%s219 + $0xea0] sm:$0xff]
      %v694 = vld [vmem:[%s219 + $0xea8] sm:$0xff]
      %v695 = vld [vmem:[%s219 + $0xeb0] sm:$0xff]
      %v696 = vld [vmem:[%s219 + $0xeb8] sm:$0xff]
      %v697 = vld [vmem:[%s219 + $0xec0] sm:$0xff]
      %v698 = vld [vmem:[%s219 + $0xec8] sm:$0xff]
      %v699 = vld [vmem:[%s219 + $0xed0] sm:$0xff]
      %v700 = vld [vmem:[%s219 + $0xed8] sm:$0xff]
      %v701 = vld [vmem:[%s219 + $0xee0] sm:$0xff]
      %v702 = vld [vmem:[%s219 + $0xee8] sm:$0xff]
      %v703 = vld [vmem:[%s219 + $0xef0] sm:$0xff]
      %v704 = vld [vmem:[%s219 + $0xef8] sm:$0xff]
      %v705 = vld [vmem:[%s219 + $0xf00] sm:$0xff]
      %v706 = vld [vmem:[%s219 + $0xf08] sm:$0xff]
      %v707 = vld [vmem:[%s219 + $0xf10] sm:$0xff]
      %v708 = vld [vmem:[%s219 + $0xf18] sm:$0xff]
      %v709 = vld [vmem:[%s219 + $0xf20] sm:$0xff]
      %v710 = vld [vmem:[%s219 + $0xf28] sm:$0xff]
      %v711 = vld [vmem:[%s219 + $0xf30] sm:$0xff]
      %v712 = vld [vmem:[%s219 + $0xf38] sm:$0xff]
      %v713 = vld [vmem:[%s219 + $0xf40] sm:$0xff]
      %v714 = vld [vmem:[%s219 + $0xf48] sm:$0xff]
      %v715 = vld [vmem:[%s219 + $0xf50] sm:$0xff]
      %v716 = vld [vmem:[%s219 + $0xf58] sm:$0xff]
      %v717 = vld [vmem:[%s219 + $0xf60] sm:$0xff]
      %v718 = vld [vmem:[%s219 + $0xf68] sm:$0xff]
      %v719 = vld [vmem:[%s219 + $0xf70] sm:$0xff]
      %v720 = vld [vmem:[%s219 + $0xf78] sm:$0xff]
      %v721 = vld [vmem:[%s219 + $0xf80] sm:$0xff]
      %v722 = vld [vmem:[%s219 + $0xf88] sm:$0xff]
      %v723 = vld [vmem:[%s219 + $0xf90] sm:$0xff]
      %v724 = vld [vmem:[%s219 + $0xf98] sm:$0xff]
      %v725 = vld [vmem:[%s219 + $0xfa0] sm:$0xff]
      %v726 = vld [vmem:[%s219 + $0xfa8] sm:$0xff]
      %v727 = vld [vmem:[%s219 + $0xfb0] sm:$0xff]
      %v728 = vld [vmem:[%s219 + $0xfb8] sm:$0xff]
      %v729 = vld [vmem:[%s219 + $0xfc0] sm:$0xff]
      %v730 = vld [vmem:[%s219 + $0xfc8] sm:$0xff]
      %v731 = vld [vmem:[%s219 + $0xfd0] sm:$0xff]
      %v732 = vld [vmem:[%s219 + $0xfd8] sm:$0xff]
      %v733 = vld [vmem:[%s219 + $0xfe0] sm:$0xff]
      %v734 = vld [vmem:[%s219 + $0xfe8] sm:$0xff]
      %v735 = vld [vmem:[%s219 + $0xff0] sm:$0xff]
      %v736 = vld [vmem:[%s219 + $0xff8] sm:$0xff]
      %v737 = vld [vmem:[%s219 + $0x1000] sm:$0xff]
      %v738 = vld [vmem:[%s219 + $0x1008] sm:$0xff]
      %v739 = vld [vmem:[%s219 + $0x1010] sm:$0xff]
      %v740 = vld [vmem:[%s219 + $0x1018] sm:$0xff]
      %v741 = vld [vmem:[%s219 + $0x1020] sm:$0xff]
      %v742 = vld [vmem:[%s219 + $0x1028] sm:$0xff]
      %v743 = vld [vmem:[%s219 + $0x1030] sm:$0xff]
      %v744 = vld [vmem:[%s219 + $0x1038] sm:$0xff]
      %v745 = vld [vmem:[%s219 + $0x1040] sm:$0xff]
      %v746 = vld [vmem:[%s219 + $0x1048] sm:$0xff]
      %v747 = vld [vmem:[%s219 + $0x1050] sm:$0xff]
      %v748 = vld [vmem:[%s219 + $0x1058] sm:$0xff]
      %v749 = vld [vmem:[%s219 + $0x1060] sm:$0xff]
      %v750 = vld [vmem:[%s219 + $0x1068] sm:$0xff]
      %v751 = vld [vmem:[%s219 + $0x1070] sm:$0xff]
      %v752 = vld [vmem:[%s219 + $0x1078] sm:$0xff]
      %v753 = vld [vmem:[%s219 + $0x1080] sm:$0xff]
      %v754 = vld [vmem:[%s219 + $0x1088] sm:$0xff]
      %v755 = vld [vmem:[%s219 + $0x1090] sm:$0xff]
      %v756 = vld [vmem:[%s219 + $0x1098] sm:$0xff]
      %v757 = vld [vmem:[%s219 + $0x10a0] sm:$0xff]
      %v758 = vld [vmem:[%s219 + $0x10a8] sm:$0xff]
      %v759 = vld [vmem:[%s219 + $0x10b0] sm:$0xff]
      %v760 = vld [vmem:[%s219 + $0x10b8] sm:$0xff]
      %v761 = vld [vmem:[%s219 + $0x10c0] sm:$0xff]
      %v762 = vld [vmem:[%s219 + $0x10c8] sm:$0xff]
      %v763 = vld [vmem:[%s219 + $0x10d0] sm:$0xff]
      %v764 = vld [vmem:[%s219 + $0x10d8] sm:$0xff]
      %v765 = vld [vmem:[%s219 + $0x10e0] sm:$0xff]
      %v766 = vld [vmem:[%s219 + $0x10e8] sm:$0xff]
      %v767 = vld [vmem:[%s219 + $0x10f0] sm:$0xff]
      %v768 = vld [vmem:[%s219 + $0x10f8] sm:$0xff]
      %v769 = vld [vmem:[%s219 + $0x1100] sm:$0xff]
      %v770 = vld [vmem:[%s219 + $0x1108] sm:$0xff]
      %v771 = vld [vmem:[%s219 + $0x1110] sm:$0xff]
      %v772 = vld [vmem:[%s219 + $0x1118] sm:$0xff]
      %v773 = vld [vmem:[%s219 + $0x1120] sm:$0xff]
      %v774 = vld [vmem:[%s219 + $0x1128] sm:$0xff]
      %v775 = vld [vmem:[%s219 + $0x1130] sm:$0xff]
      %v776 = vld [vmem:[%s219 + $0x1138] sm:$0xff]
      %v777 = vld [vmem:[%s219 + $0x1140] sm:$0xff]
      %v778 = vld [vmem:[%s219 + $0x1148] sm:$0xff]
      %v779 = vld [vmem:[%s219 + $0x1150] sm:$0xff]
      %v780 = vld [vmem:[%s219 + $0x1158] sm:$0xff]
      %v781 = vld [vmem:[%s219 + $0x1160] sm:$0xff]
      %v782 = vld [vmem:[%s219 + $0x1168] sm:$0xff]
      %v783 = vld [vmem:[%s219 + $0x1170] sm:$0xff]
      %v784 = vld [vmem:[%s219 + $0x1178] sm:$0xff]
      %v785 = vld [vmem:[%s219 + $0x1180] sm:$0xff]
      %v786 = vld [vmem:[%s219 + $0x1188] sm:$0xff]
      %v787 = vld [vmem:[%s219 + $0x1190] sm:$0xff]
      %v788 = vld [vmem:[%s219 + $0x1198] sm:$0xff]
      %v789 = vld [vmem:[%s219 + $0x11a0] sm:$0xff]
      %v790 = vld [vmem:[%s219 + $0x11a8] sm:$0xff]
      %v791 = vld [vmem:[%s219 + $0x11b0] sm:$0xff]
      %v792 = vld [vmem:[%s219 + $0x11b8] sm:$0xff]
      %v793 = vld [vmem:[%s219 + $0x11c0] sm:$0xff]
      %v794 = vld [vmem:[%s219 + $0x11c8] sm:$0xff]
      %v795 = vld [vmem:[%s219 + $0x11d0] sm:$0xff]
      %v796 = vld [vmem:[%s219 + $0x11d8] sm:$0xff]
      %v797 = vld [vmem:[%s219 + $0x11e0] sm:$0xff]
      %v798 = vld [vmem:[%s219 + $0x11e8] sm:$0xff]
      %v799 = vld [vmem:[%s219 + $0x11f0] sm:$0xff]
      %v800 = vld [vmem:[%s219 + $0x11f8] sm:$0xff]
      %v801 = vld [vmem:[%s219 + $0x1200] sm:$0xff]
      %v802 = vld [vmem:[%s219 + $0x1208] sm:$0xff]
      %v803 = vld [vmem:[%s219 + $0x1210] sm:$0xff]
      %v804 = vld [vmem:[%s219 + $0x1218] sm:$0xff]
      %v805 = vld [vmem:[%s219 + $0x1220] sm:$0xff]
      %v806 = vld [vmem:[%s219 + $0x1228] sm:$0xff]
      %v807 = vld [vmem:[%s219 + $0x1230] sm:$0xff]
      %v808 = vld [vmem:[%s219 + $0x1238] sm:$0xff]
      %v809 = vld [vmem:[%s219 + $0x1240] sm:$0xff]
      %v810 = vld [vmem:[%s219 + $0x1248] sm:$0xff]
      %v811 = vld [vmem:[%s219 + $0x1250] sm:$0xff]
      %v812 = vld [vmem:[%s219 + $0x1258] sm:$0xff]
      %v813 = vld [vmem:[%s219 + $0x1260] sm:$0xff]
      %v814 = vld [vmem:[%s219 + $0x1268] sm:$0xff]
      %v815 = vld [vmem:[%s219 + $0x1270] sm:$0xff]
      %v816 = vld [vmem:[%s219 + $0x1278] sm:$0xff]
      %v817 = vld [vmem:[%s219 + $0x1280] sm:$0xff]
      %v818 = vld [vmem:[%s219 + $0x1288] sm:$0xff]
      %v819 = vld [vmem:[%s219 + $0x1290] sm:$0xff]
      %v820 = vld [vmem:[%s219 + $0x1298] sm:$0xff]
      %v821 = vld [vmem:[%s219 + $0x12a0] sm:$0xff]
      %v822 = vld [vmem:[%s219 + $0x12a8] sm:$0xff]
      %v823 = vld [vmem:[%s219 + $0x12b0] sm:$0xff]
      %v824 = vld [vmem:[%s219 + $0x12b8] sm:$0xff]
      %v825 = vld [vmem:[%s219 + $0x12c0] sm:$0xff]
      %v826 = vld [vmem:[%s219 + $0x12c8] sm:$0xff]
      %v827 = vld [vmem:[%s219 + $0x12d0] sm:$0xff]
      %v828 = vld [vmem:[%s219 + $0x12d8] sm:$0xff]
      %v829 = vld [vmem:[%s219 + $0x12e0] sm:$0xff]
      %v830 = vld [vmem:[%s219 + $0x12e8] sm:$0xff]
      %v831 = vld [vmem:[%s219 + $0x12f0] sm:$0xff]
      %v832 = vld [vmem:[%s219 + $0x12f8] sm:$0xff]
      %v833 = vld [vmem:[%s219 + $0x1300] sm:$0xff]
      %v834 = vld [vmem:[%s219 + $0x1308] sm:$0xff]
      %v835 = vld [vmem:[%s219 + $0x1310] sm:$0xff]
      %v836 = vld [vmem:[%s219 + $0x1318] sm:$0xff]
      %v837 = vld [vmem:[%s219 + $0x1320] sm:$0xff]
      %v838 = vld [vmem:[%s219 + $0x1328] sm:$0xff]
      %v839 = vld [vmem:[%s219 + $0x1330] sm:$0xff]
      %v840 = vld [vmem:[%s219 + $0x1338] sm:$0xff]
      %v841 = vld [vmem:[%s219 + $0x1340] sm:$0xff]
      %v842 = vld [vmem:[%s219 + $0x1348] sm:$0xff]
      %v843 = vld [vmem:[%s219 + $0x1350] sm:$0xff]
      %v844 = vld [vmem:[%s219 + $0x1358] sm:$0xff]
      %v845 = vld [vmem:[%s219 + $0x1360] sm:$0xff]
      %v846 = vld [vmem:[%s219 + $0x1368] sm:$0xff]
      %v847 = vld [vmem:[%s219 + $0x1370] sm:$0xff]
      %v848 = vld [vmem:[%s219 + $0x1378] sm:$0xff]
      %v849 = vld [vmem:[%s219 + $0x1380] sm:$0xff]
      %v850 = vld [vmem:[%s219 + $0x1388] sm:$0xff]
      %v851 = vld [vmem:[%s219 + $0x1390] sm:$0xff]
      %v852 = vld [vmem:[%s219 + $0x1398] sm:$0xff]
      %v853 = vld [vmem:[%s219 + $0x13a0] sm:$0xff]
      %v854 = vld [vmem:[%s219 + $0x13a8] sm:$0xff]
      %v855 = vld [vmem:[%s219 + $0x13b0] sm:$0xff]
      %v856 = vld [vmem:[%s219 + $0x13b8] sm:$0xff]
      %v857 = vld [vmem:[%s219 + $0x13c0] sm:$0xff]
      %v858 = vld [vmem:[%s219 + $0x13c8] sm:$0xff]
      %v859 = vld [vmem:[%s219 + $0x13d0] sm:$0xff]
      %v860 = vld [vmem:[%s219 + $0x13d8] sm:$0xff]
      %v861 = vld [vmem:[%s219 + $0x13e0] sm:$0xff]
      %v862 = vld [vmem:[%s219 + $0x13e8] sm:$0xff]
      %v863 = vld [vmem:[%s219 + $0x13f0] sm:$0xff]
      %v864 = vld [vmem:[%s219 + $0x13f8] sm:$0xff]
      %v865 = vld [vmem:[%s219 + $0x1400] sm:$0xff]
      %v866 = vld [vmem:[%s219 + $0x1408] sm:$0xff]
      %v867 = vld [vmem:[%s219 + $0x1410] sm:$0xff]
      %v868 = vld [vmem:[%s219 + $0x1418] sm:$0xff]
      %v869 = vld [vmem:[%s219 + $0x1420] sm:$0xff]
      %v870 = vld [vmem:[%s219 + $0x1428] sm:$0xff]
      %v871 = vld [vmem:[%s219 + $0x1430] sm:$0xff]
      %v872 = vld [vmem:[%s219 + $0x1438] sm:$0xff]
      %v873 = vld [vmem:[%s219 + $0x1440] sm:$0xff]
      %v874 = vld [vmem:[%s219 + $0x1448] sm:$0xff]
      %v875 = vld [vmem:[%s219 + $0x1450] sm:$0xff]
      %v876 = vld [vmem:[%s219 + $0x1458] sm:$0xff]
      %v877 = vld [vmem:[%s219 + $0x1460] sm:$0xff]
      %v878 = vld [vmem:[%s219 + $0x1468] sm:$0xff]
      %v879 = vld [vmem:[%s219 + $0x1470] sm:$0xff]
      %v880 = vld [vmem:[%s219 + $0x1478] sm:$0xff]
      %v881 = vld [vmem:[%s219 + $0x1480] sm:$0xff]
      %v882 = vld [vmem:[%s219 + $0x1488] sm:$0xff]
      %v883 = vld [vmem:[%s219 + $0x1490] sm:$0xff]
      %v884 = vld [vmem:[%s219 + $0x1498] sm:$0xff]
      %v885 = vld [vmem:[%s219 + $0x14a0] sm:$0xff]
      %v886 = vld [vmem:[%s219 + $0x14a8] sm:$0xff]
      %v887 = vld [vmem:[%s219 + $0x14b0] sm:$0xff]
      %v888 = vld [vmem:[%s219 + $0x14b8] sm:$0xff]
      %v889 = vld [vmem:[%s219 + $0x14c0] sm:$0xff]
      %v890 = vld [vmem:[%s219 + $0x14c8] sm:$0xff]
      %v891 = vld [vmem:[%s219 + $0x14d0] sm:$0xff]
      %v892 = vld [vmem:[%s219 + $0x14d8] sm:$0xff]
      %v893 = vld [vmem:[%s219 + $0x14e0] sm:$0xff]
      %v894 = vld [vmem:[%s219 + $0x14e8] sm:$0xff]
      %v895 = vld [vmem:[%s219 + $0x14f0] sm:$0xff]
      %v896 = vld [vmem:[%s219 + $0x14f8] sm:$0xff]
      %v897 = vld [vmem:[%s219 + $0x1500] sm:$0xff]
      %v898 = vld [vmem:[%s219 + $0x1508] sm:$0xff]
      %v899 = vld [vmem:[%s219 + $0x1510] sm:$0xff]
      %v900 = vld [vmem:[%s219 + $0x1518] sm:$0xff]
      %v901 = vld [vmem:[%s219 + $0x1520] sm:$0xff]
      %v902 = vld [vmem:[%s219 + $0x1528] sm:$0xff]
      %v903 = vld [vmem:[%s219 + $0x1530] sm:$0xff]
      %v904 = vld [vmem:[%s219 + $0x1538] sm:$0xff]
      %v905 = vld [vmem:[%s219 + $0x1540] sm:$0xff]
      %v906 = vld [vmem:[%s219 + $0x1548] sm:$0xff]
      %v907 = vld [vmem:[%s219 + $0x1550] sm:$0xff]
      %v908 = vld [vmem:[%s219 + $0x1558] sm:$0xff]
      %v909 = vld [vmem:[%s219 + $0x1560] sm:$0xff]
      %v910 = vld [vmem:[%s219 + $0x1568] sm:$0xff]
      %v911 = vld [vmem:[%s219 + $0x1570] sm:$0xff]
      %v912 = vld [vmem:[%s219 + $0x1578] sm:$0xff]
      %v913 = vld [vmem:[%s219 + $0x1580] sm:$0xff]
      %v914 = vld [vmem:[%s219 + $0x1588] sm:$0xff]
      %v915 = vld [vmem:[%s219 + $0x1590] sm:$0xff]
      %v916 = vld [vmem:[%s219 + $0x1598] sm:$0xff]
      %v917 = vld [vmem:[%s219 + $0x15a0] sm:$0xff]
      %v918 = vld [vmem:[%s219 + $0x15a8] sm:$0xff]
      %v919 = vld [vmem:[%s219 + $0x15b0] sm:$0xff]
      %v920 = vld [vmem:[%s219 + $0x15b8] sm:$0xff]
      %v921 = vld [vmem:[%s219 + $0x15c0] sm:$0xff]
      %v922 = vld [vmem:[%s219 + $0x15c8] sm:$0xff]
      %v923 = vld [vmem:[%s219 + $0x15d0] sm:$0xff]
      %v924 = vld [vmem:[%s219 + $0x15d8] sm:$0xff]
      %v925 = vld [vmem:[%s219 + $0x15e0] sm:$0xff]
      %v926 = vld [vmem:[%s219 + $0x15e8] sm:$0xff]
      %v927 = vld [vmem:[%s219 + $0x15f0] sm:$0xff]
      %v928 = vld [vmem:[%s219 + $0x15f8] sm:$0xff]
      %v929 = vld [vmem:[%s219 + $0x1600] sm:$0xff]
      %v930 = vld [vmem:[%s219 + $0x1608] sm:$0xff]
      %v931 = vld [vmem:[%s219 + $0x1610] sm:$0xff]
      %v932 = vld [vmem:[%s219 + $0x1618] sm:$0xff]
      %v933 = vld [vmem:[%s219 + $0x1620] sm:$0xff]
      %v934 = vld [vmem:[%s219 + $0x1628] sm:$0xff]
      %v935 = vld [vmem:[%s219 + $0x1630] sm:$0xff]
      %v936 = vld [vmem:[%s219 + $0x1638] sm:$0xff]
      %v937 = vld [vmem:[%s219 + $0x1640] sm:$0xff]
      %v938 = vld [vmem:[%s219 + $0x1648] sm:$0xff]
      %v939 = vld [vmem:[%s219 + $0x1650] sm:$0xff]
      %v940 = vld [vmem:[%s219 + $0x1658] sm:$0xff]
      %v941 = vld [vmem:[%s219 + $0x1660] sm:$0xff]
      %v942 = vld [vmem:[%s219 + $0x1668] sm:$0xff]
      %v943 = vld [vmem:[%s219 + $0x1670] sm:$0xff]
      %v944 = vld [vmem:[%s219 + $0x1678] sm:$0xff]
      %v945 = vld [vmem:[%s219 + $0x1680] sm:$0xff]
      %v946 = vld [vmem:[%s219 + $0x1688] sm:$0xff]
      %v947 = vld [vmem:[%s219 + $0x1690] sm:$0xff]
      %v948 = vld [vmem:[%s219 + $0x1698] sm:$0xff]
      %v949 = vld [vmem:[%s219 + $0x16a0] sm:$0xff]
      %v950 = vld [vmem:[%s219 + $0x16a8] sm:$0xff]
      %v951 = vld [vmem:[%s219 + $0x16b0] sm:$0xff]
      %v952 = vld [vmem:[%s219 + $0x16b8] sm:$0xff]
      %v953 = vld [vmem:[%s219 + $0x16c0] sm:$0xff]
      %v954 = vld [vmem:[%s219 + $0x16c8] sm:$0xff]
      %v955 = vld [vmem:[%s219 + $0x16d0] sm:$0xff]
      %v956 = vld [vmem:[%s219 + $0x16d8] sm:$0xff]
      %v957 = vld [vmem:[%s219 + $0x16e0] sm:$0xff]
      %v958 = vld [vmem:[%s219 + $0x16e8] sm:$0xff]
      %v959 = vld [vmem:[%s219 + $0x16f0] sm:$0xff]
      %v960 = vld [vmem:[%s219 + $0x16f8] sm:$0xff]
      %v961 = vld [vmem:[%s219 + $0x1700] sm:$0xff]
      %v962 = vld [vmem:[%s219 + $0x1708] sm:$0xff]
      %v963 = vld [vmem:[%s219 + $0x1710] sm:$0xff]
      %v964 = vld [vmem:[%s219 + $0x1718] sm:$0xff]
      %v965 = vld [vmem:[%s219 + $0x1720] sm:$0xff]
      %v966 = vld [vmem:[%s219 + $0x1728] sm:$0xff]
      %v967 = vld [vmem:[%s219 + $0x1730] sm:$0xff]
      %v968 = vld [vmem:[%s219 + $0x1738] sm:$0xff]
      %v969 = vld [vmem:[%s219 + $0x1740] sm:$0xff]
      %v970 = vld [vmem:[%s219 + $0x1748] sm:$0xff]
      %v971 = vld [vmem:[%s219 + $0x1750] sm:$0xff]
      %v972 = vld [vmem:[%s219 + $0x1758] sm:$0xff]
      %v973 = vld [vmem:[%s219 + $0x1760] sm:$0xff]
      %v974 = vld [vmem:[%s219 + $0x1768] sm:$0xff]
      %v975 = vld [vmem:[%s219 + $0x1770] sm:$0xff]
      %v976 = vld [vmem:[%s219 + $0x1778] sm:$0xff]
      %v977 = vld [vmem:[%s219 + $0x1780] sm:$0xff]
      %v978 = vld [vmem:[%s219 + $0x1788] sm:$0xff]
      %v979 = vld [vmem:[%s219 + $0x1790] sm:$0xff]
      %v980 = vld [vmem:[%s219 + $0x1798] sm:$0xff]
      %v981 = vld [vmem:[%s219 + $0x17a0] sm:$0xff]
      %v982 = vld [vmem:[%s219 + $0x17a8] sm:$0xff]
      %v983 = vld [vmem:[%s219 + $0x17b0] sm:$0xff]
      %v984 = vld [vmem:[%s219 + $0x17b8] sm:$0xff]
      %v985 = vld [vmem:[%s219 + $0x17c0] sm:$0xff]
      %v986 = vld [vmem:[%s219 + $0x17c8] sm:$0xff]
      %v987 = vld [vmem:[%s219 + $0x17d0] sm:$0xff]
      %v988 = vld [vmem:[%s219 + $0x17d8] sm:$0xff]
      %v989 = vld [vmem:[%s219 + $0x17e0] sm:$0xff]
      %v990 = vld [vmem:[%s219 + $0x17e8] sm:$0xff]
      %v991 = vld [vmem:[%s219 + $0x17f0] sm:$0xff]
      %v992 = vld [vmem:[%s219 + $0x17f8] sm:$0xff]
      %v993 = vld [vmem:[%s219 + $0x1800] sm:$0xff]
      %v994 = vld [vmem:[%s219 + $0x1808] sm:$0xff]
      %v995 = vld [vmem:[%s219 + $0x1810] sm:$0xff]
      %v996 = vld [vmem:[%s219 + $0x1818] sm:$0xff]
      %v997 = vld [vmem:[%s219 + $0x1820] sm:$0xff]
      %v998 = vld [vmem:[%s219 + $0x1828] sm:$0xff]
      %v999 = vld [vmem:[%s219 + $0x1830] sm:$0xff]
      %v1000 = vld [vmem:[%s219 + $0x1838] sm:$0xff]
      %v1001 = vld [vmem:[%s219 + $0x1840] sm:$0xff]
      %v1002 = vld [vmem:[%s219 + $0x1848] sm:$0xff]
      %v1003 = vld [vmem:[%s219 + $0x1850] sm:$0xff]
      %v1004 = vld [vmem:[%s219 + $0x1858] sm:$0xff]
      %v1005 = vld [vmem:[%s219 + $0x1860] sm:$0xff]
      %v1006 = vld [vmem:[%s219 + $0x1868] sm:$0xff]
      %v1007 = vld [vmem:[%s219 + $0x1870] sm:$0xff]
      %v1008 = vld [vmem:[%s219 + $0x1878] sm:$0xff]
      %v1009 = vld [vmem:[%s219 + $0x1880] sm:$0xff]
      %v1010 = vld [vmem:[%s219 + $0x1888] sm:$0xff]
      %v1011 = vld [vmem:[%s219 + $0x1890] sm:$0xff]
      %v1012 = vld [vmem:[%s219 + $0x1898] sm:$0xff]
      %v1013 = vld [vmem:[%s219 + $0x18a0] sm:$0xff]
      %v1014 = vld [vmem:[%s219 + $0x18a8] sm:$0xff]
      %v1015 = vld [vmem:[%s219 + $0x18b0] sm:$0xff]
      %v1016 = vld [vmem:[%s219 + $0x18b8] sm:$0xff]
      %v1017 = vld [vmem:[%s219 + $0x18c0] sm:$0xff]
      %v1018 = vld [vmem:[%s219 + $0x18c8] sm:$0xff]
      %v1019 = vld [vmem:[%s219 + $0x18d0] sm:$0xff]
      %v1020 = vld [vmem:[%s219 + $0x18d8] sm:$0xff]
      %v1021 = vld [vmem:[%s219 + $0x18e0] sm:$0xff]
      %v1022 = vld [vmem:[%s219 + $0x18e8] sm:$0xff]
      %v1023 = vld [vmem:[%s219 + $0x18f0] sm:$0xff]
      %v1024 = vld [vmem:[%s219 + $0x18f8] sm:$0xff]
      %v1025 = vld [vmem:[%s219 + $0x1900] sm:$0xff]
      %v1026 = vld [vmem:[%s219 + $0x1908] sm:$0xff]
      %v1027 = vld [vmem:[%s219 + $0x1910] sm:$0xff]
      %v1028 = vld [vmem:[%s219 + $0x1918] sm:$0xff]
      %v1029 = vld [vmem:[%s219 + $0x1920] sm:$0xff]
      %v1030 = vld [vmem:[%s219 + $0x1928] sm:$0xff]
      %v1031 = vld [vmem:[%s219 + $0x1930] sm:$0xff]
      %v1032 = vld [vmem:[%s219 + $0x1938] sm:$0xff]
      %v1033 = vld [vmem:[%s219 + $0x1940] sm:$0xff]
      %v1034 = vld [vmem:[%s219 + $0x1948] sm:$0xff]
      %v1035 = vld [vmem:[%s219 + $0x1950] sm:$0xff]
      %v1036 = vld [vmem:[%s219 + $0x1958] sm:$0xff]
      %v1037 = vld [vmem:[%s219 + $0x1960] sm:$0xff]
      %v1038 = vld [vmem:[%s219 + $0x1968] sm:$0xff]
      %v1039 = vld [vmem:[%s219 + $0x1970] sm:$0xff]
      %v1040 = vld [vmem:[%s219 + $0x1978] sm:$0xff]
      %v1041 = vld [vmem:[%s219 + $0x1980] sm:$0xff]
      %v1042 = vld [vmem:[%s219 + $0x1988] sm:$0xff]
      %v1043 = vld [vmem:[%s219 + $0x1990] sm:$0xff]
      %v1044 = vld [vmem:[%s219 + $0x1998] sm:$0xff]
      %v1045 = vld [vmem:[%s219 + $0x19a0] sm:$0xff]
      %v1046 = vld [vmem:[%s219 + $0x19a8] sm:$0xff]
      %v1047 = vld [vmem:[%s219 + $0x19b0] sm:$0xff]
      %v1048 = vld [vmem:[%s219 + $0x19b8] sm:$0xff]
      %v1049 = vld [vmem:[%s219 + $0x19c0] sm:$0xff]
      %v1050 = vld [vmem:[%s219 + $0x19c8] sm:$0xff]
      %v1051 = vld [vmem:[%s219 + $0x19d0] sm:$0xff]
      %v1052 = vld [vmem:[%s219 + $0x19d8] sm:$0xff]
      %v1053 = vld [vmem:[%s219 + $0x19e0] sm:$0xff]
      %v1054 = vld [vmem:[%s219 + $0x19e8] sm:$0xff]
      %v1055 = vld [vmem:[%s219 + $0x19f0] sm:$0xff]
      %v1056 = vld [vmem:[%s219 + $0x19f8] sm:$0xff]
      %v1057 = vld [vmem:[%s219 + $0x1a00] sm:$0xff]
      %v1058 = vld [vmem:[%s219 + $0x1a08] sm:$0xff]
      %v1059 = vld [vmem:[%s219 + $0x1a10] sm:$0xff]
      %v1060 = vld [vmem:[%s219 + $0x1a18] sm:$0xff]
      %v1061 = vld [vmem:[%s219 + $0x1a20] sm:$0xff]
      %v1062 = vld [vmem:[%s219 + $0x1a28] sm:$0xff]
      %v1063 = vld [vmem:[%s219 + $0x1a30] sm:$0xff]
      %v1064 = vld [vmem:[%s219 + $0x1a38] sm:$0xff]
      %v1065 = vld [vmem:[%s219 + $0x1a40] sm:$0xff]
      %v1066 = vld [vmem:[%s219 + $0x1a48] sm:$0xff]
      %v1067 = vld [vmem:[%s219 + $0x1a50] sm:$0xff]
      %v1068 = vld [vmem:[%s219 + $0x1a58] sm:$0xff]
      %v1069 = vld [vmem:[%s219 + $0x1a60] sm:$0xff]
      %v1070 = vld [vmem:[%s219 + $0x1a68] sm:$0xff]
      %v1071 = vld [vmem:[%s219 + $0x1a70] sm:$0xff]
      %v1072 = vld [vmem:[%s219 + $0x1a78] sm:$0xff]
      %v1073 = vld [vmem:[%s219 + $0x1a80] sm:$0xff]
      %v1074 = vld [vmem:[%s219 + $0x1a88] sm:$0xff]
      %v1075 = vld [vmem:[%s219 + $0x1a90] sm:$0xff]
      %v1076 = vld [vmem:[%s219 + $0x1a98] sm:$0xff]
      %v1077 = vld [vmem:[%s219 + $0x1aa0] sm:$0xff]
      %v1078 = vld [vmem:[%s219 + $0x1aa8] sm:$0xff]
      %v1079 = vld [vmem:[%s219 + $0x1ab0] sm:$0xff]
      %v1080 = vld [vmem:[%s219 + $0x1ab8] sm:$0xff]
      %v1081 = vld [vmem:[%s219 + $0x1ac0] sm:$0xff]
      %v1082 = vld [vmem:[%s219 + $0x1ac8] sm:$0xff]
      %v1083 = vld [vmem:[%s219 + $0x1ad0] sm:$0xff]
      %v1084 = vld [vmem:[%s219 + $0x1ad8] sm:$0xff]
      %v1085 = vld [vmem:[%s219 + $0x1ae0] sm:$0xff]
      %v1086 = vld [vmem:[%s219 + $0x1ae8] sm:$0xff]
      %v1087 = vld [vmem:[%s219 + $0x1af0] sm:$0xff]
      %v1088 = vld [vmem:[%s219 + $0x1af8] sm:$0xff]
      %v1089 = vld [vmem:[%s219 + $0x1b00] sm:$0xff]
      %v1090 = vld [vmem:[%s219 + $0x1b08] sm:$0xff]
      %v1091 = vld [vmem:[%s219 + $0x1b10] sm:$0xff]
      %v1092 = vld [vmem:[%s219 + $0x1b18] sm:$0xff]
      %v1093 = vld [vmem:[%s219 + $0x1b20] sm:$0xff]
      %v1094 = vld [vmem:[%s219 + $0x1b28] sm:$0xff]
      %v1095 = vld [vmem:[%s219 + $0x1b30] sm:$0xff]
      %v1096 = vld [vmem:[%s219 + $0x1b38] sm:$0xff]
      %v1097 = vld [vmem:[%s219 + $0x1b40] sm:$0xff]
      %v1098 = vld [vmem:[%s219 + $0x1b48] sm:$0xff]
      %v1099 = vld [vmem:[%s219 + $0x1b50] sm:$0xff]
      %v1100 = vld [vmem:[%s219 + $0x1b58] sm:$0xff]
      %v1101 = vld [vmem:[%s219 + $0x1b60] sm:$0xff]
      %v1102 = vld [vmem:[%s219 + $0x1b68] sm:$0xff]
      %v1103 = vld [vmem:[%s219 + $0x1b70] sm:$0xff]
      %v1104 = vld [vmem:[%s219 + $0x1b78] sm:$0xff]
      %v1105 = vld [vmem:[%s219 + $0x1b80] sm:$0xff]
      %v1106 = vld [vmem:[%s219 + $0x1b88] sm:$0xff]
      %v1107 = vld [vmem:[%s219 + $0x1b90] sm:$0xff]
      %v1108 = vld [vmem:[%s219 + $0x1b98] sm:$0xff]
      %v1109 = vld [vmem:[%s219 + $0x1ba0] sm:$0xff]
      %v1110 = vld [vmem:[%s219 + $0x1ba8] sm:$0xff]
      %v1111 = vld [vmem:[%s219 + $0x1bb0] sm:$0xff]
      %v1112 = vld [vmem:[%s219 + $0x1bb8] sm:$0xff]
      %v1113 = vld [vmem:[%s219 + $0x1bc0] sm:$0xff]
      %v1114 = vld [vmem:[%s219 + $0x1bc8] sm:$0xff]
      %v1115 = vld [vmem:[%s219 + $0x1bd0] sm:$0xff]
      %v1116 = vld [vmem:[%s219 + $0x1bd8] sm:$0xff]
      %v1117 = vld [vmem:[%s219 + $0x1be0] sm:$0xff]
      %v1118 = vld [vmem:[%s219 + $0x1be8] sm:$0xff]
      %v1119 = vld [vmem:[%s219 + $0x1bf0] sm:$0xff]
      %v1120 = vld [vmem:[%s219 + $0x1bf8] sm:$0xff]
      %v1121 = vld [vmem:[%s219 + $0x1c00] sm:$0xff]
      %v1122 = vld [vmem:[%s219 + $0x1c08] sm:$0xff]
      %v1123 = vld [vmem:[%s219 + $0x1c10] sm:$0xff]
      %v1124 = vld [vmem:[%s219 + $0x1c18] sm:$0xff]
      %v1125 = vld [vmem:[%s219 + $0x1c20] sm:$0xff]
      %v1126 = vld [vmem:[%s219 + $0x1c28] sm:$0xff]
      %v1127 = vld [vmem:[%s219 + $0x1c30] sm:$0xff]
      %v1128 = vld [vmem:[%s219 + $0x1c38] sm:$0xff]
      %v1129 = vld [vmem:[%s219 + $0x1c40] sm:$0xff]
      %v1130 = vld [vmem:[%s219 + $0x1c48] sm:$0xff]
      %v1131 = vld [vmem:[%s219 + $0x1c50] sm:$0xff]
      %v1132 = vld [vmem:[%s219 + $0x1c58] sm:$0xff]
      %v1133 = vld [vmem:[%s219 + $0x1c60] sm:$0xff]
      %v1134 = vld [vmem:[%s219 + $0x1c68] sm:$0xff]
      %v1135 = vld [vmem:[%s219 + $0x1c70] sm:$0xff]
      %v1136 = vld [vmem:[%s219 + $0x1c78] sm:$0xff]
      %v1137 = vld [vmem:[%s219 + $0x1c80] sm:$0xff]
      %v1138 = vld [vmem:[%s219 + $0x1c88] sm:$0xff]
      %v1139 = vld [vmem:[%s219 + $0x1c90] sm:$0xff]
      %v1140 = vld [vmem:[%s219 + $0x1c98] sm:$0xff]
      %v1141 = vld [vmem:[%s219 + $0x1ca0] sm:$0xff]
      %v1142 = vld [vmem:[%s219 + $0x1ca8] sm:$0xff]
      %v1143 = vld [vmem:[%s219 + $0x1cb0] sm:$0xff]
      %v1144 = vld [vmem:[%s219 + $0x1cb8] sm:$0xff]
      %v1145 = vld [vmem:[%s219 + $0x1cc0] sm:$0xff]
      %v1146 = vld [vmem:[%s219 + $0x1cc8] sm:$0xff]
      %v1147 = vld [vmem:[%s219 + $0x1cd0] sm:$0xff]
      %v1148 = vld [vmem:[%s219 + $0x1cd8] sm:$0xff]
      %v1149 = vld [vmem:[%s219 + $0x1ce0] sm:$0xff]
      %v1150 = vld [vmem:[%s219 + $0x1ce8] sm:$0xff]
      %v1151 = vld [vmem:[%s219 + $0x1cf0] sm:$0xff]
      %v1152 = vld [vmem:[%s219 + $0x1cf8] sm:$0xff]
      %v1153 = vld [vmem:[%s219 + $0x1d00] sm:$0xff]
      %v1154 = vld [vmem:[%s219 + $0x1d08] sm:$0xff]
      %v1155 = vld [vmem:[%s219 + $0x1d10] sm:$0xff]
      %v1156 = vld [vmem:[%s219 + $0x1d18] sm:$0xff]
      %v1157 = vld [vmem:[%s219 + $0x1d20] sm:$0xff]
      %v1158 = vld [vmem:[%s219 + $0x1d28] sm:$0xff]
      %v1159 = vld [vmem:[%s219 + $0x1d30] sm:$0xff]
      %v1160 = vld [vmem:[%s219 + $0x1d38] sm:$0xff]
      %v1161 = vld [vmem:[%s219 + $0x1d40] sm:$0xff]
      %v1162 = vld [vmem:[%s219 + $0x1d48] sm:$0xff]
      %v1163 = vld [vmem:[%s219 + $0x1d50] sm:$0xff]
      %v1164 = vld [vmem:[%s219 + $0x1d58] sm:$0xff]
      %v1165 = vld [vmem:[%s219 + $0x1d60] sm:$0xff]
      %v1166 = vld [vmem:[%s219 + $0x1d68] sm:$0xff]
      %v1167 = vld [vmem:[%s219 + $0x1d70] sm:$0xff]
      %v1168 = vld [vmem:[%s219 + $0x1d78] sm:$0xff]
      %v1169 = vld [vmem:[%s219 + $0x1d80] sm:$0xff]
      %v1170 = vld [vmem:[%s219 + $0x1d88] sm:$0xff]
      %v1171 = vld [vmem:[%s219 + $0x1d90] sm:$0xff]
      %v1172 = vld [vmem:[%s219 + $0x1d98] sm:$0xff]
      %v1173 = vld [vmem:[%s219 + $0x1da0] sm:$0xff]
      %v1174 = vld [vmem:[%s219 + $0x1da8] sm:$0xff]
      %v1175 = vld [vmem:[%s219 + $0x1db0] sm:$0xff]
      %v1176 = vld [vmem:[%s219 + $0x1db8] sm:$0xff]
      %v1177 = vld [vmem:[%s219 + $0x1dc0] sm:$0xff]
      %v1178 = vld [vmem:[%s219 + $0x1dc8] sm:$0xff]
      %v1179 = vld [vmem:[%s219 + $0x1dd0] sm:$0xff]
      %v1180 = vld [vmem:[%s219 + $0x1dd8] sm:$0xff]
      %v1181 = vld [vmem:[%s219 + $0x1de0] sm:$0xff]
      %v1182 = vld [vmem:[%s219 + $0x1de8] sm:$0xff]
      %v1183 = vld [vmem:[%s219 + $0x1df0] sm:$0xff]
      %v1184 = vld [vmem:[%s219 + $0x1df8] sm:$0xff]
      %v1185 = vld [vmem:[%s219 + $0x1e00] sm:$0xff]
      %v1186 = vld [vmem:[%s219 + $0x1e08] sm:$0xff]
      %v1187 = vld [vmem:[%s219 + $0x1e10] sm:$0xff]
      %v1188 = vld [vmem:[%s219 + $0x1e18] sm:$0xff]
      %v1189 = vld [vmem:[%s219 + $0x1e20] sm:$0xff]
      %v1190 = vld [vmem:[%s219 + $0x1e28] sm:$0xff]
      %v1191 = vld [vmem:[%s219 + $0x1e30] sm:$0xff]
      %v1192 = vld [vmem:[%s219 + $0x1e38] sm:$0xff]
      %v1193 = vld [vmem:[%s219 + $0x1e40] sm:$0xff]
      %v1194 = vld [vmem:[%s219 + $0x1e48] sm:$0xff]
      %v1195 = vld [vmem:[%s219 + $0x1e50] sm:$0xff]
      %v1196 = vld [vmem:[%s219 + $0x1e58] sm:$0xff]
      %v1197 = vld [vmem:[%s219 + $0x1e60] sm:$0xff]
      %v1198 = vld [vmem:[%s219 + $0x1e68] sm:$0xff]
      %v1199 = vld [vmem:[%s219 + $0x1e70] sm:$0xff]
      %v1200 = vld [vmem:[%s219 + $0x1e78] sm:$0xff]
      %v1201 = vld [vmem:[%s219 + $0x1e80] sm:$0xff]
      %v1202 = vld [vmem:[%s219 + $0x1e88] sm:$0xff]
      %v1203 = vld [vmem:[%s219 + $0x1e90] sm:$0xff]
      %v1204 = vld [vmem:[%s219 + $0x1e98] sm:$0xff]
      %v1205 = vld [vmem:[%s219 + $0x1ea0] sm:$0xff]
      %v1206 = vld [vmem:[%s219 + $0x1ea8] sm:$0xff]
      %v1207 = vld [vmem:[%s219 + $0x1eb0] sm:$0xff]
      %v1208 = vld [vmem:[%s219 + $0x1eb8] sm:$0xff]
      %v1209 = vld [vmem:[%s219 + $0x1ec0] sm:$0xff]
      %v1210 = vld [vmem:[%s219 + $0x1ec8] sm:$0xff]
      %v1211 = vld [vmem:[%s219 + $0x1ed0] sm:$0xff]
      %v1212 = vld [vmem:[%s219 + $0x1ed8] sm:$0xff]
      %v1213 = vld [vmem:[%s219 + $0x1ee0] sm:$0xff]
      %v1214 = vld [vmem:[%s219 + $0x1ee8] sm:$0xff]
      %v1215 = vld [vmem:[%s219 + $0x1ef0] sm:$0xff]
      %v1216 = vld [vmem:[%s219 + $0x1ef8] sm:$0xff]
      %v1217 = vld [vmem:[%s219 + $0x1f00] sm:$0xff]
      %v1218 = vld [vmem:[%s219 + $0x1f08] sm:$0xff]
      %v1219 = vld [vmem:[%s219 + $0x1f10] sm:$0xff]
      %v1220 = vld [vmem:[%s219 + $0x1f18] sm:$0xff]
      %v1221 = vld [vmem:[%s219 + $0x1f20] sm:$0xff]
      %v1222 = vld [vmem:[%s219 + $0x1f28] sm:$0xff]
      %v1223 = vld [vmem:[%s219 + $0x1f30] sm:$0xff]
      %v1224 = vld [vmem:[%s219 + $0x1f38] sm:$0xff]
      %v1225 = vld [vmem:[%s219 + $0x1f40] sm:$0xff]
      %v1226 = vld [vmem:[%s219 + $0x1f48] sm:$0xff]
      %v1227 = vld [vmem:[%s219 + $0x1f50] sm:$0xff]
      %v1228 = vld [vmem:[%s219 + $0x1f58] sm:$0xff]
      %v1229 = vld [vmem:[%s219 + $0x1f60] sm:$0xff]
      %v1230 = vld [vmem:[%s219 + $0x1f68] sm:$0xff]
      %v1231 = vld [vmem:[%s219 + $0x1f70] sm:$0xff]
      %v1232 = vld [vmem:[%s219 + $0x1f78] sm:$0xff]
      %v1233 = vld [vmem:[%s219 + $0x1f80] sm:$0xff]
      %v1234 = vld [vmem:[%s219 + $0x1f88] sm:$0xff]
      %v1235 = vld [vmem:[%s219 + $0x1f90] sm:$0xff]
      %v1236 = vld [vmem:[%s219 + $0x1f98] sm:$0xff]
      %v1237 = vld [vmem:[%s219 + $0x1fa0] sm:$0xff]
      %v1238 = vld [vmem:[%s219 + $0x1fa8] sm:$0xff]
      %v1239 = vld [vmem:[%s219 + $0x1fb0] sm:$0xff]
      %v1240 = vld [vmem:[%s219 + $0x1fb8] sm:$0xff]
      %v1241 = vld [vmem:[%s219 + $0x1fc0] sm:$0xff]
      %v1242 = vld [vmem:[%s219 + $0x1fc8] sm:$0xff]
      %v1243 = vld [vmem:[%s219 + $0x1fd0] sm:$0xff]
      %v1244 = vld [vmem:[%s219 + $0x1fd8] sm:$0xff]
      %v1245 = vld [vmem:[%s219 + $0x1fe0] sm:$0xff]
      %v1246 = vld [vmem:[%s219 + $0x1fe8] sm:$0xff]
      %v1247 = vld [vmem:[%s219 + $0x1ff0] sm:$0xff]
      %v1248 = vld [vmem:[%s219 + $0x1ff8] sm:$0xff]
      %v1249 = vld [vmem:[%s219 + $0x2000] sm:$0x1f]
      %v1250 = vld [vmem:[%s219 + $0x2008] sm:$0x1f]
      %v1251 = vld [vmem:[%s219 + $0x2010] sm:$0x1f]
      %v1252 = vld [vmem:[%s219 + $0x2018] sm:$0x1f]
      %v1253 = vld [vmem:[%s219 + $0x2020] sm:$0x1f]
      %v1254 = vld [vmem:[%s219 + $0x2028] sm:$0x1f]
      %v1255 = vld [vmem:[%s219 + $0x2030] sm:$0x1f]
      %v1256 = vld [vmem:[%s219 + $0x2038] sm:$0x1f]
      %v1257 = vld [vmem:[%s1] sm:$0xff]
      %v1258 = vld [vmem:[%s1 + $0x8] sm:$0xff]
      %v1259 = vld [vmem:[%s1 + $0x10] sm:$0xff]
      %v1260 = vld [vmem:[%s1 + $0x18] sm:$0xff]
      %v1261 = vld [vmem:[%s1 + $0x20] sm:$0xff]
      %v1262 = vld [vmem:[%s1 + $0x28] sm:$0xff]
      %v1263 = vld [vmem:[%s1 + $0x30] sm:$0xff]
      %v1264 = vld [vmem:[%s1 + $0x38] sm:$0xff]
      %v1265 = vld [vmem:[%s1 + $0x40] sm:$0xff]
      %v1266 = vld [vmem:[%s1 + $0x48] sm:$0xff]
      %v1267 = vld [vmem:[%s1 + $0x50] sm:$0xff]
      %v1268 = vld [vmem:[%s1 + $0x58] sm:$0xff]
      %v1269 = vld [vmem:[%s1 + $0x60] sm:$0xff]
      %v1270 = vld [vmem:[%s1 + $0x68] sm:$0xff]
      %v1271 = vld [vmem:[%s1 + $0x70] sm:$0xff]
      %v1272 = vld [vmem:[%s1 + $0x78] sm:$0xff]
      %v1273 = vld [vmem:[%s1 + $0x80] sm:$0xff]
      %v1274 = vld [vmem:[%s1 + $0x88] sm:$0xff]
      %v1275 = vld [vmem:[%s1 + $0x90] sm:$0xf]
      %v1276 = vld [vmem:[%s1 + $0x98] sm:$0xf]
      %v1277 = vld [vmem:[%s1 + $0xa0] sm:$0xf]
      %v1278 = vld [vmem:[%s1 + $0xa8] sm:$0xf]
      %v1279 = vld [vmem:[%s1 + $0xb0] sm:$0xf]
      %v1280 = vld [vmem:[%s1 + $0xb8] sm:$0xf]
      %v1281 = vld [vmem:[%s1 + $0xc0] sm:$0xf]
      %v1282 = vld [vmem:[%s1 + $0xc8] sm:$0xf]
      %v1283 = vld [vmem:[%s1 + $0xd0] sm:$0xf]
      %v1284 = vld [vmem:[%s2] sm:$0xff]
      %v1285 = vld [vmem:[%s2 + $0x8] sm:$0xff]
      %v1286 = vld [vmem:[%s2 + $0x10] sm:$0xf]
      %1288 = vset.pattern.permute.xlu0 0
      %1289 = vperm.xlu0 %1288, %v1284
      %v1290 = vpop.permute.xlu0 %1289
      %1293 = vset.pattern.permute.xlu0 0
      %1294 = vperm.xlu0 %1293, %v1285
      %v1295 = vpop.permute.xlu0 %1294
      %1298 = vset.pattern.permute.xlu0 0
      %1299 = vperm.xlu0 %1298, %v1286
      %v1300 = vpop.permute.xlu0 %1299
      %vm1302 = vcmask 39936
      %v1304 = vsel %vm1302, %v1265, 0
      %v1307 = vsel %vm1302, %v1274, 0
      %v1310 = vsel %vm1302, %v1283, 0
      %vm1312 = vcmask 1044480
      %v1314 = vsel %vm1312, %v1249, 0
      %v1317 = vsel %vm1312, %v1250, 0
      %v1320 = vsel %vm1312, %v1251, 0
      %v1323 = vsel %vm1312, %v1252, 0
      %v1326 = vsel %vm1312, %v1253, 0
      %v1329 = vsel %vm1312, %v1254, 0
      %v1332 = vsel %vm1312, %v1255, 0
      %v1335 = vsel %vm1312, %v1256, 0
      %1337 = vmatpush.msra.mxu0 %v345
      %1338 = vmatpush.msra.mxu0 %v337
      %1339 = vmatpush.msra.mxu0 %v329
      %1340 = vmatpush.msra.mxu0 %v321
      %1341 = vmatpush.msra.mxu0 %v313
      %1342 = vmatpush.msra.mxu0 %v305
      %1343 = vmatpush.msra.mxu0 %v297
      %1344 = vmatpush.msra.mxu0 %v289
      %1345 = vmatpush.msra.mxu0 %v281
      %1346 = vmatpush.msra.mxu0 %v273
      %1347 = vmatpush.msra.mxu0 %v265
      %1348 = vmatpush.msra.mxu0 %v257
      %1349 = vmatpush.msra.mxu0 %v249
      %1350 = vmatpush.msra.mxu0 %v241
      %1351 = vmatpush.msra.mxu0 %v233
      %1352 = vmatpush.msra.mxu0 %v225
      %1353 = vmatmul.f32.gmra.mxu0 %v1257
      %v1354 = vpop.f32.mrf.mxu0
      %v1355 = vadd.f32 %v1290, %v1354
      %1356 = vmatmul.f32.gmra.mxu0 %v1266
      %v1357 = vpop.f32.mrf.mxu0
      %v1358 = vadd.f32 %v1295, %v1357
      %1359 = vmatmul.f32.gmra.mxu0 %v1275
      %v1360 = vpop.f32.mrf.mxu0
      %v1361 = vadd.f32 %v1300, %v1360
      %1362 = vdwg.mxu0
      %1363 = vmatpush.msra.mxu0 %v473
      %1364 = vmatpush.msra.mxu0 %v465
      %1365 = vmatpush.msra.mxu0 %v457
      %1366 = vmatpush.msra.mxu0 %v449
      %1367 = vmatpush.msra.mxu0 %v441
      %1368 = vmatpush.msra.mxu0 %v433
      %1369 = vmatpush.msra.mxu0 %v425
      %1370 = vmatpush.msra.mxu0 %v417
      %1371 = vmatpush.msra.mxu0 %v409
      %1372 = vmatpush.msra.mxu0 %v401
      %1373 = vmatpush.msra.mxu0 %v393
      %1374 = vmatpush.msra.mxu0 %v385
      %1375 = vmatpush.msra.mxu0 %v377
      %1376 = vmatpush.msra.mxu0 %v369
      %1377 = vmatpush.msra.mxu0 %v361
      %1378 = vmatpush.msra.mxu0 %v353
      %1379 = vmatmul.f32.gmra.mxu0 %v1258
      %v1380 = vpop.f32.mrf.mxu0
      %v1381 = vadd.f32 %v1355, %v1380
      %1382 = vmatmul.f32.gmra.mxu0 %v1267
      %v1383 = vpop.f32.mrf.mxu0
      %v1384 = vadd.f32 %v1358, %v1383
      %1385 = vmatmul.f32.gmra.mxu0 %v1276
      %v1386 = vpop.f32.mrf.mxu0
      %v1387 = vadd.f32 %v1361, %v1386
      %1388 = vdwg.mxu0
      %1389 = vmatpush.msra.mxu0 %v601
      %1390 = vmatpush.msra.mxu0 %v593
      %1391 = vmatpush.msra.mxu0 %v585
      %1392 = vmatpush.msra.mxu0 %v577
      %1393 = vmatpush.msra.mxu0 %v569
      %1394 = vmatpush.msra.mxu0 %v561
      %1395 = vmatpush.msra.mxu0 %v553
      %1396 = vmatpush.msra.mxu0 %v545
      %1397 = vmatpush.msra.mxu0 %v537
      %1398 = vmatpush.msra.mxu0 %v529
      %1399 = vmatpush.msra.mxu0 %v521
      %1400 = vmatpush.msra.mxu0 %v513
      %1401 = vmatpush.msra.mxu0 %v505
      %1402 = vmatpush.msra.mxu0 %v497
      %1403 = vmatpush.msra.mxu0 %v489
      %1404 = vmatpush.msra.mxu0 %v481
      %1405 = vmatmul.f32.gmra.mxu0 %v1259
      %v1406 = vpop.f32.mrf.mxu0
      %v1407 = vadd.f32 %v1381, %v1406
      %1408 = vmatmul.f32.gmra.mxu0 %v1268
      %v1409 = vpop.f32.mrf.mxu0
      %v1410 = vadd.f32 %v1384, %v1409
      %1411 = vmatmul.f32.gmra.mxu0 %v1277
      %v1412 = vpop.f32.mrf.mxu0
      %v1413 = vadd.f32 %v1387, %v1412
      %1414 = vdwg.mxu0
      %1415 = vmatpush.msra.mxu0 %v729
      %1416 = vmatpush.msra.mxu0 %v721
      %1417 = vmatpush.msra.mxu0 %v713
      %1418 = vmatpush.msra.mxu0 %v705
      %1419 = vmatpush.msra.mxu0 %v697
      %1420 = vmatpush.msra.mxu0 %v689
      %1421 = vmatpush.msra.mxu0 %v681
      %1422 = vmatpush.msra.mxu0 %v673
      %1423 = vmatpush.msra.mxu0 %v665
      %1424 = vmatpush.msra.mxu0 %v657
      %1425 = vmatpush.msra.mxu0 %v649
      %1426 = vmatpush.msra.mxu0 %v641
      %1427 = vmatpush.msra.mxu0 %v633
      %1428 = vmatpush.msra.mxu0 %v625
      %1429 = vmatpush.msra.mxu0 %v617
      %1430 = vmatpush.msra.mxu0 %v609
      %1431 = vmatmul.f32.gmra.mxu0 %v1260
      %v1432 = vpop.f32.mrf.mxu0
      %v1433 = vadd.f32 %v1407, %v1432
      %1434 = vmatmul.f32.gmra.mxu0 %v1269
      %v1435 = vpop.f32.mrf.mxu0
      %v1436 = vadd.f32 %v1410, %v1435
      %1437 = vmatmul.f32.gmra.mxu0 %v1278
      %v1438 = vpop.f32.mrf.mxu0
      %v1439 = vadd.f32 %v1413, %v1438
      %1440 = vdwg.mxu0
      %1441 = vmatpush.msra.mxu0 %v857
      %1442 = vmatpush.msra.mxu0 %v849
      %1443 = vmatpush.msra.mxu0 %v841
      %1444 = vmatpush.msra.mxu0 %v833
      %1445 = vmatpush.msra.mxu0 %v825
      %1446 = vmatpush.msra.mxu0 %v817
      %1447 = vmatpush.msra.mxu0 %v809
      %1448 = vmatpush.msra.mxu0 %v801
      %1449 = vmatpush.msra.mxu0 %v793
      %1450 = vmatpush.msra.mxu0 %v785
      %1451 = vmatpush.msra.mxu0 %v777
      %1452 = vmatpush.msra.mxu0 %v769
      %1453 = vmatpush.msra.mxu0 %v761
      %1454 = vmatpush.msra.mxu0 %v753
      %1455 = vmatpush.msra.mxu0 %v745
      %1456 = vmatpush.msra.mxu0 %v737
      %1457 = vmatmul.f32.gmra.mxu0 %v1261
      %v1458 = vpop.f32.mrf.mxu0
      %v1459 = vadd.f32 %v1433, %v1458
      %1460 = vmatmul.f32.gmra.mxu0 %v1270
      %v1461 = vpop.f32.mrf.mxu0
      %v1462 = vadd.f32 %v1436, %v1461
      %1463 = vmatmul.f32.gmra.mxu0 %v1279
      %v1464 = vpop.f32.mrf.mxu0
      %v1465 = vadd.f32 %v1439, %v1464
      %1466 = vdwg.mxu0
      %1467 = vmatpush.msra.mxu0 %v985
      %1468 = vmatpush.msra.mxu0 %v977
      %1469 = vmatpush.msra.mxu0 %v969
      %1470 = vmatpush.msra.mxu0 %v961
      %1471 = vmatpush.msra.mxu0 %v953
      %1472 = vmatpush.msra.mxu0 %v945
      %1473 = vmatpush.msra.mxu0 %v937
      %1474 = vmatpush.msra.mxu0 %v929
      %1475 = vmatpush.msra.mxu0 %v921
      %1476 = vmatpush.msra.mxu0 %v913
      %1477 = vmatpush.msra.mxu0 %v905
      %1478 = vmatpush.msra.mxu0 %v897
      %1479 = vmatpush.msra.mxu0 %v889
      %1480 = vmatpush.msra.mxu0 %v881
      %1481 = vmatpush.msra.mxu0 %v873
      %1482 = vmatpush.msra.mxu0 %v865
      %1483 = vmatmul.f32.gmra.mxu0 %v1262
      %v1484 = vpop.f32.mrf.mxu0
      %v1485 = vadd.f32 %v1459, %v1484
      %1486 = vmatmul.f32.gmra.mxu0 %v1271
      %v1487 = vpop.f32.mrf.mxu0
      %v1488 = vadd.f32 %v1462, %v1487
      %1489 = vmatmul.f32.gmra.mxu0 %v1280
      %v1490 = vpop.f32.mrf.mxu0
      %v1491 = vadd.f32 %v1465, %v1490
      %1492 = vdwg.mxu0
      %1493 = vmatpush.msra.mxu0 %v1113
      %1494 = vmatpush.msra.mxu0 %v1105
      %1495 = vmatpush.msra.mxu0 %v1097
      %1496 = vmatpush.msra.mxu0 %v1089
      %1497 = vmatpush.msra.mxu0 %v1081
      %1498 = vmatpush.msra.mxu0 %v1073
      %1499 = vmatpush.msra.mxu0 %v1065
      %1500 = vmatpush.msra.mxu0 %v1057
      %1501 = vmatpush.msra.mxu0 %v1049
      %1502 = vmatpush.msra.mxu0 %v1041
      %1503 = vmatpush.msra.mxu0 %v1033
      %1504 = vmatpush.msra.mxu0 %v1025
      %1505 = vmatpush.msra.mxu0 %v1017
      %1506 = vmatpush.msra.mxu0 %v1009
      %1507 = vmatpush.msra.mxu0 %v1001
      %1508 = vmatpush.msra.mxu0 %v993
      %1509 = vmatmul.f32.gmra.mxu0 %v1263
      %v1510 = vpop.f32.mrf.mxu0
      %v1511 = vadd.f32 %v1485, %v1510
      %1512 = vmatmul.f32.gmra.mxu0 %v1272
      %v1513 = vpop.f32.mrf.mxu0
      %v1514 = vadd.f32 %v1488, %v1513
      %1515 = vmatmul.f32.gmra.mxu0 %v1281
      %v1516 = vpop.f32.mrf.mxu0
      %v1517 = vadd.f32 %v1491, %v1516
      %1518 = vdwg.mxu0
      %1519 = vmatpush.msra.mxu0 %v1241
      %1520 = vmatpush.msra.mxu0 %v1233
      %1521 = vmatpush.msra.mxu0 %v1225
      %1522 = vmatpush.msra.mxu0 %v1217
      %1523 = vmatpush.msra.mxu0 %v1209
      %1524 = vmatpush.msra.mxu0 %v1201
      %1525 = vmatpush.msra.mxu0 %v1193
      %1526 = vmatpush.msra.mxu0 %v1185
      %1527 = vmatpush.msra.mxu0 %v1177
      %1528 = vmatpush.msra.mxu0 %v1169
      %1529 = vmatpush.msra.mxu0 %v1161
      %1530 = vmatpush.msra.mxu0 %v1153
      %1531 = vmatpush.msra.mxu0 %v1145
      %1532 = vmatpush.msra.mxu0 %v1137
      %1533 = vmatpush.msra.mxu0 %v1129
      %1534 = vmatpush.msra.mxu0 %v1121
      %1535 = vmatmul.f32.gmra.mxu0 %v1264
      %v1536 = vpop.f32.mrf.mxu0
      %v1537 = vadd.f32 %v1511, %v1536
      %1538 = vmatmul.f32.gmra.mxu0 %v1273
      %v1539 = vpop.f32.mrf.mxu0
      %v1540 = vadd.f32 %v1514, %v1539
      %1541 = vmatmul.f32.gmra.mxu0 %v1282
      %v1542 = vpop.f32.mrf.mxu0
      %v1543 = vadd.f32 %v1517, %v1542
      %1544 = vdwg.mxu0
      %1545 = vmatpush.msra.mxu0 0.0
      %1546 = vmatpush.msra.mxu0 0.0
      %1547 = vmatpush.msra.mxu0 0.0
      %1548 = vmatpush.msra.mxu0 0.0
      %1549 = vmatpush.msra.mxu0 0.0
      %1550 = vmatpush.msra.mxu0 0.0
      %1551 = vmatpush.msra.mxu0 0.0
      %1552 = vmatpush.msra.mxu0 0.0
      %1553 = vmatpush.msra.mxu0 0.0
      %1554 = vmatpush.msra.mxu0 0.0
      %1555 = vmatpush.msra.mxu0 0.0
      %1556 = vmatpush.msra.mxu0 0.0
      %1557 = vmatpush.msra.mxu0 0.0
      %1558 = vmatpush.msra.mxu0 0.0
      %1559 = vmatpush.msra.mxu0 0.0
      %1560 = vmatpush.msra.mxu0 %v1314
      %1561 = vmatmul.f32.gmra.mxu0 %v1304
      %v1562 = vpop.f32.mrf.mxu0
      %v1563 = vadd.f32 %v1537, %v1562
      %1564 = vmatmul.f32.gmra.mxu0 %v1307
      %v1565 = vpop.f32.mrf.mxu0
      %v1566 = vadd.f32 %v1540, %v1565
      %1567 = vmatmul.f32.gmra.mxu0 %v1310
      %v1568 = vpop.f32.mrf.mxu0
      %v1569 = vadd.f32 %v1543, %v1568
      %1570 = vdwg.mxu0
      %1571 = vmatpush.msra.mxu0 %v346
      %1572 = vmatpush.msra.mxu0 %v338
      %1573 = vmatpush.msra.mxu0 %v330
      %1574 = vmatpush.msra.mxu0 %v322
      %1575 = vmatpush.msra.mxu0 %v314
      %1576 = vmatpush.msra.mxu0 %v306
      %1577 = vmatpush.msra.mxu0 %v298
      %1578 = vmatpush.msra.mxu0 %v290
      %1579 = vmatpush.msra.mxu0 %v282
      %1580 = vmatpush.msra.mxu0 %v274
      %1581 = vmatpush.msra.mxu0 %v266
      %1582 = vmatpush.msra.mxu0 %v258
      %1583 = vmatpush.msra.mxu0 %v250
      %1584 = vmatpush.msra.mxu0 %v242
      %1585 = vmatpush.msra.mxu0 %v234
      %1586 = vmatpush.msra.mxu0 %v226
      %1587 = vmatmul.f32.gmra.mxu0 %v1257
      %v1588 = vpop.f32.mrf.mxu0
      %v1589 = vadd.f32 %v1290, %v1588
      %1590 = vmatmul.f32.gmra.mxu0 %v1266
      %v1591 = vpop.f32.mrf.mxu0
      %v1592 = vadd.f32 %v1295, %v1591
      %1593 = vmatmul.f32.gmra.mxu0 %v1275
      %v1594 = vpop.f32.mrf.mxu0
      %v1595 = vadd.f32 %v1300, %v1594
      %1596 = vdwg.mxu0
      %1597 = vmatpush.msra.mxu0 %v474
      %1598 = vmatpush.msra.mxu0 %v466
      %1599 = vmatpush.msra.mxu0 %v458
      %1600 = vmatpush.msra.mxu0 %v450
      %1601 = vmatpush.msra.mxu0 %v442
      %1602 = vmatpush.msra.mxu0 %v434
      %1603 = vmatpush.msra.mxu0 %v426
      %1604 = vmatpush.msra.mxu0 %v418
      %1605 = vmatpush.msra.mxu0 %v410
      %1606 = vmatpush.msra.mxu0 %v402
      %1607 = vmatpush.msra.mxu0 %v394
      %1608 = vmatpush.msra.mxu0 %v386
      %1609 = vmatpush.msra.mxu0 %v378
      %1610 = vmatpush.msra.mxu0 %v370
      %1611 = vmatpush.msra.mxu0 %v362
      %1612 = vmatpush.msra.mxu0 %v354
      %1613 = vmatmul.f32.gmra.mxu0 %v1258
      %v1614 = vpop.f32.mrf.mxu0
      %v1615 = vadd.f32 %v1589, %v1614
      %1616 = vmatmul.f32.gmra.mxu0 %v1267
      %v1617 = vpop.f32.mrf.mxu0
      %v1618 = vadd.f32 %v1592, %v1617
      %1619 = vmatmul.f32.gmra.mxu0 %v1276
      %v1620 = vpop.f32.mrf.mxu0
      %v1621 = vadd.f32 %v1595, %v1620
      %1622 = vdwg.mxu0
      %1623 = vmatpush.msra.mxu0 %v602
      %1624 = vmatpush.msra.mxu0 %v594
      %1625 = vmatpush.msra.mxu0 %v586
      %1626 = vmatpush.msra.mxu0 %v578
      %1627 = vmatpush.msra.mxu0 %v570
      %1628 = vmatpush.msra.mxu0 %v562
      %1629 = vmatpush.msra.mxu0 %v554
      %1630 = vmatpush.msra.mxu0 %v546
      %1631 = vmatpush.msra.mxu0 %v538
      %1632 = vmatpush.msra.mxu0 %v530
      %1633 = vmatpush.msra.mxu0 %v522
      %1634 = vmatpush.msra.mxu0 %v514
      %1635 = vmatpush.msra.mxu0 %v506
      %1636 = vmatpush.msra.mxu0 %v498
      %1637 = vmatpush.msra.mxu0 %v490
      %1638 = vmatpush.msra.mxu0 %v482
      %1639 = vmatmul.f32.gmra.mxu0 %v1259
      %v1640 = vpop.f32.mrf.mxu0
      %v1641 = vadd.f32 %v1615, %v1640
      %1642 = vmatmul.f32.gmra.mxu0 %v1268
      %v1643 = vpop.f32.mrf.mxu0
      %v1644 = vadd.f32 %v1618, %v1643
      %1645 = vmatmul.f32.gmra.mxu0 %v1277
      %v1646 = vpop.f32.mrf.mxu0
      %v1647 = vadd.f32 %v1621, %v1646
      %1648 = vdwg.mxu0
      %1649 = vmatpush.msra.mxu0 %v730
      %1650 = vmatpush.msra.mxu0 %v722
      %1651 = vmatpush.msra.mxu0 %v714
      %1652 = vmatpush.msra.mxu0 %v706
      %1653 = vmatpush.msra.mxu0 %v698
      %1654 = vmatpush.msra.mxu0 %v690
      %1655 = vmatpush.msra.mxu0 %v682
      %1656 = vmatpush.msra.mxu0 %v674
      %1657 = vmatpush.msra.mxu0 %v666
      %1658 = vmatpush.msra.mxu0 %v658
      %1659 = vmatpush.msra.mxu0 %v650
      %1660 = vmatpush.msra.mxu0 %v642
      %1661 = vmatpush.msra.mxu0 %v634
      %1662 = vmatpush.msra.mxu0 %v626
      %1663 = vmatpush.msra.mxu0 %v618
      %1664 = vmatpush.msra.mxu0 %v610
      %1665 = vmatmul.f32.gmra.mxu0 %v1260
      %v1666 = vpop.f32.mrf.mxu0
      %v1667 = vadd.f32 %v1641, %v1666
      %1668 = vmatmul.f32.gmra.mxu0 %v1269
      %v1669 = vpop.f32.mrf.mxu0
      %v1670 = vadd.f32 %v1644, %v1669
      %1671 = vmatmul.f32.gmra.mxu0 %v1278
      %v1672 = vpop.f32.mrf.mxu0
      %v1673 = vadd.f32 %v1647, %v1672
      %1674 = vdwg.mxu0
      %1675 = vmatpush.msra.mxu0 %v858
      %1676 = vmatpush.msra.mxu0 %v850
      %1677 = vmatpush.msra.mxu0 %v842
      %1678 = vmatpush.msra.mxu0 %v834
      %1679 = vmatpush.msra.mxu0 %v826
      %1680 = vmatpush.msra.mxu0 %v818
      %1681 = vmatpush.msra.mxu0 %v810
      %1682 = vmatpush.msra.mxu0 %v802
      %1683 = vmatpush.msra.mxu0 %v794
      %1684 = vmatpush.msra.mxu0 %v786
      %1685 = vmatpush.msra.mxu0 %v778
      %1686 = vmatpush.msra.mxu0 %v770
      %1687 = vmatpush.msra.mxu0 %v762
      %1688 = vmatpush.msra.mxu0 %v754
      %1689 = vmatpush.msra.mxu0 %v746
      %1690 = vmatpush.msra.mxu0 %v738
      %1691 = vmatmul.f32.gmra.mxu0 %v1261
      %v1692 = vpop.f32.mrf.mxu0
      %v1693 = vadd.f32 %v1667, %v1692
      %1694 = vmatmul.f32.gmra.mxu0 %v1270
      %v1695 = vpop.f32.mrf.mxu0
      %v1696 = vadd.f32 %v1670, %v1695
      %1697 = vmatmul.f32.gmra.mxu0 %v1279
      %v1698 = vpop.f32.mrf.mxu0
      %v1699 = vadd.f32 %v1673, %v1698
      %1700 = vdwg.mxu0
      %1701 = vmatpush.msra.mxu0 %v986
      %1702 = vmatpush.msra.mxu0 %v978
      %1703 = vmatpush.msra.mxu0 %v970
      %1704 = vmatpush.msra.mxu0 %v962
      %1705 = vmatpush.msra.mxu0 %v954
      %1706 = vmatpush.msra.mxu0 %v946
      %1707 = vmatpush.msra.mxu0 %v938
      %1708 = vmatpush.msra.mxu0 %v930
      %1709 = vmatpush.msra.mxu0 %v922
      %1710 = vmatpush.msra.mxu0 %v914
      %1711 = vmatpush.msra.mxu0 %v906
      %1712 = vmatpush.msra.mxu0 %v898
      %1713 = vmatpush.msra.mxu0 %v890
      %1714 = vmatpush.msra.mxu0 %v882
      %1715 = vmatpush.msra.mxu0 %v874
      %1716 = vmatpush.msra.mxu0 %v866
      %1717 = vmatmul.f32.gmra.mxu0 %v1262
      %v1718 = vpop.f32.mrf.mxu0
      %v1719 = vadd.f32 %v1693, %v1718
      %1720 = vmatmul.f32.gmra.mxu0 %v1271
      %v1721 = vpop.f32.mrf.mxu0
      %v1722 = vadd.f32 %v1696, %v1721
      %1723 = vmatmul.f32.gmra.mxu0 %v1280
      %v1724 = vpop.f32.mrf.mxu0
      %v1725 = vadd.f32 %v1699, %v1724
      %1726 = vdwg.mxu0
      %1727 = vmatpush.msra.mxu0 %v1114
      %1728 = vmatpush.msra.mxu0 %v1106
      %1729 = vmatpush.msra.mxu0 %v1098
      %1730 = vmatpush.msra.mxu0 %v1090
      %1731 = vmatpush.msra.mxu0 %v1082
      %1732 = vmatpush.msra.mxu0 %v1074
      %1733 = vmatpush.msra.mxu0 %v1066
      %1734 = vmatpush.msra.mxu0 %v1058
      %1735 = vmatpush.msra.mxu0 %v1050
      %1736 = vmatpush.msra.mxu0 %v1042
      %1737 = vmatpush.msra.mxu0 %v1034
      %1738 = vmatpush.msra.mxu0 %v1026
      %1739 = vmatpush.msra.mxu0 %v1018
      %1740 = vmatpush.msra.mxu0 %v1010
      %1741 = vmatpush.msra.mxu0 %v1002
      %1742 = vmatpush.msra.mxu0 %v994
      %1743 = vmatmul.f32.gmra.mxu0 %v1263
      %v1744 = vpop.f32.mrf.mxu0
      %v1745 = vadd.f32 %v1719, %v1744
      %1746 = vmatmul.f32.gmra.mxu0 %v1272
      %v1747 = vpop.f32.mrf.mxu0
      %v1748 = vadd.f32 %v1722, %v1747
      %1749 = vmatmul.f32.gmra.mxu0 %v1281
      %v1750 = vpop.f32.mrf.mxu0
      %v1751 = vadd.f32 %v1725, %v1750
      %1752 = vdwg.mxu0
      %1753 = vmatpush.msra.mxu0 %v1242
      %1754 = vmatpush.msra.mxu0 %v1234
      %1755 = vmatpush.msra.mxu0 %v1226
      %1756 = vmatpush.msra.mxu0 %v1218
      %1757 = vmatpush.msra.mxu0 %v1210
      %1758 = vmatpush.msra.mxu0 %v1202
      %1759 = vmatpush.msra.mxu0 %v1194
      %1760 = vmatpush.msra.mxu0 %v1186
      %1761 = vmatpush.msra.mxu0 %v1178
      %1762 = vmatpush.msra.mxu0 %v1170
      %1763 = vmatpush.msra.mxu0 %v1162
      %1764 = vmatpush.msra.mxu0 %v1154
      %1765 = vmatpush.msra.mxu0 %v1146
      %1766 = vmatpush.msra.mxu0 %v1138
      %1767 = vmatpush.msra.mxu0 %v1130
      %1768 = vmatpush.msra.mxu0 %v1122
      %1769 = vmatmul.f32.gmra.mxu0 %v1264
      %v1770 = vpop.f32.mrf.mxu0
      %v1771 = vadd.f32 %v1745, %v1770
      %1772 = vmatmul.f32.gmra.mxu0 %v1273
      %v1773 = vpop.f32.mrf.mxu0
      %v1774 = vadd.f32 %v1748, %v1773
      %1775 = vmatmul.f32.gmra.mxu0 %v1282
      %v1776 = vpop.f32.mrf.mxu0
      %v1777 = vadd.f32 %v1751, %v1776
      %1778 = vdwg.mxu0
      %1779 = vmatpush.msra.mxu0 0.0
      %1780 = vmatpush.msra.mxu0 0.0
      %1781 = vmatpush.msra.mxu0 0.0
      %1782 = vmatpush.msra.mxu0 0.0
      %1783 = vmatpush.msra.mxu0 0.0
      %1784 = vmatpush.msra.mxu0 0.0
      %1785 = vmatpush.msra.mxu0 0.0
      %1786 = vmatpush.msra.mxu0 0.0
      %1787 = vmatpush.msra.mxu0 0.0
      %1788 = vmatpush.msra.mxu0 0.0
      %1789 = vmatpush.msra.mxu0 0.0
      %1790 = vmatpush.msra.mxu0 0.0
      %1791 = vmatpush.msra.mxu0 0.0
      %1792 = vmatpush.msra.mxu0 0.0
      %1793 = vmatpush.msra.mxu0 0.0
      %1794 = vmatpush.msra.mxu0 %v1317
      %1795 = vmatmul.f32.gmra.mxu0 %v1304
      %v1796 = vpop.f32.mrf.mxu0
      %v1797 = vadd.f32 %v1771, %v1796
      %1798 = vmatmul.f32.gmra.mxu0 %v1307
      %v1799 = vpop.f32.mrf.mxu0
      %v1800 = vadd.f32 %v1774, %v1799
      %1801 = vmatmul.f32.gmra.mxu0 %v1310
      %v1802 = vpop.f32.mrf.mxu0
      %v1803 = vadd.f32 %v1777, %v1802
      %1804 = vdwg.mxu0
      %1805 = vmatpush.msra.mxu0 %v347
      %1806 = vmatpush.msra.mxu0 %v339
      %1807 = vmatpush.msra.mxu0 %v331
      %1808 = vmatpush.msra.mxu0 %v323
      %1809 = vmatpush.msra.mxu0 %v315
      %1810 = vmatpush.msra.mxu0 %v307
      %1811 = vmatpush.msra.mxu0 %v299
      %1812 = vmatpush.msra.mxu0 %v291
      %1813 = vmatpush.msra.mxu0 %v283
      %1814 = vmatpush.msra.mxu0 %v275
      %1815 = vmatpush.msra.mxu0 %v267
      %1816 = vmatpush.msra.mxu0 %v259
      %1817 = vmatpush.msra.mxu0 %v251
      %1818 = vmatpush.msra.mxu0 %v243
      %1819 = vmatpush.msra.mxu0 %v235
      %1820 = vmatpush.msra.mxu0 %v227
      %1821 = vmatmul.f32.gmra.mxu0 %v1257
      %v1822 = vpop.f32.mrf.mxu0
      %v1823 = vadd.f32 %v1290, %v1822
      %1824 = vmatmul.f32.gmra.mxu0 %v1266
      %v1825 = vpop.f32.mrf.mxu0
      %v1826 = vadd.f32 %v1295, %v1825
      %1827 = vmatmul.f32.gmra.mxu0 %v1275
      %v1828 = vpop.f32.mrf.mxu0
      %v1829 = vadd.f32 %v1300, %v1828
      %1830 = vdwg.mxu0
      %1831 = vmatpush.msra.mxu0 %v475
      %1832 = vmatpush.msra.mxu0 %v467
      %1833 = vmatpush.msra.mxu0 %v459
      %1834 = vmatpush.msra.mxu0 %v451
      %1835 = vmatpush.msra.mxu0 %v443
      %1836 = vmatpush.msra.mxu0 %v435
      %1837 = vmatpush.msra.mxu0 %v427
      %1838 = vmatpush.msra.mxu0 %v419
      %1839 = vmatpush.msra.mxu0 %v411
      %1840 = vmatpush.msra.mxu0 %v403
      %1841 = vmatpush.msra.mxu0 %v395
      %1842 = vmatpush.msra.mxu0 %v387
      %1843 = vmatpush.msra.mxu0 %v379
      %1844 = vmatpush.msra.mxu0 %v371
      %1845 = vmatpush.msra.mxu0 %v363
      %1846 = vmatpush.msra.mxu0 %v355
      %1847 = vmatmul.f32.gmra.mxu0 %v1258
      %v1848 = vpop.f32.mrf.mxu0
      %v1849 = vadd.f32 %v1823, %v1848
      %1850 = vmatmul.f32.gmra.mxu0 %v1267
      %v1851 = vpop.f32.mrf.mxu0
      %v1852 = vadd.f32 %v1826, %v1851
      %1853 = vmatmul.f32.gmra.mxu0 %v1276
      %v1854 = vpop.f32.mrf.mxu0
      %v1855 = vadd.f32 %v1829, %v1854
      %1856 = vdwg.mxu0
      %1857 = vmatpush.msra.mxu0 %v603
      %1858 = vmatpush.msra.mxu0 %v595
      %1859 = vmatpush.msra.mxu0 %v587
      %1860 = vmatpush.msra.mxu0 %v579
      %1861 = vmatpush.msra.mxu0 %v571
      %1862 = vmatpush.msra.mxu0 %v563
      %1863 = vmatpush.msra.mxu0 %v555
      %1864 = vmatpush.msra.mxu0 %v547
      %1865 = vmatpush.msra.mxu0 %v539
      %1866 = vmatpush.msra.mxu0 %v531
      %1867 = vmatpush.msra.mxu0 %v523
      %1868 = vmatpush.msra.mxu0 %v515
      %1869 = vmatpush.msra.mxu0 %v507
      %1870 = vmatpush.msra.mxu0 %v499
      %1871 = vmatpush.msra.mxu0 %v491
      %1872 = vmatpush.msra.mxu0 %v483
      %1873 = vmatmul.f32.gmra.mxu0 %v1259
      %v1874 = vpop.f32.mrf.mxu0
      %v1875 = vadd.f32 %v1849, %v1874
      %1876 = vmatmul.f32.gmra.mxu0 %v1268
      %v1877 = vpop.f32.mrf.mxu0
      %v1878 = vadd.f32 %v1852, %v1877
      %1879 = vmatmul.f32.gmra.mxu0 %v1277
      %v1880 = vpop.f32.mrf.mxu0
      %v1881 = vadd.f32 %v1855, %v1880
      %1882 = vdwg.mxu0
      %1883 = vmatpush.msra.mxu0 %v731
      %1884 = vmatpush.msra.mxu0 %v723
      %1885 = vmatpush.msra.mxu0 %v715
      %1886 = vmatpush.msra.mxu0 %v707
      %1887 = vmatpush.msra.mxu0 %v699
      %1888 = vmatpush.msra.mxu0 %v691
      %1889 = vmatpush.msra.mxu0 %v683
      %1890 = vmatpush.msra.mxu0 %v675
      %1891 = vmatpush.msra.mxu0 %v667
      %1892 = vmatpush.msra.mxu0 %v659
      %1893 = vmatpush.msra.mxu0 %v651
      %1894 = vmatpush.msra.mxu0 %v643
      %1895 = vmatpush.msra.mxu0 %v635
      %1896 = vmatpush.msra.mxu0 %v627
      %1897 = vmatpush.msra.mxu0 %v619
      %1898 = vmatpush.msra.mxu0 %v611
      %1899 = vmatmul.f32.gmra.mxu0 %v1260
      %v1900 = vpop.f32.mrf.mxu0
      %v1901 = vadd.f32 %v1875, %v1900
      %1902 = vmatmul.f32.gmra.mxu0 %v1269
      %v1903 = vpop.f32.mrf.mxu0
      %v1904 = vadd.f32 %v1878, %v1903
      %1905 = vmatmul.f32.gmra.mxu0 %v1278
      %v1906 = vpop.f32.mrf.mxu0
      %v1907 = vadd.f32 %v1881, %v1906
      %1908 = vdwg.mxu0
      %1909 = vmatpush.msra.mxu0 %v859
      %1910 = vmatpush.msra.mxu0 %v851
      %1911 = vmatpush.msra.mxu0 %v843
      %1912 = vmatpush.msra.mxu0 %v835
      %1913 = vmatpush.msra.mxu0 %v827
      %1914 = vmatpush.msra.mxu0 %v819
      %1915 = vmatpush.msra.mxu0 %v811
      %1916 = vmatpush.msra.mxu0 %v803
      %1917 = vmatpush.msra.mxu0 %v795
      %1918 = vmatpush.msra.mxu0 %v787
      %1919 = vmatpush.msra.mxu0 %v779
      %1920 = vmatpush.msra.mxu0 %v771
      %1921 = vmatpush.msra.mxu0 %v763
      %1922 = vmatpush.msra.mxu0 %v755
      %1923 = vmatpush.msra.mxu0 %v747
      %1924 = vmatpush.msra.mxu0 %v739
      %1925 = vmatmul.f32.gmra.mxu0 %v1261
      %v1926 = vpop.f32.mrf.mxu0
      %v1927 = vadd.f32 %v1901, %v1926
      %1928 = vmatmul.f32.gmra.mxu0 %v1270
      %v1929 = vpop.f32.mrf.mxu0
      %v1930 = vadd.f32 %v1904, %v1929
      %1931 = vmatmul.f32.gmra.mxu0 %v1279
      %v1932 = vpop.f32.mrf.mxu0
      %v1933 = vadd.f32 %v1907, %v1932
      %1934 = vdwg.mxu0
      %1935 = vmatpush.msra.mxu0 %v987
      %1936 = vmatpush.msra.mxu0 %v979
      %1937 = vmatpush.msra.mxu0 %v971
      %1938 = vmatpush.msra.mxu0 %v963
      %1939 = vmatpush.msra.mxu0 %v955
      %1940 = vmatpush.msra.mxu0 %v947
      %1941 = vmatpush.msra.mxu0 %v939
      %1942 = vmatpush.msra.mxu0 %v931
      %1943 = vmatpush.msra.mxu0 %v923
      %1944 = vmatpush.msra.mxu0 %v915
      %1945 = vmatpush.msra.mxu0 %v907
      %1946 = vmatpush.msra.mxu0 %v899
      %1947 = vmatpush.msra.mxu0 %v891
      %1948 = vmatpush.msra.mxu0 %v883
      %1949 = vmatpush.msra.mxu0 %v875
      %1950 = vmatpush.msra.mxu0 %v867
      %1951 = vmatmul.f32.gmra.mxu0 %v1262
      %v1952 = vpop.f32.mrf.mxu0
      %v1953 = vadd.f32 %v1927, %v1952
      %1954 = vmatmul.f32.gmra.mxu0 %v1271
      %v1955 = vpop.f32.mrf.mxu0
      %v1956 = vadd.f32 %v1930, %v1955
      %1957 = vmatmul.f32.gmra.mxu0 %v1280
      %v1958 = vpop.f32.mrf.mxu0
      %v1959 = vadd.f32 %v1933, %v1958
      %1960 = vdwg.mxu0
      %1961 = vmatpush.msra.mxu0 %v1115
      %1962 = vmatpush.msra.mxu0 %v1107
      %1963 = vmatpush.msra.mxu0 %v1099
      %1964 = vmatpush.msra.mxu0 %v1091
      %1965 = vmatpush.msra.mxu0 %v1083
      %1966 = vmatpush.msra.mxu0 %v1075
      %1967 = vmatpush.msra.mxu0 %v1067
      %1968 = vmatpush.msra.mxu0 %v1059
      %1969 = vmatpush.msra.mxu0 %v1051
      %1970 = vmatpush.msra.mxu0 %v1043
      %1971 = vmatpush.msra.mxu0 %v1035
      %1972 = vmatpush.msra.mxu0 %v1027
      %1973 = vmatpush.msra.mxu0 %v1019
      %1974 = vmatpush.msra.mxu0 %v1011
      %1975 = vmatpush.msra.mxu0 %v1003
      %1976 = vmatpush.msra.mxu0 %v995
      %1977 = vmatmul.f32.gmra.mxu0 %v1263
      %v1978 = vpop.f32.mrf.mxu0
      %v1979 = vadd.f32 %v1953, %v1978
      %1980 = vmatmul.f32.gmra.mxu0 %v1272
      %v1981 = vpop.f32.mrf.mxu0
      %v1982 = vadd.f32 %v1956, %v1981
      %1983 = vmatmul.f32.gmra.mxu0 %v1281
      %v1984 = vpop.f32.mrf.mxu0
      %v1985 = vadd.f32 %v1959, %v1984
      %1986 = vdwg.mxu0
      %1987 = vmatpush.msra.mxu0 %v1243
      %1988 = vmatpush.msra.mxu0 %v1235
      %1989 = vmatpush.msra.mxu0 %v1227
      %1990 = vmatpush.msra.mxu0 %v1219
      %1991 = vmatpush.msra.mxu0 %v1211
      %1992 = vmatpush.msra.mxu0 %v1203
      %1993 = vmatpush.msra.mxu0 %v1195
      %1994 = vmatpush.msra.mxu0 %v1187
      %1995 = vmatpush.msra.mxu0 %v1179
      %1996 = vmatpush.msra.mxu0 %v1171
      %1997 = vmatpush.msra.mxu0 %v1163
      %1998 = vmatpush.msra.mxu0 %v1155
      %1999 = vmatpush.msra.mxu0 %v1147
      %2000 = vmatpush.msra.mxu0 %v1139
      %2001 = vmatpush.msra.mxu0 %v1131
      %2002 = vmatpush.msra.mxu0 %v1123
      %2003 = vmatmul.f32.gmra.mxu0 %v1264
      %v2004 = vpop.f32.mrf.mxu0
      %v2005 = vadd.f32 %v1979, %v2004
      %2006 = vmatmul.f32.gmra.mxu0 %v1273
      %v2007 = vpop.f32.mrf.mxu0
      %v2008 = vadd.f32 %v1982, %v2007
      %2009 = vmatmul.f32.gmra.mxu0 %v1282
      %v2010 = vpop.f32.mrf.mxu0
      %v2011 = vadd.f32 %v1985, %v2010
      %2012 = vdwg.mxu0
      %2013 = vmatpush.msra.mxu0 0.0
      %2014 = vmatpush.msra.mxu0 0.0
      %2015 = vmatpush.msra.mxu0 0.0
      %2016 = vmatpush.msra.mxu0 0.0
      %2017 = vmatpush.msra.mxu0 0.0
      %2018 = vmatpush.msra.mxu0 0.0
      %2019 = vmatpush.msra.mxu0 0.0
      %2020 = vmatpush.msra.mxu0 0.0
      %2021 = vmatpush.msra.mxu0 0.0
      %2022 = vmatpush.msra.mxu0 0.0
      %2023 = vmatpush.msra.mxu0 0.0
      %2024 = vmatpush.msra.mxu0 0.0
      %2025 = vmatpush.msra.mxu0 0.0
      %2026 = vmatpush.msra.mxu0 0.0
      %2027 = vmatpush.msra.mxu0 0.0
      %2028 = vmatpush.msra.mxu0 %v1320
      %2029 = vmatmul.f32.gmra.mxu0 %v1304
      %v2030 = vpop.f32.mrf.mxu0
      %v2031 = vadd.f32 %v2005, %v2030
      %2032 = vmatmul.f32.gmra.mxu0 %v1307
      %v2033 = vpop.f32.mrf.mxu0
      %v2034 = vadd.f32 %v2008, %v2033
      %2035 = vmatmul.f32.gmra.mxu0 %v1310
      %v2036 = vpop.f32.mrf.mxu0
      %v2037 = vadd.f32 %v2011, %v2036
      %2038 = vdwg.mxu0
      %2039 = vmatpush.msra.mxu0 %v348
      %2040 = vmatpush.msra.mxu0 %v340
      %2041 = vmatpush.msra.mxu0 %v332
      %2042 = vmatpush.msra.mxu0 %v324
      %2043 = vmatpush.msra.mxu0 %v316
      %2044 = vmatpush.msra.mxu0 %v308
      %2045 = vmatpush.msra.mxu0 %v300
      %2046 = vmatpush.msra.mxu0 %v292
      %2047 = vmatpush.msra.mxu0 %v284
      %2048 = vmatpush.msra.mxu0 %v276
      %2049 = vmatpush.msra.mxu0 %v268
      %2050 = vmatpush.msra.mxu0 %v260
      %2051 = vmatpush.msra.mxu0 %v252
      %2052 = vmatpush.msra.mxu0 %v244
      %2053 = vmatpush.msra.mxu0 %v236
      %2054 = vmatpush.msra.mxu0 %v228
      %2055 = vmatmul.f32.gmra.mxu0 %v1257
      %v2056 = vpop.f32.mrf.mxu0
      %v2057 = vadd.f32 %v1290, %v2056
      %2058 = vmatmul.f32.gmra.mxu0 %v1266
      %v2059 = vpop.f32.mrf.mxu0
      %v2060 = vadd.f32 %v1295, %v2059
      %2061 = vmatmul.f32.gmra.mxu0 %v1275
      %v2062 = vpop.f32.mrf.mxu0
      %v2063 = vadd.f32 %v1300, %v2062
      %2064 = vdwg.mxu0
      %2065 = vmatpush.msra.mxu0 %v476
      %2066 = vmatpush.msra.mxu0 %v468
      %2067 = vmatpush.msra.mxu0 %v460
      %2068 = vmatpush.msra.mxu0 %v452
      %2069 = vmatpush.msra.mxu0 %v444
      %2070 = vmatpush.msra.mxu0 %v436
      %2071 = vmatpush.msra.mxu0 %v428
      %2072 = vmatpush.msra.mxu0 %v420
      %2073 = vmatpush.msra.mxu0 %v412
      %2074 = vmatpush.msra.mxu0 %v404
      %2075 = vmatpush.msra.mxu0 %v396
      %2076 = vmatpush.msra.mxu0 %v388
      %2077 = vmatpush.msra.mxu0 %v380
      %2078 = vmatpush.msra.mxu0 %v372
      %2079 = vmatpush.msra.mxu0 %v364
      %2080 = vmatpush.msra.mxu0 %v356
      %2081 = vmatmul.f32.gmra.mxu0 %v1258
      %v2082 = vpop.f32.mrf.mxu0
      %v2083 = vadd.f32 %v2057, %v2082
      %2084 = vmatmul.f32.gmra.mxu0 %v1267
      %v2085 = vpop.f32.mrf.mxu0
      %v2086 = vadd.f32 %v2060, %v2085
      %2087 = vmatmul.f32.gmra.mxu0 %v1276
      %v2088 = vpop.f32.mrf.mxu0
      %v2089 = vadd.f32 %v2063, %v2088
      %2090 = vdwg.mxu0
      %2091 = vmatpush.msra.mxu0 %v604
      %2092 = vmatpush.msra.mxu0 %v596
      %2093 = vmatpush.msra.mxu0 %v588
      %2094 = vmatpush.msra.mxu0 %v580
      %2095 = vmatpush.msra.mxu0 %v572
      %2096 = vmatpush.msra.mxu0 %v564
      %2097 = vmatpush.msra.mxu0 %v556
      %2098 = vmatpush.msra.mxu0 %v548
      %2099 = vmatpush.msra.mxu0 %v540
      %2100 = vmatpush.msra.mxu0 %v532
      %2101 = vmatpush.msra.mxu0 %v524
      %2102 = vmatpush.msra.mxu0 %v516
      %2103 = vmatpush.msra.mxu0 %v508
      %2104 = vmatpush.msra.mxu0 %v500
      %2105 = vmatpush.msra.mxu0 %v492
      %2106 = vmatpush.msra.mxu0 %v484
      %2107 = vmatmul.f32.gmra.mxu0 %v1259
      %v2108 = vpop.f32.mrf.mxu0
      %v2109 = vadd.f32 %v2083, %v2108
      %2110 = vmatmul.f32.gmra.mxu0 %v1268
      %v2111 = vpop.f32.mrf.mxu0
      %v2112 = vadd.f32 %v2086, %v2111
      %2113 = vmatmul.f32.gmra.mxu0 %v1277
      %v2114 = vpop.f32.mrf.mxu0
      %v2115 = vadd.f32 %v2089, %v2114
      %2116 = vdwg.mxu0
      %2117 = vmatpush.msra.mxu0 %v732
      %2118 = vmatpush.msra.mxu0 %v724
      %2119 = vmatpush.msra.mxu0 %v716
      %2120 = vmatpush.msra.mxu0 %v708
      %2121 = vmatpush.msra.mxu0 %v700
      %2122 = vmatpush.msra.mxu0 %v692
      %2123 = vmatpush.msra.mxu0 %v684
      %2124 = vmatpush.msra.mxu0 %v676
      %2125 = vmatpush.msra.mxu0 %v668
      %2126 = vmatpush.msra.mxu0 %v660
      %2127 = vmatpush.msra.mxu0 %v652
      %2128 = vmatpush.msra.mxu0 %v644
      %2129 = vmatpush.msra.mxu0 %v636
      %2130 = vmatpush.msra.mxu0 %v628
      %2131 = vmatpush.msra.mxu0 %v620
      %2132 = vmatpush.msra.mxu0 %v612
      %2133 = vmatmul.f32.gmra.mxu0 %v1260
      %v2134 = vpop.f32.mrf.mxu0
      %v2135 = vadd.f32 %v2109, %v2134
      %2136 = vmatmul.f32.gmra.mxu0 %v1269
      %v2137 = vpop.f32.mrf.mxu0
      %v2138 = vadd.f32 %v2112, %v2137
      %2139 = vmatmul.f32.gmra.mxu0 %v1278
      %v2140 = vpop.f32.mrf.mxu0
      %v2141 = vadd.f32 %v2115, %v2140
      %2142 = vdwg.mxu0
      %2143 = vmatpush.msra.mxu0 %v860
      %2144 = vmatpush.msra.mxu0 %v852
      %2145 = vmatpush.msra.mxu0 %v844
      %2146 = vmatpush.msra.mxu0 %v836
      %2147 = vmatpush.msra.mxu0 %v828
      %2148 = vmatpush.msra.mxu0 %v820
      %2149 = vmatpush.msra.mxu0 %v812
      %2150 = vmatpush.msra.mxu0 %v804
      %2151 = vmatpush.msra.mxu0 %v796
      %2152 = vmatpush.msra.mxu0 %v788
      %2153 = vmatpush.msra.mxu0 %v780
      %2154 = vmatpush.msra.mxu0 %v772
      %2155 = vmatpush.msra.mxu0 %v764
      %2156 = vmatpush.msra.mxu0 %v756
      %2157 = vmatpush.msra.mxu0 %v748
      %2158 = vmatpush.msra.mxu0 %v740
      %2159 = vmatmul.f32.gmra.mxu0 %v1261
      %v2160 = vpop.f32.mrf.mxu0
      %v2161 = vadd.f32 %v2135, %v2160
      %2162 = vmatmul.f32.gmra.mxu0 %v1270
      %v2163 = vpop.f32.mrf.mxu0
      %v2164 = vadd.f32 %v2138, %v2163
      %2165 = vmatmul.f32.gmra.mxu0 %v1279
      %v2166 = vpop.f32.mrf.mxu0
      %v2167 = vadd.f32 %v2141, %v2166
      %2168 = vdwg.mxu0
      %2169 = vmatpush.msra.mxu0 %v988
      %2170 = vmatpush.msra.mxu0 %v980
      %2171 = vmatpush.msra.mxu0 %v972
      %2172 = vmatpush.msra.mxu0 %v964
      %2173 = vmatpush.msra.mxu0 %v956
      %2174 = vmatpush.msra.mxu0 %v948
      %2175 = vmatpush.msra.mxu0 %v940
      %2176 = vmatpush.msra.mxu0 %v932
      %2177 = vmatpush.msra.mxu0 %v924
      %2178 = vmatpush.msra.mxu0 %v916
      %2179 = vmatpush.msra.mxu0 %v908
      %2180 = vmatpush.msra.mxu0 %v900
      %2181 = vmatpush.msra.mxu0 %v892
      %2182 = vmatpush.msra.mxu0 %v884
      %2183 = vmatpush.msra.mxu0 %v876
      %2184 = vmatpush.msra.mxu0 %v868
      %2185 = vmatmul.f32.gmra.mxu0 %v1262
      %v2186 = vpop.f32.mrf.mxu0
      %v2187 = vadd.f32 %v2161, %v2186
      %2188 = vmatmul.f32.gmra.mxu0 %v1271
      %v2189 = vpop.f32.mrf.mxu0
      %v2190 = vadd.f32 %v2164, %v2189
      %2191 = vmatmul.f32.gmra.mxu0 %v1280
      %v2192 = vpop.f32.mrf.mxu0
      %v2193 = vadd.f32 %v2167, %v2192
      %2194 = vdwg.mxu0
      %2195 = vmatpush.msra.mxu0 %v1116
      %2196 = vmatpush.msra.mxu0 %v1108
      %2197 = vmatpush.msra.mxu0 %v1100
      %2198 = vmatpush.msra.mxu0 %v1092
      %2199 = vmatpush.msra.mxu0 %v1084
      %2200 = vmatpush.msra.mxu0 %v1076
      %2201 = vmatpush.msra.mxu0 %v1068
      %2202 = vmatpush.msra.mxu0 %v1060
      %2203 = vmatpush.msra.mxu0 %v1052
      %2204 = vmatpush.msra.mxu0 %v1044
      %2205 = vmatpush.msra.mxu0 %v1036
      %2206 = vmatpush.msra.mxu0 %v1028
      %2207 = vmatpush.msra.mxu0 %v1020
      %2208 = vmatpush.msra.mxu0 %v1012
      %2209 = vmatpush.msra.mxu0 %v1004
      %2210 = vmatpush.msra.mxu0 %v996
      %2211 = vmatmul.f32.gmra.mxu0 %v1263
      %v2212 = vpop.f32.mrf.mxu0
      %v2213 = vadd.f32 %v2187, %v2212
      %2214 = vmatmul.f32.gmra.mxu0 %v1272
      %v2215 = vpop.f32.mrf.mxu0
      %v2216 = vadd.f32 %v2190, %v2215
      %2217 = vmatmul.f32.gmra.mxu0 %v1281
      %v2218 = vpop.f32.mrf.mxu0
      %v2219 = vadd.f32 %v2193, %v2218
      %2220 = vdwg.mxu0
      %2221 = vmatpush.msra.mxu0 %v1244
      %2222 = vmatpush.msra.mxu0 %v1236
      %2223 = vmatpush.msra.mxu0 %v1228
      %2224 = vmatpush.msra.mxu0 %v1220
      %2225 = vmatpush.msra.mxu0 %v1212
      %2226 = vmatpush.msra.mxu0 %v1204
      %2227 = vmatpush.msra.mxu0 %v1196
      %2228 = vmatpush.msra.mxu0 %v1188
      %2229 = vmatpush.msra.mxu0 %v1180
      %2230 = vmatpush.msra.mxu0 %v1172
      %2231 = vmatpush.msra.mxu0 %v1164
      %2232 = vmatpush.msra.mxu0 %v1156
      %2233 = vmatpush.msra.mxu0 %v1148
      %2234 = vmatpush.msra.mxu0 %v1140
      %2235 = vmatpush.msra.mxu0 %v1132
      %2236 = vmatpush.msra.mxu0 %v1124
      %2237 = vmatmul.f32.gmra.mxu0 %v1264
      %v2238 = vpop.f32.mrf.mxu0
      %v2239 = vadd.f32 %v2213, %v2238
      %2240 = vmatmul.f32.gmra.mxu0 %v1273
      %v2241 = vpop.f32.mrf.mxu0
      %v2242 = vadd.f32 %v2216, %v2241
      %2243 = vmatmul.f32.gmra.mxu0 %v1282
      %v2244 = vpop.f32.mrf.mxu0
      %v2245 = vadd.f32 %v2219, %v2244
      %2246 = vdwg.mxu0
      %2247 = vmatpush.msra.mxu0 0.0
      %2248 = vmatpush.msra.mxu0 0.0
      %2249 = vmatpush.msra.mxu0 0.0
      %2250 = vmatpush.msra.mxu0 0.0
      %2251 = vmatpush.msra.mxu0 0.0
      %2252 = vmatpush.msra.mxu0 0.0
      %2253 = vmatpush.msra.mxu0 0.0
      %2254 = vmatpush.msra.mxu0 0.0
      %2255 = vmatpush.msra.mxu0 0.0
      %2256 = vmatpush.msra.mxu0 0.0
      %2257 = vmatpush.msra.mxu0 0.0
      %2258 = vmatpush.msra.mxu0 0.0
      %2259 = vmatpush.msra.mxu0 0.0
      %2260 = vmatpush.msra.mxu0 0.0
      %2261 = vmatpush.msra.mxu0 0.0
      %2262 = vmatpush.msra.mxu0 %v1323
      %2263 = vmatmul.f32.gmra.mxu0 %v1304
      %v2264 = vpop.f32.mrf.mxu0
      %v2265 = vadd.f32 %v2239, %v2264
      %2266 = vmatmul.f32.gmra.mxu0 %v1307
      %v2267 = vpop.f32.mrf.mxu0
      %v2268 = vadd.f32 %v2242, %v2267
      %2269 = vmatmul.f32.gmra.mxu0 %v1310
      %v2270 = vpop.f32.mrf.mxu0
      %v2271 = vadd.f32 %v2245, %v2270
      %2272 = vdwg.mxu0
      %2273 = vmatpush.msra.mxu0 %v349
      %2274 = vmatpush.msra.mxu0 %v341
      %2275 = vmatpush.msra.mxu0 %v333
      %2276 = vmatpush.msra.mxu0 %v325
      %2277 = vmatpush.msra.mxu0 %v317
      %2278 = vmatpush.msra.mxu0 %v309
      %2279 = vmatpush.msra.mxu0 %v301
      %2280 = vmatpush.msra.mxu0 %v293
      %2281 = vmatpush.msra.mxu0 %v285
      %2282 = vmatpush.msra.mxu0 %v277
      %2283 = vmatpush.msra.mxu0 %v269
      %2284 = vmatpush.msra.mxu0 %v261
      %2285 = vmatpush.msra.mxu0 %v253
      %2286 = vmatpush.msra.mxu0 %v245
      %2287 = vmatpush.msra.mxu0 %v237
      %2288 = vmatpush.msra.mxu0 %v229
      %2289 = vmatmul.f32.gmra.mxu0 %v1257
      %v2290 = vpop.f32.mrf.mxu0
      %v2291 = vadd.f32 %v1290, %v2290
      %2292 = vmatmul.f32.gmra.mxu0 %v1266
      %v2293 = vpop.f32.mrf.mxu0
      %v2294 = vadd.f32 %v1295, %v2293
      %2295 = vmatmul.f32.gmra.mxu0 %v1275
      %v2296 = vpop.f32.mrf.mxu0
      %v2297 = vadd.f32 %v1300, %v2296
      %2298 = vdwg.mxu0
      %2299 = vmatpush.msra.mxu0 %v477
      %2300 = vmatpush.msra.mxu0 %v469
      %2301 = vmatpush.msra.mxu0 %v461
      %2302 = vmatpush.msra.mxu0 %v453
      %2303 = vmatpush.msra.mxu0 %v445
      %2304 = vmatpush.msra.mxu0 %v437
      %2305 = vmatpush.msra.mxu0 %v429
      %2306 = vmatpush.msra.mxu0 %v421
      %2307 = vmatpush.msra.mxu0 %v413
      %2308 = vmatpush.msra.mxu0 %v405
      %2309 = vmatpush.msra.mxu0 %v397
      %2310 = vmatpush.msra.mxu0 %v389
      %2311 = vmatpush.msra.mxu0 %v381
      %2312 = vmatpush.msra.mxu0 %v373
      %2313 = vmatpush.msra.mxu0 %v365
      %2314 = vmatpush.msra.mxu0 %v357
      %2315 = vmatmul.f32.gmra.mxu0 %v1258
      %v2316 = vpop.f32.mrf.mxu0
      %v2317 = vadd.f32 %v2291, %v2316
      %2318 = vmatmul.f32.gmra.mxu0 %v1267
      %v2319 = vpop.f32.mrf.mxu0
      %v2320 = vadd.f32 %v2294, %v2319
      %2321 = vmatmul.f32.gmra.mxu0 %v1276
      %v2322 = vpop.f32.mrf.mxu0
      %v2323 = vadd.f32 %v2297, %v2322
      %2324 = vdwg.mxu0
      %2325 = vmatpush.msra.mxu0 %v605
      %2326 = vmatpush.msra.mxu0 %v597
      %2327 = vmatpush.msra.mxu0 %v589
      %2328 = vmatpush.msra.mxu0 %v581
      %2329 = vmatpush.msra.mxu0 %v573
      %2330 = vmatpush.msra.mxu0 %v565
      %2331 = vmatpush.msra.mxu0 %v557
      %2332 = vmatpush.msra.mxu0 %v549
      %2333 = vmatpush.msra.mxu0 %v541
      %2334 = vmatpush.msra.mxu0 %v533
      %2335 = vmatpush.msra.mxu0 %v525
      %2336 = vmatpush.msra.mxu0 %v517
      %2337 = vmatpush.msra.mxu0 %v509
      %2338 = vmatpush.msra.mxu0 %v501
      %2339 = vmatpush.msra.mxu0 %v493
      %2340 = vmatpush.msra.mxu0 %v485
      %2341 = vmatmul.f32.gmra.mxu0 %v1259
      %v2342 = vpop.f32.mrf.mxu0
      %v2343 = vadd.f32 %v2317, %v2342
      %2344 = vmatmul.f32.gmra.mxu0 %v1268
      %v2345 = vpop.f32.mrf.mxu0
      %v2346 = vadd.f32 %v2320, %v2345
      %2347 = vmatmul.f32.gmra.mxu0 %v1277
      %v2348 = vpop.f32.mrf.mxu0
      %v2349 = vadd.f32 %v2323, %v2348
      %2350 = vdwg.mxu0
      %2351 = vmatpush.msra.mxu0 %v733
      %2352 = vmatpush.msra.mxu0 %v725
      %2353 = vmatpush.msra.mxu0 %v717
      %2354 = vmatpush.msra.mxu0 %v709
      %2355 = vmatpush.msra.mxu0 %v701
      %2356 = vmatpush.msra.mxu0 %v693
      %2357 = vmatpush.msra.mxu0 %v685
      %2358 = vmatpush.msra.mxu0 %v677
      %2359 = vmatpush.msra.mxu0 %v669
      %2360 = vmatpush.msra.mxu0 %v661
      %2361 = vmatpush.msra.mxu0 %v653
      %2362 = vmatpush.msra.mxu0 %v645
      %2363 = vmatpush.msra.mxu0 %v637
      %2364 = vmatpush.msra.mxu0 %v629
      %2365 = vmatpush.msra.mxu0 %v621
      %2366 = vmatpush.msra.mxu0 %v613
      %2367 = vmatmul.f32.gmra.mxu0 %v1260
      %v2368 = vpop.f32.mrf.mxu0
      %v2369 = vadd.f32 %v2343, %v2368
      %2370 = vmatmul.f32.gmra.mxu0 %v1269
      %v2371 = vpop.f32.mrf.mxu0
      %v2372 = vadd.f32 %v2346, %v2371
      %2373 = vmatmul.f32.gmra.mxu0 %v1278
      %v2374 = vpop.f32.mrf.mxu0
      %v2375 = vadd.f32 %v2349, %v2374
      %2376 = vdwg.mxu0
      %2377 = vmatpush.msra.mxu0 %v861
      %2378 = vmatpush.msra.mxu0 %v853
      %2379 = vmatpush.msra.mxu0 %v845
      %2380 = vmatpush.msra.mxu0 %v837
      %2381 = vmatpush.msra.mxu0 %v829
      %2382 = vmatpush.msra.mxu0 %v821
      %2383 = vmatpush.msra.mxu0 %v813
      %2384 = vmatpush.msra.mxu0 %v805
      %2385 = vmatpush.msra.mxu0 %v797
      %2386 = vmatpush.msra.mxu0 %v789
      %2387 = vmatpush.msra.mxu0 %v781
      %2388 = vmatpush.msra.mxu0 %v773
      %2389 = vmatpush.msra.mxu0 %v765
      %2390 = vmatpush.msra.mxu0 %v757
      %2391 = vmatpush.msra.mxu0 %v749
      %2392 = vmatpush.msra.mxu0 %v741
      %2393 = vmatmul.f32.gmra.mxu0 %v1261
      %v2394 = vpop.f32.mrf.mxu0
      %v2395 = vadd.f32 %v2369, %v2394
      %2396 = vmatmul.f32.gmra.mxu0 %v1270
      %v2397 = vpop.f32.mrf.mxu0
      %v2398 = vadd.f32 %v2372, %v2397
      %2399 = vmatmul.f32.gmra.mxu0 %v1279
      %v2400 = vpop.f32.mrf.mxu0
      %v2401 = vadd.f32 %v2375, %v2400
      %2402 = vdwg.mxu0
      %2403 = vmatpush.msra.mxu0 %v989
      %2404 = vmatpush.msra.mxu0 %v981
      %2405 = vmatpush.msra.mxu0 %v973
      %2406 = vmatpush.msra.mxu0 %v965
      %2407 = vmatpush.msra.mxu0 %v957
      %2408 = vmatpush.msra.mxu0 %v949
      %2409 = vmatpush.msra.mxu0 %v941
      %2410 = vmatpush.msra.mxu0 %v933
      %2411 = vmatpush.msra.mxu0 %v925
      %2412 = vmatpush.msra.mxu0 %v917
      %2413 = vmatpush.msra.mxu0 %v909
      %2414 = vmatpush.msra.mxu0 %v901
      %2415 = vmatpush.msra.mxu0 %v893
      %2416 = vmatpush.msra.mxu0 %v885
      %2417 = vmatpush.msra.mxu0 %v877
      %2418 = vmatpush.msra.mxu0 %v869
      %2419 = vmatmul.f32.gmra.mxu0 %v1262
      %v2420 = vpop.f32.mrf.mxu0
      %v2421 = vadd.f32 %v2395, %v2420
      %2422 = vmatmul.f32.gmra.mxu0 %v1271
      %v2423 = vpop.f32.mrf.mxu0
      %v2424 = vadd.f32 %v2398, %v2423
      %2425 = vmatmul.f32.gmra.mxu0 %v1280
      %v2426 = vpop.f32.mrf.mxu0
      %v2427 = vadd.f32 %v2401, %v2426
      %2428 = vdwg.mxu0
      %2429 = vmatpush.msra.mxu0 %v1117
      %2430 = vmatpush.msra.mxu0 %v1109
      %2431 = vmatpush.msra.mxu0 %v1101
      %2432 = vmatpush.msra.mxu0 %v1093
      %2433 = vmatpush.msra.mxu0 %v1085
      %2434 = vmatpush.msra.mxu0 %v1077
      %2435 = vmatpush.msra.mxu0 %v1069
      %2436 = vmatpush.msra.mxu0 %v1061
      %2437 = vmatpush.msra.mxu0 %v1053
      %2438 = vmatpush.msra.mxu0 %v1045
      %2439 = vmatpush.msra.mxu0 %v1037
      %2440 = vmatpush.msra.mxu0 %v1029
      %2441 = vmatpush.msra.mxu0 %v1021
      %2442 = vmatpush.msra.mxu0 %v1013
      %2443 = vmatpush.msra.mxu0 %v1005
      %2444 = vmatpush.msra.mxu0 %v997
      %2445 = vmatmul.f32.gmra.mxu0 %v1263
      %v2446 = vpop.f32.mrf.mxu0
      %v2447 = vadd.f32 %v2421, %v2446
      %2448 = vmatmul.f32.gmra.mxu0 %v1272
      %v2449 = vpop.f32.mrf.mxu0
      %v2450 = vadd.f32 %v2424, %v2449
      %2451 = vmatmul.f32.gmra.mxu0 %v1281
      %v2452 = vpop.f32.mrf.mxu0
      %v2453 = vadd.f32 %v2427, %v2452
      %2454 = vdwg.mxu0
      %2455 = vmatpush.msra.mxu0 %v1245
      %2456 = vmatpush.msra.mxu0 %v1237
      %2457 = vmatpush.msra.mxu0 %v1229
      %2458 = vmatpush.msra.mxu0 %v1221
      %2459 = vmatpush.msra.mxu0 %v1213
      %2460 = vmatpush.msra.mxu0 %v1205
      %2461 = vmatpush.msra.mxu0 %v1197
      %2462 = vmatpush.msra.mxu0 %v1189
      %2463 = vmatpush.msra.mxu0 %v1181
      %2464 = vmatpush.msra.mxu0 %v1173
      %2465 = vmatpush.msra.mxu0 %v1165
      %2466 = vmatpush.msra.mxu0 %v1157
      %2467 = vmatpush.msra.mxu0 %v1149
      %2468 = vmatpush.msra.mxu0 %v1141
      %2469 = vmatpush.msra.mxu0 %v1133
      %2470 = vmatpush.msra.mxu0 %v1125
      %2471 = vmatmul.f32.gmra.mxu0 %v1264
      %v2472 = vpop.f32.mrf.mxu0
      %v2473 = vadd.f32 %v2447, %v2472
      %2474 = vmatmul.f32.gmra.mxu0 %v1273
      %v2475 = vpop.f32.mrf.mxu0
      %v2476 = vadd.f32 %v2450, %v2475
      %2477 = vmatmul.f32.gmra.mxu0 %v1282
      %v2478 = vpop.f32.mrf.mxu0
      %v2479 = vadd.f32 %v2453, %v2478
      %2480 = vdwg.mxu0
      %2481 = vmatpush.msra.mxu0 0.0
      %2482 = vmatpush.msra.mxu0 0.0
      %2483 = vmatpush.msra.mxu0 0.0
      %2484 = vmatpush.msra.mxu0 0.0
      %2485 = vmatpush.msra.mxu0 0.0
      %2486 = vmatpush.msra.mxu0 0.0
      %2487 = vmatpush.msra.mxu0 0.0
      %2488 = vmatpush.msra.mxu0 0.0
      %2489 = vmatpush.msra.mxu0 0.0
      %2490 = vmatpush.msra.mxu0 0.0
      %2491 = vmatpush.msra.mxu0 0.0
      %2492 = vmatpush.msra.mxu0 0.0
      %2493 = vmatpush.msra.mxu0 0.0
      %2494 = vmatpush.msra.mxu0 0.0
      %2495 = vmatpush.msra.mxu0 0.0
      %2496 = vmatpush.msra.mxu0 %v1326
      %2497 = vmatmul.f32.gmra.mxu0 %v1304
      %v2498 = vpop.f32.mrf.mxu0
      %v2499 = vadd.f32 %v2473, %v2498
      %2500 = vmatmul.f32.gmra.mxu0 %v1307
      %v2501 = vpop.f32.mrf.mxu0
      %v2502 = vadd.f32 %v2476, %v2501
      %2503 = vmatmul.f32.gmra.mxu0 %v1310
      %v2504 = vpop.f32.mrf.mxu0
      %v2505 = vadd.f32 %v2479, %v2504
      %2506 = vdwg.mxu0
      %2507 = vmatpush.msra.mxu0 %v350
      %2508 = vmatpush.msra.mxu0 %v342
      %2509 = vmatpush.msra.mxu0 %v334
      %2510 = vmatpush.msra.mxu0 %v326
      %2511 = vmatpush.msra.mxu0 %v318
      %2512 = vmatpush.msra.mxu0 %v310
      %2513 = vmatpush.msra.mxu0 %v302
      %2514 = vmatpush.msra.mxu0 %v294
      %2515 = vmatpush.msra.mxu0 %v286
      %2516 = vmatpush.msra.mxu0 %v278
      %2517 = vmatpush.msra.mxu0 %v270
      %2518 = vmatpush.msra.mxu0 %v262
      %2519 = vmatpush.msra.mxu0 %v254
      %2520 = vmatpush.msra.mxu0 %v246
      %2521 = vmatpush.msra.mxu0 %v238
      %2522 = vmatpush.msra.mxu0 %v230
      %2523 = vmatmul.f32.gmra.mxu0 %v1257
      %v2524 = vpop.f32.mrf.mxu0
      %v2525 = vadd.f32 %v1290, %v2524
      %2526 = vmatmul.f32.gmra.mxu0 %v1266
      %v2527 = vpop.f32.mrf.mxu0
      %v2528 = vadd.f32 %v1295, %v2527
      %2529 = vmatmul.f32.gmra.mxu0 %v1275
      %v2530 = vpop.f32.mrf.mxu0
      %v2531 = vadd.f32 %v1300, %v2530
      %2532 = vdwg.mxu0
      %2533 = vmatpush.msra.mxu0 %v478
      %2534 = vmatpush.msra.mxu0 %v470
      %2535 = vmatpush.msra.mxu0 %v462
      %2536 = vmatpush.msra.mxu0 %v454
      %2537 = vmatpush.msra.mxu0 %v446
      %2538 = vmatpush.msra.mxu0 %v438
      %2539 = vmatpush.msra.mxu0 %v430
      %2540 = vmatpush.msra.mxu0 %v422
      %2541 = vmatpush.msra.mxu0 %v414
      %2542 = vmatpush.msra.mxu0 %v406
      %2543 = vmatpush.msra.mxu0 %v398
      %2544 = vmatpush.msra.mxu0 %v390
      %2545 = vmatpush.msra.mxu0 %v382
      %2546 = vmatpush.msra.mxu0 %v374
      %2547 = vmatpush.msra.mxu0 %v366
      %2548 = vmatpush.msra.mxu0 %v358
      %2549 = vmatmul.f32.gmra.mxu0 %v1258
      %v2550 = vpop.f32.mrf.mxu0
      %v2551 = vadd.f32 %v2525, %v2550
      %2552 = vmatmul.f32.gmra.mxu0 %v1267
      %v2553 = vpop.f32.mrf.mxu0
      %v2554 = vadd.f32 %v2528, %v2553
      %2555 = vmatmul.f32.gmra.mxu0 %v1276
      %v2556 = vpop.f32.mrf.mxu0
      %v2557 = vadd.f32 %v2531, %v2556
      %2558 = vdwg.mxu0
      %2559 = vmatpush.msra.mxu0 %v606
      %2560 = vmatpush.msra.mxu0 %v598
      %2561 = vmatpush.msra.mxu0 %v590
      %2562 = vmatpush.msra.mxu0 %v582
      %2563 = vmatpush.msra.mxu0 %v574
      %2564 = vmatpush.msra.mxu0 %v566
      %2565 = vmatpush.msra.mxu0 %v558
      %2566 = vmatpush.msra.mxu0 %v550
      %2567 = vmatpush.msra.mxu0 %v542
      %2568 = vmatpush.msra.mxu0 %v534
      %2569 = vmatpush.msra.mxu0 %v526
      %2570 = vmatpush.msra.mxu0 %v518
      %2571 = vmatpush.msra.mxu0 %v510
      %2572 = vmatpush.msra.mxu0 %v502
      %2573 = vmatpush.msra.mxu0 %v494
      %2574 = vmatpush.msra.mxu0 %v486
      %2575 = vmatmul.f32.gmra.mxu0 %v1259
      %v2576 = vpop.f32.mrf.mxu0
      %v2577 = vadd.f32 %v2551, %v2576
      %2578 = vmatmul.f32.gmra.mxu0 %v1268
      %v2579 = vpop.f32.mrf.mxu0
      %v2580 = vadd.f32 %v2554, %v2579
      %2581 = vmatmul.f32.gmra.mxu0 %v1277
      %v2582 = vpop.f32.mrf.mxu0
      %v2583 = vadd.f32 %v2557, %v2582
      %2584 = vdwg.mxu0
      %2585 = vmatpush.msra.mxu0 %v734
      %2586 = vmatpush.msra.mxu0 %v726
      %2587 = vmatpush.msra.mxu0 %v718
      %2588 = vmatpush.msra.mxu0 %v710
      %2589 = vmatpush.msra.mxu0 %v702
      %2590 = vmatpush.msra.mxu0 %v694
      %2591 = vmatpush.msra.mxu0 %v686
      %2592 = vmatpush.msra.mxu0 %v678
      %2593 = vmatpush.msra.mxu0 %v670
      %2594 = vmatpush.msra.mxu0 %v662
      %2595 = vmatpush.msra.mxu0 %v654
      %2596 = vmatpush.msra.mxu0 %v646
      %2597 = vmatpush.msra.mxu0 %v638
      %2598 = vmatpush.msra.mxu0 %v630
      %2599 = vmatpush.msra.mxu0 %v622
      %2600 = vmatpush.msra.mxu0 %v614
      %2601 = vmatmul.f32.gmra.mxu0 %v1260
      %v2602 = vpop.f32.mrf.mxu0
      %v2603 = vadd.f32 %v2577, %v2602
      %2604 = vmatmul.f32.gmra.mxu0 %v1269
      %v2605 = vpop.f32.mrf.mxu0
      %v2606 = vadd.f32 %v2580, %v2605
      %2607 = vmatmul.f32.gmra.mxu0 %v1278
      %v2608 = vpop.f32.mrf.mxu0
      %v2609 = vadd.f32 %v2583, %v2608
      %2610 = vdwg.mxu0
      %2611 = vmatpush.msra.mxu0 %v862
      %2612 = vmatpush.msra.mxu0 %v854
      %2613 = vmatpush.msra.mxu0 %v846
      %2614 = vmatpush.msra.mxu0 %v838
      %2615 = vmatpush.msra.mxu0 %v830
      %2616 = vmatpush.msra.mxu0 %v822
      %2617 = vmatpush.msra.mxu0 %v814
      %2618 = vmatpush.msra.mxu0 %v806
      %2619 = vmatpush.msra.mxu0 %v798
      %2620 = vmatpush.msra.mxu0 %v790
      %2621 = vmatpush.msra.mxu0 %v782
      %2622 = vmatpush.msra.mxu0 %v774
      %2623 = vmatpush.msra.mxu0 %v766
      %2624 = vmatpush.msra.mxu0 %v758
      %2625 = vmatpush.msra.mxu0 %v750
      %2626 = vmatpush.msra.mxu0 %v742
      %2627 = vmatmul.f32.gmra.mxu0 %v1261
      %v2628 = vpop.f32.mrf.mxu0
      %v2629 = vadd.f32 %v2603, %v2628
      %2630 = vmatmul.f32.gmra.mxu0 %v1270
      %v2631 = vpop.f32.mrf.mxu0
      %v2632 = vadd.f32 %v2606, %v2631
      %2633 = vmatmul.f32.gmra.mxu0 %v1279
      %v2634 = vpop.f32.mrf.mxu0
      %v2635 = vadd.f32 %v2609, %v2634
      %2636 = vdwg.mxu0
      %2637 = vmatpush.msra.mxu0 %v990
      %2638 = vmatpush.msra.mxu0 %v982
      %2639 = vmatpush.msra.mxu0 %v974
      %2640 = vmatpush.msra.mxu0 %v966
      %2641 = vmatpush.msra.mxu0 %v958
      %2642 = vmatpush.msra.mxu0 %v950
      %2643 = vmatpush.msra.mxu0 %v942
      %2644 = vmatpush.msra.mxu0 %v934
      %2645 = vmatpush.msra.mxu0 %v926
      %2646 = vmatpush.msra.mxu0 %v918
      %2647 = vmatpush.msra.mxu0 %v910
      %2648 = vmatpush.msra.mxu0 %v902
      %2649 = vmatpush.msra.mxu0 %v894
      %2650 = vmatpush.msra.mxu0 %v886
      %2651 = vmatpush.msra.mxu0 %v878
      %2652 = vmatpush.msra.mxu0 %v870
      %2653 = vmatmul.f32.gmra.mxu0 %v1262
      %v2654 = vpop.f32.mrf.mxu0
      %v2655 = vadd.f32 %v2629, %v2654
      %2656 = vmatmul.f32.gmra.mxu0 %v1271
      %v2657 = vpop.f32.mrf.mxu0
      %v2658 = vadd.f32 %v2632, %v2657
      %2659 = vmatmul.f32.gmra.mxu0 %v1280
      %v2660 = vpop.f32.mrf.mxu0
      %v2661 = vadd.f32 %v2635, %v2660
      %2662 = vdwg.mxu0
      %2663 = vmatpush.msra.mxu0 %v1118
      %2664 = vmatpush.msra.mxu0 %v1110
      %2665 = vmatpush.msra.mxu0 %v1102
      %2666 = vmatpush.msra.mxu0 %v1094
      %2667 = vmatpush.msra.mxu0 %v1086
      %2668 = vmatpush.msra.mxu0 %v1078
      %2669 = vmatpush.msra.mxu0 %v1070
      %2670 = vmatpush.msra.mxu0 %v1062
      %2671 = vmatpush.msra.mxu0 %v1054
      %2672 = vmatpush.msra.mxu0 %v1046
      %2673 = vmatpush.msra.mxu0 %v1038
      %2674 = vmatpush.msra.mxu0 %v1030
      %2675 = vmatpush.msra.mxu0 %v1022
      %2676 = vmatpush.msra.mxu0 %v1014
      %2677 = vmatpush.msra.mxu0 %v1006
      %2678 = vmatpush.msra.mxu0 %v998
      %2679 = vmatmul.f32.gmra.mxu0 %v1263
      %v2680 = vpop.f32.mrf.mxu0
      %v2681 = vadd.f32 %v2655, %v2680
      %2682 = vmatmul.f32.gmra.mxu0 %v1272
      %v2683 = vpop.f32.mrf.mxu0
      %v2684 = vadd.f32 %v2658, %v2683
      %2685 = vmatmul.f32.gmra.mxu0 %v1281
      %v2686 = vpop.f32.mrf.mxu0
      %v2687 = vadd.f32 %v2661, %v2686
      %2688 = vdwg.mxu0
      %2689 = vmatpush.msra.mxu0 %v1246
      %2690 = vmatpush.msra.mxu0 %v1238
      %2691 = vmatpush.msra.mxu0 %v1230
      %2692 = vmatpush.msra.mxu0 %v1222
      %2693 = vmatpush.msra.mxu0 %v1214
      %2694 = vmatpush.msra.mxu0 %v1206
      %2695 = vmatpush.msra.mxu0 %v1198
      %2696 = vmatpush.msra.mxu0 %v1190
      %2697 = vmatpush.msra.mxu0 %v1182
      %2698 = vmatpush.msra.mxu0 %v1174
      %2699 = vmatpush.msra.mxu0 %v1166
      %2700 = vmatpush.msra.mxu0 %v1158
      %2701 = vmatpush.msra.mxu0 %v1150
      %2702 = vmatpush.msra.mxu0 %v1142
      %2703 = vmatpush.msra.mxu0 %v1134
      %2704 = vmatpush.msra.mxu0 %v1126
      %2705 = vmatmul.f32.gmra.mxu0 %v1264
      %v2706 = vpop.f32.mrf.mxu0
      %v2707 = vadd.f32 %v2681, %v2706
      %2708 = vmatmul.f32.gmra.mxu0 %v1273
      %v2709 = vpop.f32.mrf.mxu0
      %v2710 = vadd.f32 %v2684, %v2709
      %2711 = vmatmul.f32.gmra.mxu0 %v1282
      %v2712 = vpop.f32.mrf.mxu0
      %v2713 = vadd.f32 %v2687, %v2712
      %2714 = vdwg.mxu0
      %2715 = vmatpush.msra.mxu0 0.0
      %2716 = vmatpush.msra.mxu0 0.0
      %2717 = vmatpush.msra.mxu0 0.0
      %2718 = vmatpush.msra.mxu0 0.0
      %2719 = vmatpush.msra.mxu0 0.0
      %2720 = vmatpush.msra.mxu0 0.0
      %2721 = vmatpush.msra.mxu0 0.0
      %2722 = vmatpush.msra.mxu0 0.0
      %2723 = vmatpush.msra.mxu0 0.0
      %2724 = vmatpush.msra.mxu0 0.0
      %2725 = vmatpush.msra.mxu0 0.0
      %2726 = vmatpush.msra.mxu0 0.0
      %2727 = vmatpush.msra.mxu0 0.0
      %2728 = vmatpush.msra.mxu0 0.0
      %2729 = vmatpush.msra.mxu0 0.0
      %2730 = vmatpush.msra.mxu0 %v1329
      %2731 = vmatmul.f32.gmra.mxu0 %v1304
      %v2732 = vpop.f32.mrf.mxu0
      %v2733 = vadd.f32 %v2707, %v2732
      %2734 = vmatmul.f32.gmra.mxu0 %v1307
      %v2735 = vpop.f32.mrf.mxu0
      %v2736 = vadd.f32 %v2710, %v2735
      %2737 = vmatmul.f32.gmra.mxu0 %v1310
      %v2738 = vpop.f32.mrf.mxu0
      %v2739 = vadd.f32 %v2713, %v2738
      %2740 = vdwg.mxu0
      %2741 = vmatpush.msra.mxu0 %v351
      %2742 = vmatpush.msra.mxu0 %v343
      %2743 = vmatpush.msra.mxu0 %v335
      %2744 = vmatpush.msra.mxu0 %v327
      %2745 = vmatpush.msra.mxu0 %v319
      %2746 = vmatpush.msra.mxu0 %v311
      %2747 = vmatpush.msra.mxu0 %v303
      %2748 = vmatpush.msra.mxu0 %v295
      %2749 = vmatpush.msra.mxu0 %v287
      %2750 = vmatpush.msra.mxu0 %v279
      %2751 = vmatpush.msra.mxu0 %v271
      %2752 = vmatpush.msra.mxu0 %v263
      %2753 = vmatpush.msra.mxu0 %v255
      %2754 = vmatpush.msra.mxu0 %v247
      %2755 = vmatpush.msra.mxu0 %v239
      %2756 = vmatpush.msra.mxu0 %v231
      %2757 = vmatmul.f32.gmra.mxu0 %v1257
      %v2758 = vpop.f32.mrf.mxu0
      %v2759 = vadd.f32 %v1290, %v2758
      %2760 = vmatmul.f32.gmra.mxu0 %v1266
      %v2761 = vpop.f32.mrf.mxu0
      %v2762 = vadd.f32 %v1295, %v2761
      %2763 = vmatmul.f32.gmra.mxu0 %v1275
      %v2764 = vpop.f32.mrf.mxu0
      %v2765 = vadd.f32 %v1300, %v2764
      %2766 = vdwg.mxu0
      %2767 = vmatpush.msra.mxu0 %v479
      %2768 = vmatpush.msra.mxu0 %v471
      %2769 = vmatpush.msra.mxu0 %v463
      %2770 = vmatpush.msra.mxu0 %v455
      %2771 = vmatpush.msra.mxu0 %v447
      %2772 = vmatpush.msra.mxu0 %v439
      %2773 = vmatpush.msra.mxu0 %v431
      %2774 = vmatpush.msra.mxu0 %v423
      %2775 = vmatpush.msra.mxu0 %v415
      %2776 = vmatpush.msra.mxu0 %v407
      %2777 = vmatpush.msra.mxu0 %v399
      %2778 = vmatpush.msra.mxu0 %v391
      %2779 = vmatpush.msra.mxu0 %v383
      %2780 = vmatpush.msra.mxu0 %v375
      %2781 = vmatpush.msra.mxu0 %v367
      %2782 = vmatpush.msra.mxu0 %v359
      %2783 = vmatmul.f32.gmra.mxu0 %v1258
      %v2784 = vpop.f32.mrf.mxu0
      %v2785 = vadd.f32 %v2759, %v2784
      %2786 = vmatmul.f32.gmra.mxu0 %v1267
      %v2787 = vpop.f32.mrf.mxu0
      %v2788 = vadd.f32 %v2762, %v2787
      %2789 = vmatmul.f32.gmra.mxu0 %v1276
      %v2790 = vpop.f32.mrf.mxu0
      %v2791 = vadd.f32 %v2765, %v2790
      %2792 = vdwg.mxu0
      %2793 = vmatpush.msra.mxu0 %v607
      %2794 = vmatpush.msra.mxu0 %v599
      %2795 = vmatpush.msra.mxu0 %v591
      %2796 = vmatpush.msra.mxu0 %v583
      %2797 = vmatpush.msra.mxu0 %v575
      %2798 = vmatpush.msra.mxu0 %v567
      %2799 = vmatpush.msra.mxu0 %v559
      %2800 = vmatpush.msra.mxu0 %v551
      %2801 = vmatpush.msra.mxu0 %v543
      %2802 = vmatpush.msra.mxu0 %v535
      %2803 = vmatpush.msra.mxu0 %v527
      %2804 = vmatpush.msra.mxu0 %v519
      %2805 = vmatpush.msra.mxu0 %v511
      %2806 = vmatpush.msra.mxu0 %v503
      %2807 = vmatpush.msra.mxu0 %v495
      %2808 = vmatpush.msra.mxu0 %v487
      %2809 = vmatmul.f32.gmra.mxu0 %v1259
      %v2810 = vpop.f32.mrf.mxu0
      %v2811 = vadd.f32 %v2785, %v2810
      %2812 = vmatmul.f32.gmra.mxu0 %v1268
      %v2813 = vpop.f32.mrf.mxu0
      %v2814 = vadd.f32 %v2788, %v2813
      %2815 = vmatmul.f32.gmra.mxu0 %v1277
      %v2816 = vpop.f32.mrf.mxu0
      %v2817 = vadd.f32 %v2791, %v2816
      %2818 = vdwg.mxu0
      %2819 = vmatpush.msra.mxu0 %v735
      %2820 = vmatpush.msra.mxu0 %v727
      %2821 = vmatpush.msra.mxu0 %v719
      %2822 = vmatpush.msra.mxu0 %v711
      %2823 = vmatpush.msra.mxu0 %v703
      %2824 = vmatpush.msra.mxu0 %v695
      %2825 = vmatpush.msra.mxu0 %v687
      %2826 = vmatpush.msra.mxu0 %v679
      %2827 = vmatpush.msra.mxu0 %v671
      %2828 = vmatpush.msra.mxu0 %v663
      %2829 = vmatpush.msra.mxu0 %v655
      %2830 = vmatpush.msra.mxu0 %v647
      %2831 = vmatpush.msra.mxu0 %v639
      %2832 = vmatpush.msra.mxu0 %v631
      %2833 = vmatpush.msra.mxu0 %v623
      %2834 = vmatpush.msra.mxu0 %v615
      %2835 = vmatmul.f32.gmra.mxu0 %v1260
      %v2836 = vpop.f32.mrf.mxu0
      %v2837 = vadd.f32 %v2811, %v2836
      %2838 = vmatmul.f32.gmra.mxu0 %v1269
      %v2839 = vpop.f32.mrf.mxu0
      %v2840 = vadd.f32 %v2814, %v2839
      %2841 = vmatmul.f32.gmra.mxu0 %v1278
      %v2842 = vpop.f32.mrf.mxu0
      %v2843 = vadd.f32 %v2817, %v2842
      %2844 = vdwg.mxu0
      %2845 = vmatpush.msra.mxu0 %v863
      %2846 = vmatpush.msra.mxu0 %v855
      %2847 = vmatpush.msra.mxu0 %v847
      %2848 = vmatpush.msra.mxu0 %v839
      %2849 = vmatpush.msra.mxu0 %v831
      %2850 = vmatpush.msra.mxu0 %v823
      %2851 = vmatpush.msra.mxu0 %v815
      %2852 = vmatpush.msra.mxu0 %v807
      %2853 = vmatpush.msra.mxu0 %v799
      %2854 = vmatpush.msra.mxu0 %v791
      %2855 = vmatpush.msra.mxu0 %v783
      %2856 = vmatpush.msra.mxu0 %v775
      %2857 = vmatpush.msra.mxu0 %v767
      %2858 = vmatpush.msra.mxu0 %v759
      %2859 = vmatpush.msra.mxu0 %v751
      %2860 = vmatpush.msra.mxu0 %v743
      %2861 = vmatmul.f32.gmra.mxu0 %v1261
      %v2862 = vpop.f32.mrf.mxu0
      %v2863 = vadd.f32 %v2837, %v2862
      %2864 = vmatmul.f32.gmra.mxu0 %v1270
      %v2865 = vpop.f32.mrf.mxu0
      %v2866 = vadd.f32 %v2840, %v2865
      %2867 = vmatmul.f32.gmra.mxu0 %v1279
      %v2868 = vpop.f32.mrf.mxu0
      %v2869 = vadd.f32 %v2843, %v2868
      %2870 = vdwg.mxu0
      %2871 = vmatpush.msra.mxu0 %v991
      %2872 = vmatpush.msra.mxu0 %v983
      %2873 = vmatpush.msra.mxu0 %v975
      %2874 = vmatpush.msra.mxu0 %v967
      %2875 = vmatpush.msra.mxu0 %v959
      %2876 = vmatpush.msra.mxu0 %v951
      %2877 = vmatpush.msra.mxu0 %v943
      %2878 = vmatpush.msra.mxu0 %v935
      %2879 = vmatpush.msra.mxu0 %v927
      %2880 = vmatpush.msra.mxu0 %v919
      %2881 = vmatpush.msra.mxu0 %v911
      %2882 = vmatpush.msra.mxu0 %v903
      %2883 = vmatpush.msra.mxu0 %v895
      %2884 = vmatpush.msra.mxu0 %v887
      %2885 = vmatpush.msra.mxu0 %v879
      %2886 = vmatpush.msra.mxu0 %v871
      %2887 = vmatmul.f32.gmra.mxu0 %v1262
      %v2888 = vpop.f32.mrf.mxu0
      %v2889 = vadd.f32 %v2863, %v2888
      %2890 = vmatmul.f32.gmra.mxu0 %v1271
      %v2891 = vpop.f32.mrf.mxu0
      %v2892 = vadd.f32 %v2866, %v2891
      %2893 = vmatmul.f32.gmra.mxu0 %v1280
      %v2894 = vpop.f32.mrf.mxu0
      %v2895 = vadd.f32 %v2869, %v2894
      %2896 = vdwg.mxu0
      %2897 = vmatpush.msra.mxu0 %v1119
      %2898 = vmatpush.msra.mxu0 %v1111
      %2899 = vmatpush.msra.mxu0 %v1103
      %2900 = vmatpush.msra.mxu0 %v1095
      %2901 = vmatpush.msra.mxu0 %v1087
      %2902 = vmatpush.msra.mxu0 %v1079
      %2903 = vmatpush.msra.mxu0 %v1071
      %2904 = vmatpush.msra.mxu0 %v1063
      %2905 = vmatpush.msra.mxu0 %v1055
      %2906 = vmatpush.msra.mxu0 %v1047
      %2907 = vmatpush.msra.mxu0 %v1039
      %2908 = vmatpush.msra.mxu0 %v1031
      %2909 = vmatpush.msra.mxu0 %v1023
      %2910 = vmatpush.msra.mxu0 %v1015
      %2911 = vmatpush.msra.mxu0 %v1007
      %2912 = vmatpush.msra.mxu0 %v999
      %2913 = vmatmul.f32.gmra.mxu0 %v1263
      %v2914 = vpop.f32.mrf.mxu0
      %v2915 = vadd.f32 %v2889, %v2914
      %2916 = vmatmul.f32.gmra.mxu0 %v1272
      %v2917 = vpop.f32.mrf.mxu0
      %v2918 = vadd.f32 %v2892, %v2917
      %2919 = vmatmul.f32.gmra.mxu0 %v1281
      %v2920 = vpop.f32.mrf.mxu0
      %v2921 = vadd.f32 %v2895, %v2920
      %2922 = vdwg.mxu0
      %2923 = vmatpush.msra.mxu0 %v1247
      %2924 = vmatpush.msra.mxu0 %v1239
      %2925 = vmatpush.msra.mxu0 %v1231
      %2926 = vmatpush.msra.mxu0 %v1223
      %2927 = vmatpush.msra.mxu0 %v1215
      %2928 = vmatpush.msra.mxu0 %v1207
      %2929 = vmatpush.msra.mxu0 %v1199
      %2930 = vmatpush.msra.mxu0 %v1191
      %2931 = vmatpush.msra.mxu0 %v1183
      %2932 = vmatpush.msra.mxu0 %v1175
      %2933 = vmatpush.msra.mxu0 %v1167
      %2934 = vmatpush.msra.mxu0 %v1159
      %2935 = vmatpush.msra.mxu0 %v1151
      %2936 = vmatpush.msra.mxu0 %v1143
      %2937 = vmatpush.msra.mxu0 %v1135
      %2938 = vmatpush.msra.mxu0 %v1127
      %2939 = vmatmul.f32.gmra.mxu0 %v1264
      %v2940 = vpop.f32.mrf.mxu0
      %v2941 = vadd.f32 %v2915, %v2940
      %2942 = vmatmul.f32.gmra.mxu0 %v1273
      %v2943 = vpop.f32.mrf.mxu0
      %v2944 = vadd.f32 %v2918, %v2943
      %2945 = vmatmul.f32.gmra.mxu0 %v1282
      %v2946 = vpop.f32.mrf.mxu0
      %v2947 = vadd.f32 %v2921, %v2946
      %2948 = vdwg.mxu0
      %2949 = vmatpush.msra.mxu0 0.0
      %2950 = vmatpush.msra.mxu0 0.0
      %2951 = vmatpush.msra.mxu0 0.0
      %2952 = vmatpush.msra.mxu0 0.0
      %2953 = vmatpush.msra.mxu0 0.0
      %2954 = vmatpush.msra.mxu0 0.0
      %2955 = vmatpush.msra.mxu0 0.0
      %2956 = vmatpush.msra.mxu0 0.0
      %2957 = vmatpush.msra.mxu0 0.0
      %2958 = vmatpush.msra.mxu0 0.0
      %2959 = vmatpush.msra.mxu0 0.0
      %2960 = vmatpush.msra.mxu0 0.0
      %2961 = vmatpush.msra.mxu0 0.0
      %2962 = vmatpush.msra.mxu0 0.0
      %2963 = vmatpush.msra.mxu0 0.0
      %2964 = vmatpush.msra.mxu0 %v1332
      %2965 = vmatmul.f32.gmra.mxu0 %v1304
      %v2966 = vpop.f32.mrf.mxu0
      %v2967 = vadd.f32 %v2941, %v2966
      %2968 = vmatmul.f32.gmra.mxu0 %v1307
      %v2969 = vpop.f32.mrf.mxu0
      %v2970 = vadd.f32 %v2944, %v2969
      %2971 = vmatmul.f32.gmra.mxu0 %v1310
      %v2972 = vpop.f32.mrf.mxu0
      %v2973 = vadd.f32 %v2947, %v2972
      %2974 = vdwg.mxu0
      %2975 = vmatpush.msra.mxu0 %v352
      %2976 = vmatpush.msra.mxu0 %v344
      %2977 = vmatpush.msra.mxu0 %v336
      %2978 = vmatpush.msra.mxu0 %v328
      %2979 = vmatpush.msra.mxu0 %v320
      %2980 = vmatpush.msra.mxu0 %v312
      %2981 = vmatpush.msra.mxu0 %v304
      %2982 = vmatpush.msra.mxu0 %v296
      %2983 = vmatpush.msra.mxu0 %v288
      %2984 = vmatpush.msra.mxu0 %v280
      %2985 = vmatpush.msra.mxu0 %v272
      %2986 = vmatpush.msra.mxu0 %v264
      %2987 = vmatpush.msra.mxu0 %v256
      %2988 = vmatpush.msra.mxu0 %v248
      %2989 = vmatpush.msra.mxu0 %v240
      %2990 = vmatpush.msra.mxu0 %v232
      %2991 = vmatmul.f32.gmra.mxu0 %v1257
      %v2992 = vpop.f32.mrf.mxu0
      %v2993 = vadd.f32 %v1290, %v2992
      %2994 = vmatmul.f32.gmra.mxu0 %v1266
      %v2995 = vpop.f32.mrf.mxu0
      %v2996 = vadd.f32 %v1295, %v2995
      %2997 = vmatmul.f32.gmra.mxu0 %v1275
      %v2998 = vpop.f32.mrf.mxu0
      %v2999 = vadd.f32 %v1300, %v2998
      %3000 = vdwg.mxu0
      %3001 = vmatpush.msra.mxu0 %v480
      %3002 = vmatpush.msra.mxu0 %v472
      %3003 = vmatpush.msra.mxu0 %v464
      %3004 = vmatpush.msra.mxu0 %v456
      %3005 = vmatpush.msra.mxu0 %v448
      %3006 = vmatpush.msra.mxu0 %v440
      %3007 = vmatpush.msra.mxu0 %v432
      %3008 = vmatpush.msra.mxu0 %v424
      %3009 = vmatpush.msra.mxu0 %v416
      %3010 = vmatpush.msra.mxu0 %v408
      %3011 = vmatpush.msra.mxu0 %v400
      %3012 = vmatpush.msra.mxu0 %v392
      %3013 = vmatpush.msra.mxu0 %v384
      %3014 = vmatpush.msra.mxu0 %v376
      %3015 = vmatpush.msra.mxu0 %v368
      %3016 = vmatpush.msra.mxu0 %v360
      %3017 = vmatmul.f32.gmra.mxu0 %v1258
      %v3018 = vpop.f32.mrf.mxu0
      %v3019 = vadd.f32 %v2993, %v3018
      %3020 = vmatmul.f32.gmra.mxu0 %v1267
      %v3021 = vpop.f32.mrf.mxu0
      %v3022 = vadd.f32 %v2996, %v3021
      %3023 = vmatmul.f32.gmra.mxu0 %v1276
      %v3024 = vpop.f32.mrf.mxu0
      %v3025 = vadd.f32 %v2999, %v3024
      %3026 = vdwg.mxu0
      %3027 = vmatpush.msra.mxu0 %v608
      %3028 = vmatpush.msra.mxu0 %v600
      %3029 = vmatpush.msra.mxu0 %v592
      %3030 = vmatpush.msra.mxu0 %v584
      %3031 = vmatpush.msra.mxu0 %v576
      %3032 = vmatpush.msra.mxu0 %v568
      %3033 = vmatpush.msra.mxu0 %v560
      %3034 = vmatpush.msra.mxu0 %v552
      %3035 = vmatpush.msra.mxu0 %v544
      %3036 = vmatpush.msra.mxu0 %v536
      %3037 = vmatpush.msra.mxu0 %v528
      %3038 = vmatpush.msra.mxu0 %v520
      %3039 = vmatpush.msra.mxu0 %v512
      %3040 = vmatpush.msra.mxu0 %v504
      %3041 = vmatpush.msra.mxu0 %v496
      %3042 = vmatpush.msra.mxu0 %v488
      %3043 = vmatmul.f32.gmra.mxu0 %v1259
      %v3044 = vpop.f32.mrf.mxu0
      %v3045 = vadd.f32 %v3019, %v3044
      %3046 = vmatmul.f32.gmra.mxu0 %v1268
      %v3047 = vpop.f32.mrf.mxu0
      %v3048 = vadd.f32 %v3022, %v3047
      %3049 = vmatmul.f32.gmra.mxu0 %v1277
      %v3050 = vpop.f32.mrf.mxu0
      %v3051 = vadd.f32 %v3025, %v3050
      %3052 = vdwg.mxu0
      %3053 = vmatpush.msra.mxu0 %v736
      %3054 = vmatpush.msra.mxu0 %v728
      %3055 = vmatpush.msra.mxu0 %v720
      %3056 = vmatpush.msra.mxu0 %v712
      %3057 = vmatpush.msra.mxu0 %v704
      %3058 = vmatpush.msra.mxu0 %v696
      %3059 = vmatpush.msra.mxu0 %v688
      %3060 = vmatpush.msra.mxu0 %v680
      %3061 = vmatpush.msra.mxu0 %v672
      %3062 = vmatpush.msra.mxu0 %v664
      %3063 = vmatpush.msra.mxu0 %v656
      %3064 = vmatpush.msra.mxu0 %v648
      %3065 = vmatpush.msra.mxu0 %v640
      %3066 = vmatpush.msra.mxu0 %v632
      %3067 = vmatpush.msra.mxu0 %v624
      %3068 = vmatpush.msra.mxu0 %v616
      %3069 = vmatmul.f32.gmra.mxu0 %v1260
      %v3070 = vpop.f32.mrf.mxu0
      %v3071 = vadd.f32 %v3045, %v3070
      %3072 = vmatmul.f32.gmra.mxu0 %v1269
      %v3073 = vpop.f32.mrf.mxu0
      %v3074 = vadd.f32 %v3048, %v3073
      %3075 = vmatmul.f32.gmra.mxu0 %v1278
      %v3076 = vpop.f32.mrf.mxu0
      %v3077 = vadd.f32 %v3051, %v3076
      %3078 = vdwg.mxu0
      %3079 = vmatpush.msra.mxu0 %v864
      %3080 = vmatpush.msra.mxu0 %v856
      %3081 = vmatpush.msra.mxu0 %v848
      %3082 = vmatpush.msra.mxu0 %v840
      %3083 = vmatpush.msra.mxu0 %v832
      %3084 = vmatpush.msra.mxu0 %v824
      %3085 = vmatpush.msra.mxu0 %v816
      %3086 = vmatpush.msra.mxu0 %v808
      %3087 = vmatpush.msra.mxu0 %v800
      %3088 = vmatpush.msra.mxu0 %v792
      %3089 = vmatpush.msra.mxu0 %v784
      %3090 = vmatpush.msra.mxu0 %v776
      %3091 = vmatpush.msra.mxu0 %v768
      %3092 = vmatpush.msra.mxu0 %v760
      %3093 = vmatpush.msra.mxu0 %v752
      %3094 = vmatpush.msra.mxu0 %v744
      %3095 = vmatmul.f32.gmra.mxu0 %v1261
      %v3096 = vpop.f32.mrf.mxu0
      %v3097 = vadd.f32 %v3071, %v3096
      %3098 = vmatmul.f32.gmra.mxu0 %v1270
      %v3099 = vpop.f32.mrf.mxu0
      %v3100 = vadd.f32 %v3074, %v3099
      %3101 = vmatmul.f32.gmra.mxu0 %v1279
      %v3102 = vpop.f32.mrf.mxu0
      %v3103 = vadd.f32 %v3077, %v3102
      %3104 = vdwg.mxu0
      %3105 = vmatpush.msra.mxu0 %v992
      %3106 = vmatpush.msra.mxu0 %v984
      %3107 = vmatpush.msra.mxu0 %v976
      %3108 = vmatpush.msra.mxu0 %v968
      %3109 = vmatpush.msra.mxu0 %v960
      %3110 = vmatpush.msra.mxu0 %v952
      %3111 = vmatpush.msra.mxu0 %v944
      %3112 = vmatpush.msra.mxu0 %v936
      %3113 = vmatpush.msra.mxu0 %v928
      %3114 = vmatpush.msra.mxu0 %v920
      %3115 = vmatpush.msra.mxu0 %v912
      %3116 = vmatpush.msra.mxu0 %v904
      %3117 = vmatpush.msra.mxu0 %v896
      %3118 = vmatpush.msra.mxu0 %v888
      %3119 = vmatpush.msra.mxu0 %v880
      %3120 = vmatpush.msra.mxu0 %v872
      %3121 = vmatmul.f32.gmra.mxu0 %v1262
      %v3122 = vpop.f32.mrf.mxu0
      %v3123 = vadd.f32 %v3097, %v3122
      %3124 = vmatmul.f32.gmra.mxu0 %v1271
      %v3125 = vpop.f32.mrf.mxu0
      %v3126 = vadd.f32 %v3100, %v3125
      %3127 = vmatmul.f32.gmra.mxu0 %v1280
      %v3128 = vpop.f32.mrf.mxu0
      %v3129 = vadd.f32 %v3103, %v3128
      %3130 = vdwg.mxu0
      %3131 = vmatpush.msra.mxu0 %v1120
      %3132 = vmatpush.msra.mxu0 %v1112
      %3133 = vmatpush.msra.mxu0 %v1104
      %3134 = vmatpush.msra.mxu0 %v1096
      %3135 = vmatpush.msra.mxu0 %v1088
      %3136 = vmatpush.msra.mxu0 %v1080
      %3137 = vmatpush.msra.mxu0 %v1072
      %3138 = vmatpush.msra.mxu0 %v1064
      %3139 = vmatpush.msra.mxu0 %v1056
      %3140 = vmatpush.msra.mxu0 %v1048
      %3141 = vmatpush.msra.mxu0 %v1040
      %3142 = vmatpush.msra.mxu0 %v1032
      %3143 = vmatpush.msra.mxu0 %v1024
      %3144 = vmatpush.msra.mxu0 %v1016
      %3145 = vmatpush.msra.mxu0 %v1008
      %3146 = vmatpush.msra.mxu0 %v1000
      %3147 = vmatmul.f32.gmra.mxu0 %v1263
      %v3148 = vpop.f32.mrf.mxu0
      %v3149 = vadd.f32 %v3123, %v3148
      %3150 = vmatmul.f32.gmra.mxu0 %v1272
      %v3151 = vpop.f32.mrf.mxu0
      %v3152 = vadd.f32 %v3126, %v3151
      %3153 = vmatmul.f32.gmra.mxu0 %v1281
      %v3154 = vpop.f32.mrf.mxu0
      %v3155 = vadd.f32 %v3129, %v3154
      %3156 = vdwg.mxu0
      %3157 = vmatpush.msra.mxu0 %v1248
      %3158 = vmatpush.msra.mxu0 %v1240
      %3159 = vmatpush.msra.mxu0 %v1232
      %3160 = vmatpush.msra.mxu0 %v1224
      %3161 = vmatpush.msra.mxu0 %v1216
      %3162 = vmatpush.msra.mxu0 %v1208
      %3163 = vmatpush.msra.mxu0 %v1200
      %3164 = vmatpush.msra.mxu0 %v1192
      %3165 = vmatpush.msra.mxu0 %v1184
      %3166 = vmatpush.msra.mxu0 %v1176
      %3167 = vmatpush.msra.mxu0 %v1168
      %3168 = vmatpush.msra.mxu0 %v1160
      %3169 = vmatpush.msra.mxu0 %v1152
      %3170 = vmatpush.msra.mxu0 %v1144
      %3171 = vmatpush.msra.mxu0 %v1136
      %3172 = vmatpush.msra.mxu0 %v1128
      %3173 = vmatmul.f32.gmra.mxu0 %v1264
      %v3174 = vpop.f32.mrf.mxu0
      %v3175 = vadd.f32 %v3149, %v3174
      %3176 = vmatmul.f32.gmra.mxu0 %v1273
      %v3177 = vpop.f32.mrf.mxu0
      %v3178 = vadd.f32 %v3152, %v3177
      %3179 = vmatmul.f32.gmra.mxu0 %v1282
      %v3180 = vpop.f32.mrf.mxu0
      %v3181 = vadd.f32 %v3155, %v3180
      %3182 = vdwg.mxu0
      %3183 = vmatpush.msra.mxu0 0.0
      %3184 = vmatpush.msra.mxu0 0.0
      %3185 = vmatpush.msra.mxu0 0.0
      %3186 = vmatpush.msra.mxu0 0.0
      %3187 = vmatpush.msra.mxu0 0.0
      %3188 = vmatpush.msra.mxu0 0.0
      %3189 = vmatpush.msra.mxu0 0.0
      %3190 = vmatpush.msra.mxu0 0.0
      %3191 = vmatpush.msra.mxu0 0.0
      %3192 = vmatpush.msra.mxu0 0.0
      %3193 = vmatpush.msra.mxu0 0.0
      %3194 = vmatpush.msra.mxu0 0.0
      %3195 = vmatpush.msra.mxu0 0.0
      %3196 = vmatpush.msra.mxu0 0.0
      %3197 = vmatpush.msra.mxu0 0.0
      %3198 = vmatpush.msra.mxu0 %v1335
      %3199 = vmatmul.f32.gmra.mxu0 %v1304
      %v3200 = vpop.f32.mrf.mxu0
      %v3201 = vadd.f32 %v3175, %v3200
      %3202 = vmatmul.f32.gmra.mxu0 %v1307
      %v3203 = vpop.f32.mrf.mxu0
      %v3204 = vadd.f32 %v3178, %v3203
      %3205 = vmatmul.f32.gmra.mxu0 %v1310
      %v3206 = vpop.f32.mrf.mxu0
      %v3207 = vadd.f32 %v3181, %v3206
      %3208 = vdwg.mxu0
      %v3209 = vmax.f32 %v1563, 0.0
      %v3210 = vmax.f32 %v1797, 0.0
      %v3211 = vmax.f32 %v2031, 0.0
      %v3212 = vmax.f32 %v2265, 0.0
      %v3213 = vmax.f32 %v2499, 0.0
      %v3214 = vmax.f32 %v2733, 0.0
      %v3215 = vmax.f32 %v2967, 0.0
      %v3216 = vmax.f32 %v3201, 0.0
      %v3217 = vmax.f32 %v1566, 0.0
      %v3218 = vmax.f32 %v1800, 0.0
      %v3219 = vmax.f32 %v2034, 0.0
      %v3220 = vmax.f32 %v2268, 0.0
      %v3221 = vmax.f32 %v2502, 0.0
      %v3222 = vmax.f32 %v2736, 0.0
      %v3223 = vmax.f32 %v2970, 0.0
      %v3224 = vmax.f32 %v3204, 0.0
      %v3225 = vmax.f32 %v1569, 0.0
      %v3226 = vmax.f32 %v1803, 0.0
      %v3227 = vmax.f32 %v2037, 0.0
      %v3228 = vmax.f32 %v2271, 0.0
      %v3229 = vmax.f32 %v2505, 0.0
      %v3230 = vmax.f32 %v2739, 0.0
      %v3231 = vmax.f32 %v2973, 0.0
      %v3232 = vmax.f32 %v3207, 0.0
      %v3233 = vld [vmem:[%s3] sm:$0xff]
      %v3234 = vld [vmem:[%s3 + $0x8] sm:$0xff]
      %v3235 = vld [vmem:[%s4] sm:$0xff]
      %v3236 = vld [vmem:[%s4 + $0x8] sm:$0xff]
      %3238 = vset.pattern.permute.xlu0 0
      %3239 = vperm.xlu0 %3238, %v3235
      %v3240 = vpop.permute.xlu0 %3239
      %3243 = vset.pattern.permute.xlu0 0
      %3244 = vperm.xlu0 %3243, %v3236
      %v3245 = vpop.permute.xlu0 %3244
      %vm3247 = vcmask 162816
      %v3249 = vsel %vm3247, %v3233, 0
      %v3252 = vsel %vm3247, %v3234, 0
      %vm3254 = vcmask 1043456
      %v3256 = vsel %vm3254, %v3225, 0
      %v3259 = vsel %vm3254, %v3226, 0
      %v3262 = vsel %vm3254, %v3227, 0
      %v3265 = vsel %vm3254, %v3228, 0
      %v3268 = vsel %vm3254, %v3229, 0
      %v3271 = vsel %vm3254, %v3230, 0
      %v3274 = vsel %vm3254, %v3231, 0
      %v3277 = vsel %vm3254, %v3232, 0
      %3279 = vmatpush.msra.mxu0 0.0
      %3280 = vmatpush.msra.mxu0 0.0
      %3281 = vmatpush.msra.mxu0 0.0
      %3282 = vmatpush.msra.mxu0 0.0
      %3283 = vmatpush.msra.mxu0 0.0
      %3284 = vmatpush.msra.mxu0 0.0
      %3285 = vmatpush.msra.mxu0 0.0
      %3286 = vmatpush.msra.mxu0 0.0
      %3287 = vmatpush.msra.mxu0 0.0
      %3288 = vmatpush.msra.mxu0 0.0
      %3289 = vmatpush.msra.mxu0 0.0
      %3290 = vmatpush.msra.mxu0 0.0
      %3291 = vmatpush.msra.mxu0 0.0
      %3292 = vmatpush.msra.mxu0 %v3256
      %3293 = vmatpush.msra.mxu0 %v3217
      %3294 = vmatpush.msra.mxu0 %v3209
      %3295 = vmatmul.f32.gmra.mxu0 %v3249
      %v3296 = vpop.f32.mrf.mxu0
      %v3297 = vadd.f32 %v3240, %v3296
      %3298 = vmatmul.f32.gmra.mxu0 %v3252
      %v3299 = vpop.f32.mrf.mxu0
      %v3300 = vadd.f32 %v3245, %v3299
      %3301 = vdwg.mxu0
      %3302 = vmatpush.msra.mxu0 0.0
      %3303 = vmatpush.msra.mxu0 0.0
      %3304 = vmatpush.msra.mxu0 0.0
      %3305 = vmatpush.msra.mxu0 0.0
      %3306 = vmatpush.msra.mxu0 0.0
      %3307 = vmatpush.msra.mxu0 0.0
      %3308 = vmatpush.msra.mxu0 0.0
      %3309 = vmatpush.msra.mxu0 0.0
      %3310 = vmatpush.msra.mxu0 0.0
      %3311 = vmatpush.msra.mxu0 0.0
      %3312 = vmatpush.msra.mxu0 0.0
      %3313 = vmatpush.msra.mxu0 0.0
      %3314 = vmatpush.msra.mxu0 0.0
      %3315 = vmatpush.msra.mxu0 %v3259
      %3316 = vmatpush.msra.mxu0 %v3218
      %3317 = vmatpush.msra.mxu0 %v3210
      %3318 = vmatmul.f32.gmra.mxu0 %v3249
      %v3319 = vpop.f32.mrf.mxu0
      %v3320 = vadd.f32 %v3240, %v3319
      %3321 = vmatmul.f32.gmra.mxu0 %v3252
      %v3322 = vpop.f32.mrf.mxu0
      %v3323 = vadd.f32 %v3245, %v3322
      %3324 = vdwg.mxu0
      %3325 = vmatpush.msra.mxu0 0.0
      %3326 = vmatpush.msra.mxu0 0.0
      %3327 = vmatpush.msra.mxu0 0.0
      %3328 = vmatpush.msra.mxu0 0.0
      %3329 = vmatpush.msra.mxu0 0.0
      %3330 = vmatpush.msra.mxu0 0.0
      %3331 = vmatpush.msra.mxu0 0.0
      %3332 = vmatpush.msra.mxu0 0.0
      %3333 = vmatpush.msra.mxu0 0.0
      %3334 = vmatpush.msra.mxu0 0.0
      %3335 = vmatpush.msra.mxu0 0.0
      %3336 = vmatpush.msra.mxu0 0.0
      %3337 = vmatpush.msra.mxu0 0.0
      %3338 = vmatpush.msra.mxu0 %v3262
      %3339 = vmatpush.msra.mxu0 %v3219
      %3340 = vmatpush.msra.mxu0 %v3211
      %3341 = vmatmul.f32.gmra.mxu0 %v3249
      %v3342 = vpop.f32.mrf.mxu0
      %v3343 = vadd.f32 %v3240, %v3342
      %3344 = vmatmul.f32.gmra.mxu0 %v3252
      %v3345 = vpop.f32.mrf.mxu0
      %v3346 = vadd.f32 %v3245, %v3345
      %3347 = vdwg.mxu0
      %3348 = vmatpush.msra.mxu0 0.0
      %3349 = vmatpush.msra.mxu0 0.0
      %3350 = vmatpush.msra.mxu0 0.0
      %3351 = vmatpush.msra.mxu0 0.0
      %3352 = vmatpush.msra.mxu0 0.0
      %3353 = vmatpush.msra.mxu0 0.0
      %3354 = vmatpush.msra.mxu0 0.0
      %3355 = vmatpush.msra.mxu0 0.0
      %3356 = vmatpush.msra.mxu0 0.0
      %3357 = vmatpush.msra.mxu0 0.0
      %3358 = vmatpush.msra.mxu0 0.0
      %3359 = vmatpush.msra.mxu0 0.0
      %3360 = vmatpush.msra.mxu0 0.0
      %3361 = vmatpush.msra.mxu0 %v3265
      %3362 = vmatpush.msra.mxu0 %v3220
      %3363 = vmatpush.msra.mxu0 %v3212
      %3364 = vmatmul.f32.gmra.mxu0 %v3249
      %v3365 = vpop.f32.mrf.mxu0
      %v3366 = vadd.f32 %v3240, %v3365
      %3367 = vmatmul.f32.gmra.mxu0 %v3252
      %v3368 = vpop.f32.mrf.mxu0
      %v3369 = vadd.f32 %v3245, %v3368
      %3370 = vdwg.mxu0
      %3371 = vmatpush.msra.mxu0 0.0
      %3372 = vmatpush.msra.mxu0 0.0
      %3373 = vmatpush.msra.mxu0 0.0
      %3374 = vmatpush.msra.mxu0 0.0
      %3375 = vmatpush.msra.mxu0 0.0
      %3376 = vmatpush.msra.mxu0 0.0
      %3377 = vmatpush.msra.mxu0 0.0
      %3378 = vmatpush.msra.mxu0 0.0
      %3379 = vmatpush.msra.mxu0 0.0
      %3380 = vmatpush.msra.mxu0 0.0
      %3381 = vmatpush.msra.mxu0 0.0
      %3382 = vmatpush.msra.mxu0 0.0
      %3383 = vmatpush.msra.mxu0 0.0
      %3384 = vmatpush.msra.mxu0 %v3268
      %3385 = vmatpush.msra.mxu0 %v3221
      %3386 = vmatpush.msra.mxu0 %v3213
      %3387 = vmatmul.f32.gmra.mxu0 %v3249
      %v3388 = vpop.f32.mrf.mxu0
      %v3389 = vadd.f32 %v3240, %v3388
      %3390 = vmatmul.f32.gmra.mxu0 %v3252
      %v3391 = vpop.f32.mrf.mxu0
      %v3392 = vadd.f32 %v3245, %v3391
      %3393 = vdwg.mxu0
      %3394 = vmatpush.msra.mxu0 0.0
      %3395 = vmatpush.msra.mxu0 0.0
      %3396 = vmatpush.msra.mxu0 0.0
      %3397 = vmatpush.msra.mxu0 0.0
      %3398 = vmatpush.msra.mxu0 0.0
      %3399 = vmatpush.msra.mxu0 0.0
      %3400 = vmatpush.msra.mxu0 0.0
      %3401 = vmatpush.msra.mxu0 0.0
      %3402 = vmatpush.msra.mxu0 0.0
      %3403 = vmatpush.msra.mxu0 0.0
      %3404 = vmatpush.msra.mxu0 0.0
      %3405 = vmatpush.msra.mxu0 0.0
      %3406 = vmatpush.msra.mxu0 0.0
      %3407 = vmatpush.msra.mxu0 %v3271
      %3408 = vmatpush.msra.mxu0 %v3222
      %3409 = vmatpush.msra.mxu0 %v3214
      %3410 = vmatmul.f32.gmra.mxu0 %v3249
      %v3411 = vpop.f32.mrf.mxu0
      %v3412 = vadd.f32 %v3240, %v3411
      %3413 = vmatmul.f32.gmra.mxu0 %v3252
      %v3414 = vpop.f32.mrf.mxu0
      %v3415 = vadd.f32 %v3245, %v3414
      %3416 = vdwg.mxu0
      %3417 = vmatpush.msra.mxu0 0.0
      %3418 = vmatpush.msra.mxu0 0.0
      %3419 = vmatpush.msra.mxu0 0.0
      %3420 = vmatpush.msra.mxu0 0.0
      %3421 = vmatpush.msra.mxu0 0.0
      %3422 = vmatpush.msra.mxu0 0.0
      %3423 = vmatpush.msra.mxu0 0.0
      %3424 = vmatpush.msra.mxu0 0.0
      %3425 = vmatpush.msra.mxu0 0.0
      %3426 = vmatpush.msra.mxu0 0.0
      %3427 = vmatpush.msra.mxu0 0.0
      %3428 = vmatpush.msra.mxu0 0.0
      %3429 = vmatpush.msra.mxu0 0.0
      %3430 = vmatpush.msra.mxu0 %v3274
      %3431 = vmatpush.msra.mxu0 %v3223
      %3432 = vmatpush.msra.mxu0 %v3215
      %3433 = vmatmul.f32.gmra.mxu0 %v3249
      %v3434 = vpop.f32.mrf.mxu0
      %v3435 = vadd.f32 %v3240, %v3434
      %3436 = vmatmul.f32.gmra.mxu0 %v3252
      %v3437 = vpop.f32.mrf.mxu0
      %v3438 = vadd.f32 %v3245, %v3437
      %3439 = vdwg.mxu0
      %3440 = vmatpush.msra.mxu0 0.0
      %3441 = vmatpush.msra.mxu0 0.0
      %3442 = vmatpush.msra.mxu0 0.0
      %3443 = vmatpush.msra.mxu0 0.0
      %3444 = vmatpush.msra.mxu0 0.0
      %3445 = vmatpush.msra.mxu0 0.0
      %3446 = vmatpush.msra.mxu0 0.0
      %3447 = vmatpush.msra.mxu0 0.0
      %3448 = vmatpush.msra.mxu0 0.0
      %3449 = vmatpush.msra.mxu0 0.0
      %3450 = vmatpush.msra.mxu0 0.0
      %3451 = vmatpush.msra.mxu0 0.0
      %3452 = vmatpush.msra.mxu0 0.0
      %3453 = vmatpush.msra.mxu0 %v3277
      %3454 = vmatpush.msra.mxu0 %v3224
      %3455 = vmatpush.msra.mxu0 %v3216
      %3456 = vmatmul.f32.gmra.mxu0 %v3249
      %v3457 = vpop.f32.mrf.mxu0
      %v3458 = vadd.f32 %v3240, %v3457
      %3459 = vmatmul.f32.gmra.mxu0 %v3252
      %v3460 = vpop.f32.mrf.mxu0
      %v3461 = vadd.f32 %v3245, %v3460
      %3462 = vdwg.mxu0
      %v3463 = vmax.f32 %v3297, 0.0
      %v3464 = vmax.f32 %v3320, 0.0
      %v3465 = vmax.f32 %v3343, 0.0
      %v3466 = vmax.f32 %v3366, 0.0
      %v3467 = vmax.f32 %v3389, 0.0
      %v3468 = vmax.f32 %v3412, 0.0
      %v3469 = vmax.f32 %v3435, 0.0
      %v3470 = vmax.f32 %v3458, 0.0
      %v3471 = vmax.f32 %v3300, 0.0
      %v3472 = vmax.f32 %v3323, 0.0
      %v3473 = vmax.f32 %v3346, 0.0
      %v3474 = vmax.f32 %v3369, 0.0
      %v3475 = vmax.f32 %v3392, 0.0
      %v3476 = vmax.f32 %v3415, 0.0
      %v3477 = vmax.f32 %v3438, 0.0
      %v3478 = vmax.f32 %v3461, 0.0
      %3479 = vst [vmem:[%s224] sm:$0xff] %v3463
      %3480 = vst [vmem:[%s224 + $0x8] sm:$0xff] %v3464
      %3481 = vst [vmem:[%s224 + $0x10] sm:$0xff] %v3465
      %3482 = vst [vmem:[%s224 + $0x18] sm:$0xff] %v3466
      %3483 = vst [vmem:[%s224 + $0x20] sm:$0xff] %v3467
      %3484 = vst [vmem:[%s224 + $0x28] sm:$0xff] %v3468
      %3485 = vst [vmem:[%s224 + $0x30] sm:$0xff] %v3469
      %vm3486 = vcmask 31744
      %3487 = vst.msk [vmem:[%s224 + $0x38] sm:$0xff] %vm3486, %v3470
      %3488 = vst [vmem:[%s224 + $0x40] sm:$0xff] %v3471
      %3489 = vst [vmem:[%s224 + $0x48] sm:$0xff] %v3472
      %3490 = vst [vmem:[%s224 + $0x50] sm:$0xff] %v3473
      %3491 = vst [vmem:[%s224 + $0x58] sm:$0xff] %v3474
      %3492 = vst [vmem:[%s224 + $0x60] sm:$0xff] %v3475
      %3493 = vst [vmem:[%s224 + $0x68] sm:$0xff] %v3476
      %3494 = vst [vmem:[%s224 + $0x70] sm:$0xff] %v3477
      %3495 = vst.msk [vmem:[%s224 + $0x78] sm:$0xff] %vm3486, %v3478
      %p3496 = scmp.lt.s32.totalorder %s16, 1
      %s3497 = scalar_select %p3496, %s16, 1
      %s3498 = smul.addr %s3497, 16
      %s3499 = smul.addr %s3498, 8
      %s3500 = scalar_lea.vmem %s5, %s3499
      // Predicated region
      $region41: #{forward.2} parent=39 // pred_check
        %p3501 = pneg %p144
      $region42: #{forward.2} parent=39 // pred_check_branch
        %3503 = sbr.rel (%p3501) target = $region44
      $region43: #{forward.2} parent=39 // pred_region
        _
      $region44: #{forward.2} parent=39 // pred_fallthru
        _
    $region40: #{forward.2} parent=5 // pred_fallthru
      _
    %p3504 = scmp.le.s32.totalorder 2, %s11
    // Predicated region
    $region45: #{forward.2} parent=5 // pred_check
      %p3505 = pneg %p3504
    $region46: #{forward.2} parent=5 // pred_check_branch
      %3507 = sbr.rel (%p3505) target = $region48
    $region47: #{forward.2} parent=5 // pred_region
      %s3508 = ssub.s32 %s11, 2
      // Predicated region
      $region49: #{forward.2} parent=47 // pred_check
        %p3509 = pneg %p150
      $region50: #{forward.2} parent=47 // pred_check_branch
        %3511 = sbr.rel (%p3509) target = $region52
      $region51: #{forward.2} parent=47 // pred_region
        %p3512 = scmp.lt.s32.totalorder %s17, 1
        %s3513 = scalar_select %p3512, %s17, 1
        %s3514 = smul.addr %s3513, 16
        %s3515 = smul.addr %s3514, 8
        %s3516 = scalar_lea.vmem %s5, %s3515
      $region52: #{forward.2} parent=47 // pred_fallthru
        _
    $region48: #{forward.2} parent=5 // pred_fallthru
      _
  $region6: #{forward.2} parent=0 // loop_footer
    %s15 = sadd.s32 1, %s11
  $region7: #{forward.2} parent=0 // loop_footer_branch
    %10 = sbr.rel target = $region3
  $region8: #{forward.2} parent=0 // loop_exit
    _

// kernel: forward.3
$region0: #{forward.3}
  #allocation0 [shape = 'u32[]', space=smem, size = 0x4, offset = 0x4, fixed_abs, tag = 'smem constant byte address 0x4 - core index']
  #allocation1 [shape = 'u32[72,128]{1,0:T(1,128)}', space=vmem, size = 0x9000, scoped, tag = 'internal scratch']
  %s0 = inlined_call_operand.vmem [shape: f32[512,16], index: 0, kind: input, shape index: {}]
  %s1 = inlined_call_operand.vmem [shape: f32[16,16], index: 1, kind: input, shape index: {}]
  %s2 = inlined_call_operand.vmem [shape: f32[1,16], index: 2, kind: input, shape index: {}]
  %s3 = inlined_call_operand.vmem [shape: f32[16,24], index: 3, kind: input, shape index: {}]
  %s4 = inlined_call_operand.vmem [shape: f32[1,24], index: 4, kind: input, shape index: {}]
  %s5 = inlined_call_operand.vmem [shape: f32[24,24], index: 5, kind: input, shape index: {}]
  %s6 = inlined_call_operand.vmem [shape: f32[1,24], index: 6, kind: input, shape index: {}]
  %s7 = inlined_call_operand.vmem [shape: f32[24,32], index: 7, kind: input, shape index: {}]
  %s8 = inlined_call_operand.vmem [shape: f32[1,32], index: 8, kind: input, shape index: {}]
  %s9 = inlined_call_operand.vmem [shape: f32[32,64], index: 9, kind: input, shape index: {}]
  %s10 = inlined_call_operand.vmem [shape: f32[1,64], index: 10, kind: input, shape index: {}]
  %s11 = inlined_call_operand.vmem [shape: f32[128,512], index: 11, kind: input, shape index: {}]
  %s12 = inlined_call_operand.vmem [shape: f32[32,128], index: 12, kind: input, shape index: {}]
  %s13 = inlined_call_operand.vmem [shape: f32[2,32], index: 13, kind: input, shape index: {}]
  %s14 = inlined_call_operand.vmem [shape: f32[64,64], index: 14, kind: input, shape index: {}]
  %s15 = inlined_call_operand.vmem [shape: f32[1,64], index: 15, kind: input, shape index: {}]
  %s16 = inlined_call_operand.vmem [shape: f32[64,32], index: 16, kind: input, shape index: {}]
  %s17 = inlined_call_operand.vmem [shape: f32[1,32], index: 17, kind: input, shape index: {}]
  %s18 = inlined_call_operand.vmem [shape: f32[32,2], index: 18, kind: input, shape index: {}]
  %s19 = inlined_call_operand.vmem [shape: f32[1,2], index: 19, kind: input, shape index: {}]
  %s20 = inlined_call_operand.hbm [shape: f32[2,2], index: 20, kind: output, shape index: {}]
  %s21 = sld [smem:[#allocation0]]
  $region90: #{forward.3} parent=0
    _
  %s23 = ssub.s32 1, %s21
  %s24 = scalar_select 0, %s23, %s21
  $region1: #{forward.3} parent=0
    #allocation2 [shape = 'u8[1024]{0}', space=vmem, size = 0x400, scoped, tag = 'output window, operand 0, single buffered']
    #allocation3 [shape = 's32[1]{0}', space=sflag, size = 0x4, scoped, tag = 'scoped memory for forward.3']
    %25 = vsyncpa [#allocation3], 0
    // Predicated region
    $region2: #{forward.3} parent=1 // pred_check
      _
    $region3: #{forward.3} parent=1 // pred_check_branch
      %27 = sbr.rel (0) target = $region5
    $region4: #{forward.3} parent=1 // pred_region
      _
    $region5: #{forward.3} parent=1 // pred_fallthru
      _
    // Predicated region
    $region6: #{forward.3} parent=1 // pred_check
      _
    $region7: #{forward.3} parent=1 // pred_check_branch
      %29 = sbr.rel (0) target = $region9
    $region8: #{forward.3} parent=1 // pred_region
      _
    $region9: #{forward.3} parent=1 // pred_fallthru
      _
    // Predicated region
    $region10: #{forward.3} parent=1 // pred_check
      _
    $region11: #{forward.3} parent=1 // pred_check_branch
      %31 = sbr.rel (0) target = $region13
    $region12: #{forward.3} parent=1 // pred_region
      _
    $region13: #{forward.3} parent=1 // pred_fallthru
      _
    // Predicated region
    $region14: #{forward.3} parent=1 // pred_check
      _
    $region15: #{forward.3} parent=1 // pred_check_branch
      %33 = sbr.rel (0) target = $region17
    $region16: #{forward.3} parent=1 // pred_region
      _
    $region17: #{forward.3} parent=1 // pred_fallthru
      _
    // Predicated region
    $region18: #{forward.3} parent=1 // pred_check
      _
    $region19: #{forward.3} parent=1 // pred_check_branch
      %35 = sbr.rel (0) target = $region21
    $region20: #{forward.3} parent=1 // pred_region
      _
    $region21: #{forward.3} parent=1 // pred_fallthru
      _
    // Predicated region
    $region22: #{forward.3} parent=1 // pred_check
      _
    $region23: #{forward.3} parent=1 // pred_check_branch
      %37 = sbr.rel (0) target = $region25
    $region24: #{forward.3} parent=1 // pred_region
      _
    $region25: #{forward.3} parent=1 // pred_fallthru
      _
    // Predicated region
    $region26: #{forward.3} parent=1 // pred_check
      _
    $region27: #{forward.3} parent=1 // pred_check_branch
      %39 = sbr.rel (0) target = $region29
    $region28: #{forward.3} parent=1 // pred_region
      _
    $region29: #{forward.3} parent=1 // pred_fallthru
      _
    // Predicated region
    $region30: #{forward.3} parent=1 // pred_check
      _
    $region31: #{forward.3} parent=1 // pred_check_branch
      %41 = sbr.rel (0) target = $region33
    $region32: #{forward.3} parent=1 // pred_region
      _
    $region33: #{forward.3} parent=1 // pred_fallthru
      _
    // Predicated region
    $region34: #{forward.3} parent=1 // pred_check
      _
    $region35: #{forward.3} parent=1 // pred_check_branch
      %43 = sbr.rel (0) target = $region37
    $region36: #{forward.3} parent=1 // pred_region
      _
    $region37: #{forward.3} parent=1 // pred_fallthru
      _
    // Predicated region
    $region38: #{forward.3} parent=1 // pred_check
      _
    $region39: #{forward.3} parent=1 // pred_check_branch
      %45 = sbr.rel (0) target = $region41
    $region40: #{forward.3} parent=1 // pred_region
      _
    $region41: #{forward.3} parent=1 // pred_fallthru
      _
    // Predicated region
    $region42: #{forward.3} parent=1 // pred_check
      _
    $region43: #{forward.3} parent=1 // pred_check_branch
      %47 = sbr.rel (0) target = $region45
    $region44: #{forward.3} parent=1 // pred_region
      _
    $region45: #{forward.3} parent=1 // pred_fallthru
      _
    // Predicated region
    $region46: #{forward.3} parent=1 // pred_check
      _
    $region47: #{forward.3} parent=1 // pred_check_branch
      %49 = sbr.rel (0) target = $region49
    $region48: #{forward.3} parent=1 // pred_region
      _
    $region49: #{forward.3} parent=1 // pred_fallthru
      _
    // Predicated region
    $region50: #{forward.3} parent=1 // pred_check
      _
    $region51: #{forward.3} parent=1 // pred_check_branch
      %51 = sbr.rel (0) target = $region53
    $region52: #{forward.3} parent=1 // pred_region
      _
    $region53: #{forward.3} parent=1 // pred_fallthru
      _
    // Predicated region
    $region54: #{forward.3} parent=1 // pred_check
      _
    $region55: #{forward.3} parent=1 // pred_check_branch
      %53 = sbr.rel (0) target = $region57
    $region56: #{forward.3} parent=1 // pred_region
      _
    $region57: #{forward.3} parent=1 // pred_fallthru
      _
    // Predicated region
    $region58: #{forward.3} parent=1 // pred_check
      _
    $region59: #{forward.3} parent=1 // pred_check_branch
      %55 = sbr.rel (0) target = $region61
    $region60: #{forward.3} parent=1 // pred_region
      _
    $region61: #{forward.3} parent=1 // pred_fallthru
      _
    // Predicated region
    $region62: #{forward.3} parent=1 // pred_check
      _
    $region63: #{forward.3} parent=1 // pred_check_branch
      %57 = sbr.rel (0) target = $region65
    $region64: #{forward.3} parent=1 // pred_region
      _
    $region65: #{forward.3} parent=1 // pred_fallthru
      _
    // Predicated region
    $region66: #{forward.3} parent=1 // pred_check
      _
    $region67: #{forward.3} parent=1 // pred_check_branch
      %59 = sbr.rel (0) target = $region69
    $region68: #{forward.3} parent=1 // pred_region
      _
    $region69: #{forward.3} parent=1 // pred_fallthru
      _
    // Predicated region
    $region70: #{forward.3} parent=1 // pred_check
      _
    $region71: #{forward.3} parent=1 // pred_check_branch
      %61 = sbr.rel (0) target = $region73
    $region72: #{forward.3} parent=1 // pred_region
      _
    $region73: #{forward.3} parent=1 // pred_fallthru
      _
    // Predicated region
    $region74: #{forward.3} parent=1 // pred_check
      _
    $region75: #{forward.3} parent=1 // pred_check_branch
      %63 = sbr.rel (0) target = $region77
    $region76: #{forward.3} parent=1 // pred_region
      _
    $region77: #{forward.3} parent=1 // pred_fallthru
      _
    // Predicated region
    $region78: #{forward.3} parent=1 // pred_check
      _
    $region79: #{forward.3} parent=1 // pred_check_branch
      %65 = sbr.rel (0) target = $region81
    $region80: #{forward.3} parent=1 // pred_region
      _
    $region81: #{forward.3} parent=1 // pred_fallthru
      _
    %v66 = vld [vmem:[%s0] sm:$0xff]
    %v67 = vld [vmem:[%s0 + $0x8] sm:$0xff]
    %v68 = vld [vmem:[%s0 + $0x10] sm:$0xff]
    %v69 = vld [vmem:[%s0 + $0x18] sm:$0xff]
    %v70 = vld [vmem:[%s0 + $0x20] sm:$0xff]
    %v71 = vld [vmem:[%s0 + $0x28] sm:$0xff]
    %v72 = vld [vmem:[%s0 + $0x30] sm:$0xff]
    %v73 = vld [vmem:[%s0 + $0x38] sm:$0xff]
    %v74 = vld [vmem:[%s0 + $0x40] sm:$0xff]
    %v75 = vld [vmem:[%s0 + $0x48] sm:$0xff]
    %v76 = vld [vmem:[%s0 + $0x50] sm:$0xff]
    %v77 = vld [vmem:[%s0 + $0x58] sm:$0xff]
    %v78 = vld [vmem:[%s0 + $0x60] sm:$0xff]
    %v79 = vld [vmem:[%s0 + $0x68] sm:$0xff]
    %v80 = vld [vmem:[%s0 + $0x70] sm:$0xff]
    %v81 = vld [vmem:[%s0 + $0x78] sm:$0xff]
    %v82 = vld [vmem:[%s0 + $0x80] sm:$0xff]
    %v83 = vld [vmem:[%s0 + $0x88] sm:$0xff]
    %v84 = vld [vmem:[%s0 + $0x90] sm:$0xff]
    %v85 = vld [vmem:[%s0 + $0x98] sm:$0xff]
    %v86 = vld [vmem:[%s0 + $0xa0] sm:$0xff]
    %v87 = vld [vmem:[%s0 + $0xa8] sm:$0xff]
    %v88 = vld [vmem:[%s0 + $0xb0] sm:$0xff]
    %v89 = vld [vmem:[%s0 + $0xb8] sm:$0xff]
    %v90 = vld [vmem:[%s0 + $0xc0] sm:$0xff]
    %v91 = vld [vmem:[%s0 + $0xc8] sm:$0xff]
    %v92 = vld [vmem:[%s0 + $0xd0] sm:$0xff]
    %v93 = vld [vmem:[%s0 + $0xd8] sm:$0xff]
    %v94 = vld [vmem:[%s0 + $0xe0] sm:$0xff]
    %v95 = vld [vmem:[%s0 + $0xe8] sm:$0xff]
    %v96 = vld [vmem:[%s0 + $0xf0] sm:$0xff]
    %v97 = vld [vmem:[%s0 + $0xf8] sm:$0xff]
    %v98 = vld [vmem:[%s0 + $0x100] sm:$0xff]
    %v99 = vld [vmem:[%s0 + $0x108] sm:$0xff]
    %v100 = vld [vmem:[%s0 + $0x110] sm:$0xff]
    %v101 = vld [vmem:[%s0 + $0x118] sm:$0xff]
    %v102 = vld [vmem:[%s0 + $0x120] sm:$0xff]
    %v103 = vld [vmem:[%s0 + $0x128] sm:$0xff]
    %v104 = vld [vmem:[%s0 + $0x130] sm:$0xff]
    %v105 = vld [vmem:[%s0 + $0x138] sm:$0xff]
    %v106 = vld [vmem:[%s0 + $0x140] sm:$0xff]
    %v107 = vld [vmem:[%s0 + $0x148] sm:$0xff]
    %v108 = vld [vmem:[%s0 + $0x150] sm:$0xff]
    %v109 = vld [vmem:[%s0 + $0x158] sm:$0xff]
    %v110 = vld [vmem:[%s0 + $0x160] sm:$0xff]
    %v111 = vld [vmem:[%s0 + $0x168] sm:$0xff]
    %v112 = vld [vmem:[%s0 + $0x170] sm:$0xff]
    %v113 = vld [vmem:[%s0 + $0x178] sm:$0xff]
    %v114 = vld [vmem:[%s0 + $0x180] sm:$0xff]
    %v115 = vld [vmem:[%s0 + $0x188] sm:$0xff]
    %v116 = vld [vmem:[%s0 + $0x190] sm:$0xff]
    %v117 = vld [vmem:[%s0 + $0x198] sm:$0xff]
    %v118 = vld [vmem:[%s0 + $0x1a0] sm:$0xff]
    %v119 = vld [vmem:[%s0 + $0x1a8] sm:$0xff]
    %v120 = vld [vmem:[%s0 + $0x1b0] sm:$0xff]
    %v121 = vld [vmem:[%s0 + $0x1b8] sm:$0xff]
    %v122 = vld [vmem:[%s0 + $0x1c0] sm:$0xff]
    %v123 = vld [vmem:[%s0 + $0x1c8] sm:$0xff]
    %v124 = vld [vmem:[%s0 + $0x1d0] sm:$0xff]
    %v125 = vld [vmem:[%s0 + $0x1d8] sm:$0xff]
    %v126 = vld [vmem:[%s0 + $0x1e0] sm:$0xff]
    %v127 = vld [vmem:[%s0 + $0x1e8] sm:$0xff]
    %v128 = vld [vmem:[%s0 + $0x1f0] sm:$0xff]
    %v129 = vld [vmem:[%s0 + $0x1f8] sm:$0xff]
    %v130 = vld [vmem:[%s1] sm:$0xff]
    %v131 = vld [vmem:[%s1 + $0x8] sm:$0xff]
    %v132 = vld [vmem:[%s2] sm:$0x1]
    %v134 = vperm.slane %v132, 0
    %vm136 = vcmask 130048
    %v138 = vsel %vm136, %v66, 0
    %v141 = vsel %vm136, %v67, 0
    %v144 = vsel %vm136, %v68, 0
    %v147 = vsel %vm136, %v69, 0
    %v150 = vsel %vm136, %v70, 0
    %v153 = vsel %vm136, %v71, 0
    %v156 = vsel %vm136, %v72, 0
    %v159 = vsel %vm136, %v73, 0
    %v162 = vsel %vm136, %v74, 0
    %v165 = vsel %vm136, %v75, 0
    %v168 = vsel %vm136, %v76, 0
    %v171 = vsel %vm136, %v77, 0
    %v174 = vsel %vm136, %v78, 0
    %v177 = vsel %vm136, %v79, 0
    %v180 = vsel %vm136, %v80, 0
    %v183 = vsel %vm136, %v81, 0
    %v186 = vsel %vm136, %v82, 0
    %v189 = vsel %vm136, %v83, 0
    %v192 = vsel %vm136, %v84, 0
    %v195 = vsel %vm136, %v85, 0
    %v198 = vsel %vm136, %v86, 0
    %v201 = vsel %vm136, %v87, 0
    %v204 = vsel %vm136, %v88, 0
    %v207 = vsel %vm136, %v89, 0
    %v210 = vsel %vm136, %v90, 0
    %v213 = vsel %vm136, %v91, 0
    %v216 = vsel %vm136, %v92, 0
    %v219 = vsel %vm136, %v93, 0
    %v222 = vsel %vm136, %v94, 0
    %v225 = vsel %vm136, %v95, 0
    %v228 = vsel %vm136, %v96, 0
    %v231 = vsel %vm136, %v97, 0
    %v234 = vsel %vm136, %v98, 0
    %v237 = vsel %vm136, %v99, 0
    %v240 = vsel %vm136, %v100, 0
    %v243 = vsel %vm136, %v101, 0
    %v246 = vsel %vm136, %v102, 0
    %v249 = vsel %vm136, %v103, 0
    %v252 = vsel %vm136, %v104, 0
    %v255 = vsel %vm136, %v105, 0
    %v258 = vsel %vm136, %v106, 0
    %v261 = vsel %vm136, %v107, 0
    %v264 = vsel %vm136, %v108, 0
    %v267 = vsel %vm136, %v109, 0
    %v270 = vsel %vm136, %v110, 0
    %v273 = vsel %vm136, %v111, 0
    %v276 = vsel %vm136, %v112, 0
    %v279 = vsel %vm136, %v113, 0
    %v282 = vsel %vm136, %v114, 0
    %v285 = vsel %vm136, %v115, 0
    %v288 = vsel %vm136, %v116, 0
    %v291 = vsel %vm136, %v117, 0
    %v294 = vsel %vm136, %v118, 0
    %v297 = vsel %vm136, %v119, 0
    %v300 = vsel %vm136, %v120, 0
    %v303 = vsel %vm136, %v121, 0
    %v306 = vsel %vm136, %v122, 0
    %v309 = vsel %vm136, %v123, 0
    %v312 = vsel %vm136, %v124, 0
    %v315 = vsel %vm136, %v125, 0
    %v318 = vsel %vm136, %v126, 0
    %v321 = vsel %vm136, %v127, 0
    %v324 = vsel %vm136, %v128, 0
    %v327 = vsel %vm136, %v129, 0
    %329 = vmatpush.msra.mxu0 0.0
    %330 = vmatpush.msra.mxu0 0.0
    %331 = vmatpush.msra.mxu0 0.0
    %332 = vmatpush.msra.mxu0 0.0
    %333 = vmatpush.msra.mxu0 0.0
    %334 = vmatpush.msra.mxu0 0.0
    %335 = vmatpush.msra.mxu0 0.0
    %336 = vmatpush.msra.mxu0 0.0
    %337 = vmatpush.msra.mxu0 0.0
    %338 = vmatpush.msra.mxu0 0.0
    %339 = vmatpush.msra.mxu0 0.0
    %340 = vmatpush.msra.mxu0 0.0
    %341 = vmatpush.msra.mxu0 0.0
    %342 = vmatpush.msra.mxu0 0.0
    %343 = vmatpush.msra.mxu0 %v131
    %344 = vmatpush.msra.mxu0 %v130
    %345 = vmatmul.f32.gmra.mxu0 %v138
    %v346 = vpop.f32.mrf.mxu0
    %v347 = vadd.f32 %v134, %v346
    %348 = vmatmul.f32.gmra.mxu0 %v141
    %v349 = vpop.f32.mrf.mxu0
    %v350 = vadd.f32 %v134, %v349
    %351 = vmatmul.f32.gmra.mxu0 %v144
    %v352 = vpop.f32.mrf.mxu0
    %v353 = vadd.f32 %v134, %v352
    %354 = vmatmul.f32.gmra.mxu0 %v147
    %v355 = vpop.f32.mrf.mxu0
    %v356 = vadd.f32 %v134, %v355
    %357 = vmatmul.f32.gmra.mxu0 %v150
    %v358 = vpop.f32.mrf.mxu0
    %v359 = vadd.f32 %v134, %v358
    %360 = vmatmul.f32.gmra.mxu0 %v153
    %v361 = vpop.f32.mrf.mxu0
    %v362 = vadd.f32 %v134, %v361
    %363 = vmatmul.f32.gmra.mxu0 %v156
    %v364 = vpop.f32.mrf.mxu0
    %v365 = vadd.f32 %v134, %v364
    %366 = vmatmul.f32.gmra.mxu0 %v159
    %v367 = vpop.f32.mrf.mxu0
    %v368 = vadd.f32 %v134, %v367
    %369 = vmatmul.f32.gmra.mxu0 %v162
    %v370 = vpop.f32.mrf.mxu0
    %v371 = vadd.f32 %v134, %v370
    %372 = vmatmul.f32.gmra.mxu0 %v165
    %v373 = vpop.f32.mrf.mxu0
    %v374 = vadd.f32 %v134, %v373
    %375 = vmatmul.f32.gmra.mxu0 %v168
    %v376 = vpop.f32.mrf.mxu0
    %v377 = vadd.f32 %v134, %v376
    %378 = vmatmul.f32.gmra.mxu0 %v171
    %v379 = vpop.f32.mrf.mxu0
    %v380 = vadd.f32 %v134, %v379
    %381 = vmatmul.f32.gmra.mxu0 %v174
    %v382 = vpop.f32.mrf.mxu0
    %v383 = vadd.f32 %v134, %v382
    %384 = vmatmul.f32.gmra.mxu0 %v177
    %v385 = vpop.f32.mrf.mxu0
    %v386 = vadd.f32 %v134, %v385
    %387 = vmatmul.f32.gmra.mxu0 %v180
    %v388 = vpop.f32.mrf.mxu0
    %v389 = vadd.f32 %v134, %v388
    %390 = vmatmul.f32.gmra.mxu0 %v183
    %v391 = vpop.f32.mrf.mxu0
    %v392 = vadd.f32 %v134, %v391
    %393 = vmatmul.f32.gmra.mxu0 %v186
    %v394 = vpop.f32.mrf.mxu0
    %v395 = vadd.f32 %v134, %v394
    %396 = vmatmul.f32.gmra.mxu0 %v189
    %v397 = vpop.f32.mrf.mxu0
    %v398 = vadd.f32 %v134, %v397
    %399 = vmatmul.f32.gmra.mxu0 %v192
    %v400 = vpop.f32.mrf.mxu0
    %v401 = vadd.f32 %v134, %v400
    %402 = vmatmul.f32.gmra.mxu0 %v195
    %v403 = vpop.f32.mrf.mxu0
    %v404 = vadd.f32 %v134, %v403
    %405 = vmatmul.f32.gmra.mxu0 %v198
    %v406 = vpop.f32.mrf.mxu0
    %v407 = vadd.f32 %v134, %v406
    %408 = vmatmul.f32.gmra.mxu0 %v201
    %v409 = vpop.f32.mrf.mxu0
    %v410 = vadd.f32 %v134, %v409
    %411 = vmatmul.f32.gmra.mxu0 %v204
    %v412 = vpop.f32.mrf.mxu0
    %v413 = vadd.f32 %v134, %v412
    %414 = vmatmul.f32.gmra.mxu0 %v207
    %v415 = vpop.f32.mrf.mxu0
    %v416 = vadd.f32 %v134, %v415
    %417 = vmatmul.f32.gmra.mxu0 %v210
    %v418 = vpop.f32.mrf.mxu0
    %v419 = vadd.f32 %v134, %v418
    %420 = vmatmul.f32.gmra.mxu0 %v213
    %v421 = vpop.f32.mrf.mxu0
    %v422 = vadd.f32 %v134, %v421
    %423 = vmatmul.f32.gmra.mxu0 %v216
    %v424 = vpop.f32.mrf.mxu0
    %v425 = vadd.f32 %v134, %v424
    %426 = vmatmul.f32.gmra.mxu0 %v219
    %v427 = vpop.f32.mrf.mxu0
    %v428 = vadd.f32 %v134, %v427
    %429 = vmatmul.f32.gmra.mxu0 %v222
    %v430 = vpop.f32.mrf.mxu0
    %v431 = vadd.f32 %v134, %v430
    %432 = vmatmul.f32.gmra.mxu0 %v225
    %v433 = vpop.f32.mrf.mxu0
    %v434 = vadd.f32 %v134, %v433
    %435 = vmatmul.f32.gmra.mxu0 %v228
    %v436 = vpop.f32.mrf.mxu0
    %v437 = vadd.f32 %v134, %v436
    %438 = vmatmul.f32.gmra.mxu0 %v231
    %v439 = vpop.f32.mrf.mxu0
    %v440 = vadd.f32 %v134, %v439
    %441 = vmatmul.f32.gmra.mxu0 %v234
    %v442 = vpop.f32.mrf.mxu0
    %v443 = vadd.f32 %v134, %v442
    %444 = vmatmul.f32.gmra.mxu0 %v237
    %v445 = vpop.f32.mrf.mxu0
    %v446 = vadd.f32 %v134, %v445
    %447 = vmatmul.f32.gmra.mxu0 %v240
    %v448 = vpop.f32.mrf.mxu0
    %v449 = vadd.f32 %v134, %v448
    %450 = vmatmul.f32.gmra.mxu0 %v243
    %v451 = vpop.f32.mrf.mxu0
    %v452 = vadd.f32 %v134, %v451
    %453 = vmatmul.f32.gmra.mxu0 %v246
    %v454 = vpop.f32.mrf.mxu0
    %v455 = vadd.f32 %v134, %v454
    %456 = vmatmul.f32.gmra.mxu0 %v249
    %v457 = vpop.f32.mrf.mxu0
    %v458 = vadd.f32 %v134, %v457
    %459 = vmatmul.f32.gmra.mxu0 %v252
    %v460 = vpop.f32.mrf.mxu0
    %v461 = vadd.f32 %v134, %v460
    %462 = vmatmul.f32.gmra.mxu0 %v255
    %v463 = vpop.f32.mrf.mxu0
    %v464 = vadd.f32 %v134, %v463
    %465 = vmatmul.f32.gmra.mxu0 %v258
    %v466 = vpop.f32.mrf.mxu0
    %v467 = vadd.f32 %v134, %v466
    %468 = vmatmul.f32.gmra.mxu0 %v261
    %v469 = vpop.f32.mrf.mxu0
    %v470 = vadd.f32 %v134, %v469
    %471 = vmatmul.f32.gmra.mxu0 %v264
    %v472 = vpop.f32.mrf.mxu0
    %v473 = vadd.f32 %v134, %v472
    %474 = vmatmul.f32.gmra.mxu0 %v267
    %v475 = vpop.f32.mrf.mxu0
    %v476 = vadd.f32 %v134, %v475
    %477 = vmatmul.f32.gmra.mxu0 %v270
    %v478 = vpop.f32.mrf.mxu0
    %v479 = vadd.f32 %v134, %v478
    %480 = vmatmul.f32.gmra.mxu0 %v273
    %v481 = vpop.f32.mrf.mxu0
    %v482 = vadd.f32 %v134, %v481
    %483 = vmatmul.f32.gmra.mxu0 %v276
    %v484 = vpop.f32.mrf.mxu0
    %v485 = vadd.f32 %v134, %v484
    %486 = vmatmul.f32.gmra.mxu0 %v279
    %v487 = vpop.f32.mrf.mxu0
    %v488 = vadd.f32 %v134, %v487
    %489 = vmatmul.f32.gmra.mxu0 %v282
    %v490 = vpop.f32.mrf.mxu0
    %v491 = vadd.f32 %v134, %v490
    %492 = vmatmul.f32.gmra.mxu0 %v285
    %v493 = vpop.f32.mrf.mxu0
    %v494 = vadd.f32 %v134, %v493
    %495 = vmatmul.f32.gmra.mxu0 %v288
    %v496 = vpop.f32.mrf.mxu0
    %v497 = vadd.f32 %v134, %v496
    %498 = vmatmul.f32.gmra.mxu0 %v291
    %v499 = vpop.f32.mrf.mxu0
    %v500 = vadd.f32 %v134, %v499
    %501 = vmatmul.f32.gmra.mxu0 %v294
    %v502 = vpop.f32.mrf.mxu0
    %v503 = vadd.f32 %v134, %v502
    %504 = vmatmul.f32.gmra.mxu0 %v297
    %v505 = vpop.f32.mrf.mxu0
    %v506 = vadd.f32 %v134, %v505
    %507 = vmatmul.f32.gmra.mxu0 %v300
    %v508 = vpop.f32.mrf.mxu0
    %v509 = vadd.f32 %v134, %v508
    %510 = vmatmul.f32.gmra.mxu0 %v303
    %v511 = vpop.f32.mrf.mxu0
    %v512 = vadd.f32 %v134, %v511
    %513 = vmatmul.f32.gmra.mxu0 %v306
    %v514 = vpop.f32.mrf.mxu0
    %v515 = vadd.f32 %v134, %v514
    %516 = vmatmul.f32.gmra.mxu0 %v309
    %v517 = vpop.f32.mrf.mxu0
    %v518 = vadd.f32 %v134, %v517
    %519 = vmatmul.f32.gmra.mxu0 %v312
    %v520 = vpop.f32.mrf.mxu0
    %v521 = vadd.f32 %v134, %v520
    %522 = vmatmul.f32.gmra.mxu0 %v315
    %v523 = vpop.f32.mrf.mxu0
    %v524 = vadd.f32 %v134, %v523
    %525 = vmatmul.f32.gmra.mxu0 %v318
    %v526 = vpop.f32.mrf.mxu0
    %v527 = vadd.f32 %v134, %v526
    %528 = vmatmul.f32.gmra.mxu0 %v321
    %v529 = vpop.f32.mrf.mxu0
    %v530 = vadd.f32 %v134, %v529
    %531 = vmatmul.f32.gmra.mxu0 %v324
    %v532 = vpop.f32.mrf.mxu0
    %v533 = vadd.f32 %v134, %v532
    %534 = vmatmul.f32.gmra.mxu0 %v327
    %v535 = vpop.f32.mrf.mxu0
    %v536 = vadd.f32 %v134, %v535
    %537 = vdwg.mxu0
    %v538 = vmax.f32 %v347, 0.0
    %v539 = vmax.f32 %v350, 0.0
    %v540 = vmax.f32 %v353, 0.0
    %v541 = vmax.f32 %v356, 0.0
    %v542 = vmax.f32 %v359, 0.0
    %v543 = vmax.f32 %v362, 0.0
    %v544 = vmax.f32 %v365, 0.0
    %v545 = vmax.f32 %v368, 0.0
    %v546 = vmax.f32 %v371, 0.0
    %v547 = vmax.f32 %v374, 0.0
    %v548 = vmax.f32 %v377, 0.0
    %v549 = vmax.f32 %v380, 0.0
    %v550 = vmax.f32 %v383, 0.0
    %v551 = vmax.f32 %v386, 0.0
    %v552 = vmax.f32 %v389, 0.0
    %v553 = vmax.f32 %v392, 0.0
    %v554 = vmax.f32 %v395, 0.0
    %v555 = vmax.f32 %v398, 0.0
    %v556 = vmax.f32 %v401, 0.0
    %v557 = vmax.f32 %v404, 0.0
    %v558 = vmax.f32 %v407, 0.0
    %v559 = vmax.f32 %v410, 0.0
    %v560 = vmax.f32 %v413, 0.0
    %v561 = vmax.f32 %v416, 0.0
    %v562 = vmax.f32 %v419, 0.0
    %v563 = vmax.f32 %v422, 0.0
    %v564 = vmax.f32 %v425, 0.0
    %v565 = vmax.f32 %v428, 0.0
    %v566 = vmax.f32 %v431, 0.0
    %v567 = vmax.f32 %v434, 0.0
    %v568 = vmax.f32 %v437, 0.0
    %v569 = vmax.f32 %v440, 0.0
    %v570 = vmax.f32 %v443, 0.0
    %v571 = vmax.f32 %v446, 0.0
    %v572 = vmax.f32 %v449, 0.0
    %v573 = vmax.f32 %v452, 0.0
    %v574 = vmax.f32 %v455, 0.0
    %v575 = vmax.f32 %v458, 0.0
    %v576 = vmax.f32 %v461, 0.0
    %v577 = vmax.f32 %v464, 0.0
    %v578 = vmax.f32 %v467, 0.0
    %v579 = vmax.f32 %v470, 0.0
    %v580 = vmax.f32 %v473, 0.0
    %v581 = vmax.f32 %v476, 0.0
    %v582 = vmax.f32 %v479, 0.0
    %v583 = vmax.f32 %v482, 0.0
    %v584 = vmax.f32 %v485, 0.0
    %v585 = vmax.f32 %v488, 0.0
    %v586 = vmax.f32 %v491, 0.0
    %v587 = vmax.f32 %v494, 0.0
    %v588 = vmax.f32 %v497, 0.0
    %v589 = vmax.f32 %v500, 0.0
    %v590 = vmax.f32 %v503, 0.0
    %v591 = vmax.f32 %v506, 0.0
    %v592 = vmax.f32 %v509, 0.0
    %v593 = vmax.f32 %v512, 0.0
    %v594 = vmax.f32 %v515, 0.0
    %v595 = vmax.f32 %v518, 0.0
    %v596 = vmax.f32 %v521, 0.0
    %v597 = vmax.f32 %v524, 0.0
    %v598 = vmax.f32 %v527, 0.0
    %v599 = vmax.f32 %v530, 0.0
    %v600 = vmax.f32 %v533, 0.0
    %v601 = vmax.f32 %v536, 0.0
    %v602 = vld [vmem:[%s11] sm:$0xff]
    %v603 = vld [vmem:[%s11 + $0x8] sm:$0xff]
    %v604 = vld [vmem:[%s11 + $0x10] sm:$0xff]
    %v605 = vld [vmem:[%s11 + $0x18] sm:$0xff]
    %v606 = vld [vmem:[%s11 + $0x20] sm:$0xff]
    %v607 = vld [vmem:[%s11 + $0x28] sm:$0xff]
    %v608 = vld [vmem:[%s11 + $0x30] sm:$0xff]
    %v609 = vld [vmem:[%s11 + $0x38] sm:$0xff]
    %v610 = vld [vmem:[%s11 + $0x40] sm:$0xff]
    %v611 = vld [vmem:[%s11 + $0x48] sm:$0xff]
    %v612 = vld [vmem:[%s11 + $0x50] sm:$0xff]
    %v613 = vld [vmem:[%s11 + $0x58] sm:$0xff]
    %v614 = vld [vmem:[%s11 + $0x60] sm:$0xff]
    %v615 = vld [vmem:[%s11 + $0x68] sm:$0xff]
    %v616 = vld [vmem:[%s11 + $0x70] sm:$0xff]
    %v617 = vld [vmem:[%s11 + $0x78] sm:$0xff]
    %v618 = vld [vmem:[%s11 + $0x80] sm:$0xff]
    %v619 = vld [vmem:[%s11 + $0x88] sm:$0xff]
    %v620 = vld [vmem:[%s11 + $0x90] sm:$0xff]
    %v621 = vld [vmem:[%s11 + $0x98] sm:$0xff]
    %v622 = vld [vmem:[%s11 + $0xa0] sm:$0xff]
    %v623 = vld [vmem:[%s11 + $0xa8] sm:$0xff]
    %v624 = vld [vmem:[%s11 + $0xb0] sm:$0xff]
    %v625 = vld [vmem:[%s11 + $0xb8] sm:$0xff]
    %v626 = vld [vmem:[%s11 + $0xc0] sm:$0xff]
    %v627 = vld [vmem:[%s11 + $0xc8] sm:$0xff]
    %v628 = vld [vmem:[%s11 + $0xd0] sm:$0xff]
    %v629 = vld [vmem:[%s11 + $0xd8] sm:$0xff]
    %v630 = vld [vmem:[%s11 + $0xe0] sm:$0xff]
    %v631 = vld [vmem:[%s11 + $0xe8] sm:$0xff]
    %v632 = vld [vmem:[%s11 + $0xf0] sm:$0xff]
    %v633 = vld [vmem:[%s11 + $0xf8] sm:$0xff]
    %v634 = vld [vmem:[%s11 + $0x100] sm:$0xff]
    %v635 = vld [vmem:[%s11 + $0x108] sm:$0xff]
    %v636 = vld [vmem:[%s11 + $0x110] sm:$0xff]
    %v637 = vld [vmem:[%s11 + $0x118] sm:$0xff]
    %v638 = vld [vmem:[%s11 + $0x120] sm:$0xff]
    %v639 = vld [vmem:[%s11 + $0x128] sm:$0xff]
    %v640 = vld [vmem:[%s11 + $0x130] sm:$0xff]
    %v641 = vld [vmem:[%s11 + $0x138] sm:$0xff]
    %v642 = vld [vmem:[%s11 + $0x140] sm:$0xff]
    %v643 = vld [vmem:[%s11 + $0x148] sm:$0xff]
    %v644 = vld [vmem:[%s11 + $0x150] sm:$0xff]
    %v645 = vld [vmem:[%s11 + $0x158] sm:$0xff]
    %v646 = vld [vmem:[%s11 + $0x160] sm:$0xff]
    %v647 = vld [vmem:[%s11 + $0x168] sm:$0xff]
    %v648 = vld [vmem:[%s11 + $0x170] sm:$0xff]
    %v649 = vld [vmem:[%s11 + $0x178] sm:$0xff]
    %v650 = vld [vmem:[%s11 + $0x180] sm:$0xff]
    %v651 = vld [vmem:[%s11 + $0x188] sm:$0xff]
    %v652 = vld [vmem:[%s11 + $0x190] sm:$0xff]
    %v653 = vld [vmem:[%s11 + $0x198] sm:$0xff]
    %v654 = vld [vmem:[%s11 + $0x1a0] sm:$0xff]
    %v655 = vld [vmem:[%s11 + $0x1a8] sm:$0xff]
    %v656 = vld [vmem:[%s11 + $0x1b0] sm:$0xff]
    %v657 = vld [vmem:[%s11 + $0x1b8] sm:$0xff]
    %v658 = vld [vmem:[%s11 + $0x1c0] sm:$0xff]
    %v659 = vld [vmem:[%s11 + $0x1c8] sm:$0xff]
    %v660 = vld [vmem:[%s11 + $0x1d0] sm:$0xff]
    %v661 = vld [vmem:[%s11 + $0x1d8] sm:$0xff]
    %v662 = vld [vmem:[%s11 + $0x1e0] sm:$0xff]
    %v663 = vld [vmem:[%s11 + $0x1e8] sm:$0xff]
    %v664 = vld [vmem:[%s11 + $0x1f0] sm:$0xff]
    %v665 = vld [vmem:[%s11 + $0x1f8] sm:$0xff]
    %666 = vmatpush.msra.mxu0 %v553
    %667 = vmatpush.msra.mxu0 %v552
    %668 = vmatpush.msra.mxu0 %v551
    %669 = vmatpush.msra.mxu0 %v550
    %670 = vmatpush.msra.mxu0 %v549
    %671 = vmatpush.msra.mxu0 %v548
    %672 = vmatpush.msra.mxu0 %v547
    %673 = vmatpush.msra.mxu0 %v546
    %674 = vmatpush.msra.mxu0 %v545
    %675 = vmatpush.msra.mxu0 %v544
    %676 = vmatpush.msra.mxu0 %v543
    %677 = vmatpush.msra.mxu0 %v542
    %678 = vmatpush.msra.mxu0 %v541
    %679 = vmatpush.msra.mxu0 %v540
    %680 = vmatpush.msra.mxu0 %v539
    %681 = vmatpush.msra.mxu0 %v538
    %682 = vmatmul.f32.gmra.mxu0 %v602
    %v683 = vpop.f32.mrf.mxu0
    %v684 = vadd.f32 0.0, %v683
    %685 = vmatmul.f32.gmra.mxu0 %v606
    %v686 = vpop.f32.mrf.mxu0
    %v687 = vadd.f32 0.0, %v686
    %688 = vmatmul.f32.gmra.mxu0 %v610
    %v689 = vpop.f32.mrf.mxu0
    %v690 = vadd.f32 0.0, %v689
    %691 = vmatmul.f32.gmra.mxu0 %v614
    %v692 = vpop.f32.mrf.mxu0
    %v693 = vadd.f32 0.0, %v692
    %694 = vmatmul.f32.gmra.mxu0 %v618
    %v695 = vpop.f32.mrf.mxu0
    %v696 = vadd.f32 0.0, %v695
    %697 = vmatmul.f32.gmra.mxu0 %v622
    %v698 = vpop.f32.mrf.mxu0
    %v699 = vadd.f32 0.0, %v698
    %700 = vmatmul.f32.gmra.mxu0 %v626
    %v701 = vpop.f32.mrf.mxu0
    %v702 = vadd.f32 0.0, %v701
    %703 = vmatmul.f32.gmra.mxu0 %v630
    %v704 = vpop.f32.mrf.mxu0
    %v705 = vadd.f32 0.0, %v704
    %706 = vmatmul.f32.gmra.mxu0 %v634
    %v707 = vpop.f32.mrf.mxu0
    %v708 = vadd.f32 0.0, %v707
    %709 = vmatmul.f32.gmra.mxu0 %v638
    %v710 = vpop.f32.mrf.mxu0
    %v711 = vadd.f32 0.0, %v710
    %712 = vmatmul.f32.gmra.mxu0 %v642
    %v713 = vpop.f32.mrf.mxu0
    %v714 = vadd.f32 0.0, %v713
    %715 = vmatmul.f32.gmra.mxu0 %v646
    %v716 = vpop.f32.mrf.mxu0
    %v717 = vadd.f32 0.0, %v716
    %718 = vmatmul.f32.gmra.mxu0 %v650
    %v719 = vpop.f32.mrf.mxu0
    %v720 = vadd.f32 0.0, %v719
    %721 = vmatmul.f32.gmra.mxu0 %v654
    %v722 = vpop.f32.mrf.mxu0
    %v723 = vadd.f32 0.0, %v722
    %724 = vmatmul.f32.gmra.mxu0 %v658
    %v725 = vpop.f32.mrf.mxu0
    %v726 = vadd.f32 0.0, %v725
    %727 = vmatmul.f32.gmra.mxu0 %v662
    %v728 = vpop.f32.mrf.mxu0
    %v729 = vadd.f32 0.0, %v728
    %730 = vdwg.mxu0
    %731 = vmatpush.msra.mxu0 %v569
    %732 = vmatpush.msra.mxu0 %v568
    %733 = vmatpush.msra.mxu0 %v567
    %734 = vmatpush.msra.mxu0 %v566
    %735 = vmatpush.msra.mxu0 %v565
    %736 = vmatpush.msra.mxu0 %v564
    %737 = vmatpush.msra.mxu0 %v563
    %738 = vmatpush.msra.mxu0 %v562
    %739 = vmatpush.msra.mxu0 %v561
    %740 = vmatpush.msra.mxu0 %v560
    %741 = vmatpush.msra.mxu0 %v559
    %742 = vmatpush.msra.mxu0 %v558
    %743 = vmatpush.msra.mxu0 %v557
    %744 = vmatpush.msra.mxu0 %v556
    %745 = vmatpush.msra.mxu0 %v555
    %746 = vmatpush.msra.mxu0 %v554
    %747 = vmatmul.f32.gmra.mxu0 %v603
    %v748 = vpop.f32.mrf.mxu0
    %v749 = vadd.f32 %v684, %v748
    %750 = vmatmul.f32.gmra.mxu0 %v607
    %v751 = vpop.f32.mrf.mxu0
    %v752 = vadd.f32 %v687, %v751
    %753 = vmatmul.f32.gmra.mxu0 %v611
    %v754 = vpop.f32.mrf.mxu0
    %v755 = vadd.f32 %v690, %v754
    %756 = vmatmul.f32.gmra.mxu0 %v615
    %v757 = vpop.f32.mrf.mxu0
    %v758 = vadd.f32 %v693, %v757
    %759 = vmatmul.f32.gmra.mxu0 %v619
    %v760 = vpop.f32.mrf.mxu0
    %v761 = vadd.f32 %v696, %v760
    %762 = vmatmul.f32.gmra.mxu0 %v623
    %v763 = vpop.f32.mrf.mxu0
    %v764 = vadd.f32 %v699, %v763
    %765 = vmatmul.f32.gmra.mxu0 %v627
    %v766 = vpop.f32.mrf.mxu0
    %v767 = vadd.f32 %v702, %v766
    %768 = vmatmul.f32.gmra.mxu0 %v631
    %v769 = vpop.f32.mrf.mxu0
    %v770 = vadd.f32 %v705, %v769
    %771 = vmatmul.f32.gmra.mxu0 %v635
    %v772 = vpop.f32.mrf.mxu0
    %v773 = vadd.f32 %v708, %v772
    %774 = vmatmul.f32.gmra.mxu0 %v639
    %v775 = vpop.f32.mrf.mxu0
    %v776 = vadd.f32 %v711, %v775
    %777 = vmatmul.f32.gmra.mxu0 %v643
    %v778 = vpop.f32.mrf.mxu0
    %v779 = vadd.f32 %v714, %v778
    %780 = vmatmul.f32.gmra.mxu0 %v647
    %v781 = vpop.f32.mrf.mxu0
    %v782 = vadd.f32 %v717, %v781
    %783 = vmatmul.f32.gmra.mxu0 %v651
    %v784 = vpop.f32.mrf.mxu0
    %v785 = vadd.f32 %v720, %v784
    %786 = vmatmul.f32.gmra.mxu0 %v655
    %v787 = vpop.f32.mrf.mxu0
    %v788 = vadd.f32 %v723, %v787
    %789 = vmatmul.f32.gmra.mxu0 %v659
    %v790 = vpop.f32.mrf.mxu0
    %v791 = vadd.f32 %v726, %v790
    %792 = vmatmul.f32.gmra.mxu0 %v663
    %v793 = vpop.f32.mrf.mxu0
    %v794 = vadd.f32 %v729, %v793
    %795 = vdwg.mxu0
    %796 = vmatpush.msra.mxu0 %v585
    %797 = vmatpush.msra.mxu0 %v584
    %798 = vmatpush.msra.mxu0 %v583
    %799 = vmatpush.msra.mxu0 %v582
    %800 = vmatpush.msra.mxu0 %v581
    %801 = vmatpush.msra.mxu0 %v580
    %802 = vmatpush.msra.mxu0 %v579
    %803 = vmatpush.msra.mxu0 %v578
    %804 = vmatpush.msra.mxu0 %v577
    %805 = vmatpush.msra.mxu0 %v576
    %806 = vmatpush.msra.mxu0 %v575
    %807 = vmatpush.msra.mxu0 %v574
    %808 = vmatpush.msra.mxu0 %v573
    %809 = vmatpush.msra.mxu0 %v572
    %810 = vmatpush.msra.mxu0 %v571
    %811 = vmatpush.msra.mxu0 %v570
    %812 = vmatmul.f32.gmra.mxu0 %v604
    %v813 = vpop.f32.mrf.mxu0
    %v814 = vadd.f32 %v749, %v813
    %815 = vmatmul.f32.gmra.mxu0 %v608
    %v816 = vpop.f32.mrf.mxu0
    %v817 = vadd.f32 %v752, %v816
    %818 = vmatmul.f32.gmra.mxu0 %v612
    %v819 = vpop.f32.mrf.mxu0
    %v820 = vadd.f32 %v755, %v819
    %821 = vmatmul.f32.gmra.mxu0 %v616
    %v822 = vpop.f32.mrf.mxu0
    %v823 = vadd.f32 %v758, %v822
    %824 = vmatmul.f32.gmra.mxu0 %v620
    %v825 = vpop.f32.mrf.mxu0
    %v826 = vadd.f32 %v761, %v825
    %827 = vmatmul.f32.gmra.mxu0 %v624
    %v828 = vpop.f32.mrf.mxu0
    %v829 = vadd.f32 %v764, %v828
    %830 = vmatmul.f32.gmra.mxu0 %v628
    %v831 = vpop.f32.mrf.mxu0
    %v832 = vadd.f32 %v767, %v831
    %833 = vmatmul.f32.gmra.mxu0 %v632
    %v834 = vpop.f32.mrf.mxu0
    %v835 = vadd.f32 %v770, %v834
    %836 = vmatmul.f32.gmra.mxu0 %v636
    %v837 = vpop.f32.mrf.mxu0
    %v838 = vadd.f32 %v773, %v837
    %839 = vmatmul.f32.gmra.mxu0 %v640
    %v840 = vpop.f32.mrf.mxu0
    %v841 = vadd.f32 %v776, %v840
    %842 = vmatmul.f32.gmra.mxu0 %v644
    %v843 = vpop.f32.mrf.mxu0
    %v844 = vadd.f32 %v779, %v843
    %845 = vmatmul.f32.gmra.mxu0 %v648
    %v846 = vpop.f32.mrf.mxu0
    %v847 = vadd.f32 %v782, %v846
    %848 = vmatmul.f32.gmra.mxu0 %v652
    %v849 = vpop.f32.mrf.mxu0
    %v850 = vadd.f32 %v785, %v849
    %851 = vmatmul.f32.gmra.mxu0 %v656
    %v852 = vpop.f32.mrf.mxu0
    %v853 = vadd.f32 %v788, %v852
    %854 = vmatmul.f32.gmra.mxu0 %v660
    %v855 = vpop.f32.mrf.mxu0
    %v856 = vadd.f32 %v791, %v855
    %857 = vmatmul.f32.gmra.mxu0 %v664
    %v858 = vpop.f32.mrf.mxu0
    %v859 = vadd.f32 %v794, %v858
    %860 = vdwg.mxu0
    %861 = vmatpush.msra.mxu0 %v601
    %862 = vmatpush.msra.mxu0 %v600
    %863 = vmatpush.msra.mxu0 %v599
    %864 = vmatpush.msra.mxu0 %v598
    %865 = vmatpush.msra.mxu0 %v597
    %866 = vmatpush.msra.mxu0 %v596
    %867 = vmatpush.msra.mxu0 %v595
    %868 = vmatpush.msra.mxu0 %v594
    %869 = vmatpush.msra.mxu0 %v593
    %870 = vmatpush.msra.mxu0 %v592
    %871 = vmatpush.msra.mxu0 %v591
    %872 = vmatpush.msra.mxu0 %v590
    %873 = vmatpush.msra.mxu0 %v589
    %874 = vmatpush.msra.mxu0 %v588
    %875 = vmatpush.msra.mxu0 %v587
    %876 = vmatpush.msra.mxu0 %v586
    %877 = vmatmul.f32.gmra.mxu0 %v605
    %v878 = vpop.f32.mrf.mxu0
    %v879 = vadd.f32 %v814, %v878
    %880 = vmatmul.f32.gmra.mxu0 %v609
    %v881 = vpop.f32.mrf.mxu0
    %v882 = vadd.f32 %v817, %v881
    %883 = vmatmul.f32.gmra.mxu0 %v613
    %v884 = vpop.f32.mrf.mxu0
    %v885 = vadd.f32 %v820, %v884
    %886 = vmatmul.f32.gmra.mxu0 %v617
    %v887 = vpop.f32.mrf.mxu0
    %v888 = vadd.f32 %v823, %v887
    %889 = vmatmul.f32.gmra.mxu0 %v621
    %v890 = vpop.f32.mrf.mxu0
    %v891 = vadd.f32 %v826, %v890
    %892 = vmatmul.f32.gmra.mxu0 %v625
    %v893 = vpop.f32.mrf.mxu0
    %v894 = vadd.f32 %v829, %v893
    %895 = vmatmul.f32.gmra.mxu0 %v629
    %v896 = vpop.f32.mrf.mxu0
    %v897 = vadd.f32 %v832, %v896
    %898 = vmatmul.f32.gmra.mxu0 %v633
    %v899 = vpop.f32.mrf.mxu0
    %v900 = vadd.f32 %v835, %v899
    %901 = vmatmul.f32.gmra.mxu0 %v637
    %v902 = vpop.f32.mrf.mxu0
    %v903 = vadd.f32 %v838, %v902
    %904 = vmatmul.f32.gmra.mxu0 %v641
    %v905 = vpop.f32.mrf.mxu0
    %v906 = vadd.f32 %v841, %v905
    %907 = vmatmul.f32.gmra.mxu0 %v645
    %v908 = vpop.f32.mrf.mxu0
    %v909 = vadd.f32 %v844, %v908
    %910 = vmatmul.f32.gmra.mxu0 %v649
    %v911 = vpop.f32.mrf.mxu0
    %v912 = vadd.f32 %v847, %v911
    %913 = vmatmul.f32.gmra.mxu0 %v653
    %v914 = vpop.f32.mrf.mxu0
    %v915 = vadd.f32 %v850, %v914
    %916 = vmatmul.f32.gmra.mxu0 %v657
    %v917 = vpop.f32.mrf.mxu0
    %v918 = vadd.f32 %v853, %v917
    %919 = vmatmul.f32.gmra.mxu0 %v661
    %v920 = vpop.f32.mrf.mxu0
    %v921 = vadd.f32 %v856, %v920
    %922 = vmatmul.f32.gmra.mxu0 %v665
    %v923 = vpop.f32.mrf.mxu0
    %v924 = vadd.f32 %v859, %v923
    %925 = vdwg.mxu0
    %v926 = vld [vmem:[%s3] sm:$0xff]
    %v927 = vld [vmem:[%s3 + $0x8] sm:$0xff]
    %v928 = vld [vmem:[%s4] sm:$0x1]
    %v930 = vperm.slane %v928, 0
    %v933 = vsel %vm136, %v879, 0
    %v936 = vsel %vm136, %v882, 0
    %v939 = vsel %vm136, %v885, 0
    %v942 = vsel %vm136, %v888, 0
    %v945 = vsel %vm136, %v891, 0
    %v948 = vsel %vm136, %v894, 0
    %v951 = vsel %vm136, %v897, 0
    %v954 = vsel %vm136, %v900, 0
    %v957 = vsel %vm136, %v903, 0
    %v960 = vsel %vm136, %v906, 0
    %v963 = vsel %vm136, %v909, 0
    %v966 = vsel %vm136, %v912, 0
    %v969 = vsel %vm136, %v915, 0
    %v972 = vsel %vm136, %v918, 0
    %v975 = vsel %vm136, %v921, 0
    %v978 = vsel %vm136, %v924, 0
    %980 = vmatpush.msra.mxu0 0.0
    %981 = vmatpush.msra.mxu0 0.0
    %982 = vmatpush.msra.mxu0 0.0
    %983 = vmatpush.msra.mxu0 0.0
    %984 = vmatpush.msra.mxu0 0.0
    %985 = vmatpush.msra.mxu0 0.0
    %986 = vmatpush.msra.mxu0 0.0
    %987 = vmatpush.msra.mxu0 0.0
    %988 = vmatpush.msra.mxu0 0.0
    %989 = vmatpush.msra.mxu0 0.0
    %990 = vmatpush.msra.mxu0 0.0
    %991 = vmatpush.msra.mxu0 0.0
    %992 = vmatpush.msra.mxu0 0.0
    %993 = vmatpush.msra.mxu0 0.0
    %994 = vmatpush.msra.mxu0 %v927
    %995 = vmatpush.msra.mxu0 %v926
    %996 = vmatmul.f32.gmra.mxu0 %v933
    %v997 = vpop.f32.mrf.mxu0
    %v998 = vadd.f32 %v930, %v997
    %999 = vmatmul.f32.gmra.mxu0 %v936
    %v1000 = vpop.f32.mrf.mxu0
    %v1001 = vadd.f32 %v930, %v1000
    %1002 = vmatmul.f32.gmra.mxu0 %v939
    %v1003 = vpop.f32.mrf.mxu0
    %v1004 = vadd.f32 %v930, %v1003
    %1005 = vmatmul.f32.gmra.mxu0 %v942
    %v1006 = vpop.f32.mrf.mxu0
    %v1007 = vadd.f32 %v930, %v1006
    %1008 = vmatmul.f32.gmra.mxu0 %v945
    %v1009 = vpop.f32.mrf.mxu0
    %v1010 = vadd.f32 %v930, %v1009
    %1011 = vmatmul.f32.gmra.mxu0 %v948
    %v1012 = vpop.f32.mrf.mxu0
    %v1013 = vadd.f32 %v930, %v1012
    %1014 = vmatmul.f32.gmra.mxu0 %v951
    %v1015 = vpop.f32.mrf.mxu0
    %v1016 = vadd.f32 %v930, %v1015
    %1017 = vmatmul.f32.gmra.mxu0 %v954
    %v1018 = vpop.f32.mrf.mxu0
    %v1019 = vadd.f32 %v930, %v1018
    %1020 = vmatmul.f32.gmra.mxu0 %v957
    %v1021 = vpop.f32.mrf.mxu0
    %v1022 = vadd.f32 %v930, %v1021
    %1023 = vmatmul.f32.gmra.mxu0 %v960
    %v1024 = vpop.f32.mrf.mxu0
    %v1025 = vadd.f32 %v930, %v1024
    %1026 = vmatmul.f32.gmra.mxu0 %v963
    %v1027 = vpop.f32.mrf.mxu0
    %v1028 = vadd.f32 %v930, %v1027
    %1029 = vmatmul.f32.gmra.mxu0 %v966
    %v1030 = vpop.f32.mrf.mxu0
    %v1031 = vadd.f32 %v930, %v1030
    %1032 = vmatmul.f32.gmra.mxu0 %v969
    %v1033 = vpop.f32.mrf.mxu0
    %v1034 = vadd.f32 %v930, %v1033
    %1035 = vmatmul.f32.gmra.mxu0 %v972
    %v1036 = vpop.f32.mrf.mxu0
    %v1037 = vadd.f32 %v930, %v1036
    %1038 = vmatmul.f32.gmra.mxu0 %v975
    %v1039 = vpop.f32.mrf.mxu0
    %v1040 = vadd.f32 %v930, %v1039
    %1041 = vmatmul.f32.gmra.mxu0 %v978
    %v1042 = vpop.f32.mrf.mxu0
    %v1043 = vadd.f32 %v930, %v1042
    %1044 = vdwg.mxu0
    %v1045 = vmax.f32 %v998, 0.0
    %v1046 = vmax.f32 %v1001, 0.0
    %v1047 = vmax.f32 %v1004, 0.0
    %v1048 = vmax.f32 %v1007, 0.0
    %v1049 = vmax.f32 %v1010, 0.0
    %v1050 = vmax.f32 %v1013, 0.0
    %v1051 = vmax.f32 %v1016, 0.0
    %v1052 = vmax.f32 %v1019, 0.0
    %v1053 = vmax.f32 %v1022, 0.0
    %v1054 = vmax.f32 %v1025, 0.0
    %v1055 = vmax.f32 %v1028, 0.0
    %v1056 = vmax.f32 %v1031, 0.0
    %v1057 = vmax.f32 %v1034, 0.0
    %v1058 = vmax.f32 %v1037, 0.0
    %v1059 = vmax.f32 %v1040, 0.0
    %v1060 = vmax.f32 %v1043, 0.0
    %v1061 = vld [vmem:[%s5] sm:$0xff]
    %v1062 = vld [vmem:[%s5 + $0x8] sm:$0xff]
    %v1063 = vld [vmem:[%s5 + $0x10] sm:$0xff]
    %v1064 = vld [vmem:[%s6] sm:$0x1]
    %v1066 = vperm.slane %v1064, 0
    %vm1068 = vcmask 195584
    %v1070 = vsel %vm1068, %v1045, 0
    %v1073 = vsel %vm1068, %v1046, 0
    %v1076 = vsel %vm1068, %v1047, 0
    %v1079 = vsel %vm1068, %v1048, 0
    %v1082 = vsel %vm1068, %v1049, 0
    %v1085 = vsel %vm1068, %v1050, 0
    %v1088 = vsel %vm1068, %v1051, 0
    %v1091 = vsel %vm1068, %v1052, 0
    %v1094 = vsel %vm1068, %v1053, 0
    %v1097 = vsel %vm1068, %v1054, 0
    %v1100 = vsel %vm1068, %v1055, 0
    %v1103 = vsel %vm1068, %v1056, 0
    %v1106 = vsel %vm1068, %v1057, 0
    %v1109 = vsel %vm1068, %v1058, 0
    %v1112 = vsel %vm1068, %v1059, 0
    %v1115 = vsel %vm1068, %v1060, 0
    %1117 = vmatpush.msra.mxu0 0.0
    %1118 = vmatpush.msra.mxu0 0.0
    %1119 = vmatpush.msra.mxu0 0.0
    %1120 = vmatpush.msra.mxu0 0.0
    %1121 = vmatpush.msra.mxu0 0.0
    %1122 = vmatpush.msra.mxu0 0.0
    %1123 = vmatpush.msra.mxu0 0.0
    %1124 = vmatpush.msra.mxu0 0.0
    %1125 = vmatpush.msra.mxu0 0.0
    %1126 = vmatpush.msra.mxu0 0.0
    %1127 = vmatpush.msra.mxu0 0.0
    %1128 = vmatpush.msra.mxu0 0.0
    %1129 = vmatpush.msra.mxu0 0.0
    %1130 = vmatpush.msra.mxu0 %v1063
    %1131 = vmatpush.msra.mxu0 %v1062
    %1132 = vmatpush.msra.mxu0 %v1061
    %1133 = vmatmul.f32.gmra.mxu0 %v1070
    %v1134 = vpop.f32.mrf.mxu0
    %v1135 = vadd.f32 %v1066, %v1134
    %1136 = vmatmul.f32.gmra.mxu0 %v1073
    %v1137 = vpop.f32.mrf.mxu0
    %v1138 = vadd.f32 %v1066, %v1137
    %1139 = vmatmul.f32.gmra.mxu0 %v1076
    %v1140 = vpop.f32.mrf.mxu0
    %v1141 = vadd.f32 %v1066, %v1140
    %1142 = vmatmul.f32.gmra.mxu0 %v1079
    %v1143 = vpop.f32.mrf.mxu0
    %v1144 = vadd.f32 %v1066, %v1143
    %1145 = vmatmul.f32.gmra.mxu0 %v1082
    %v1146 = vpop.f32.mrf.mxu0
    %v1147 = vadd.f32 %v1066, %v1146
    %1148 = vmatmul.f32.gmra.mxu0 %v1085
    %v1149 = vpop.f32.mrf.mxu0
    %v1150 = vadd.f32 %v1066, %v1149
    %1151 = vmatmul.f32.gmra.mxu0 %v1088
    %v1152 = vpop.f32.mrf.mxu0
    %v1153 = vadd.f32 %v1066, %v1152
    %1154 = vmatmul.f32.gmra.mxu0 %v1091
    %v1155 = vpop.f32.mrf.mxu0
    %v1156 = vadd.f32 %v1066, %v1155
    %1157 = vmatmul.f32.gmra.mxu0 %v1094
    %v1158 = vpop.f32.mrf.mxu0
    %v1159 = vadd.f32 %v1066, %v1158
    %1160 = vmatmul.f32.gmra.mxu0 %v1097
    %v1161 = vpop.f32.mrf.mxu0
    %v1162 = vadd.f32 %v1066, %v1161
    %1163 = vmatmul.f32.gmra.mxu0 %v1100
    %v1164 = vpop.f32.mrf.mxu0
    %v1165 = vadd.f32 %v1066, %v1164
    %1166 = vmatmul.f32.gmra.mxu0 %v1103
    %v1167 = vpop.f32.mrf.mxu0
    %v1168 = vadd.f32 %v1066, %v1167
    %1169 = vmatmul.f32.gmra.mxu0 %v1106
    %v1170 = vpop.f32.mrf.mxu0
    %v1171 = vadd.f32 %v1066, %v1170
    %1172 = vmatmul.f32.gmra.mxu0 %v1109
    %v1173 = vpop.f32.mrf.mxu0
    %v1174 = vadd.f32 %v1066, %v1173
    %1175 = vmatmul.f32.gmra.mxu0 %v1112
    %v1176 = vpop.f32.mrf.mxu0
    %v1177 = vadd.f32 %v1066, %v1176
    %1178 = vmatmul.f32.gmra.mxu0 %v1115
    %v1179 = vpop.f32.mrf.mxu0
    %v1180 = vadd.f32 %v1066, %v1179
    %1181 = vdwg.mxu0
    %v1182 = vmax.f32 %v1135, 0.0
    %v1183 = vmax.f32 %v1138, 0.0
    %v1184 = vmax.f32 %v1141, 0.0
    %v1185 = vmax.f32 %v1144, 0.0
    %v1186 = vmax.f32 %v1147, 0.0
    %v1187 = vmax.f32 %v1150, 0.0
    %v1188 = vmax.f32 %v1153, 0.0
    %v1189 = vmax.f32 %v1156, 0.0
    %v1190 = vmax.f32 %v1159, 0.0
    %v1191 = vmax.f32 %v1162, 0.0
    %v1192 = vmax.f32 %v1165, 0.0
    %v1193 = vmax.f32 %v1168, 0.0
    %v1194 = vmax.f32 %v1171, 0.0
    %v1195 = vmax.f32 %v1174, 0.0
    %v1196 = vmax.f32 %v1177, 0.0
    %v1197 = vmax.f32 %v1180, 0.0
    %v1198 = vld [vmem:[%s12] sm:$0xff]
    %v1199 = vld [vmem:[%s12 + $0x8] sm:$0xff]
    %v1200 = vld [vmem:[%s12 + $0x10] sm:$0xff]
    %v1201 = vld [vmem:[%s12 + $0x18] sm:$0xff]
    %1202 = vmatpush.msra.mxu0 %v1197
    %1203 = vmatpush.msra.mxu0 %v1196
    %1204 = vmatpush.msra.mxu0 %v1195
    %1205 = vmatpush.msra.mxu0 %v1194
    %1206 = vmatpush.msra.mxu0 %v1193
    %1207 = vmatpush.msra.mxu0 %v1192
    %1208 = vmatpush.msra.mxu0 %v1191
    %1209 = vmatpush.msra.mxu0 %v1190
    %1210 = vmatpush.msra.mxu0 %v1189
    %1211 = vmatpush.msra.mxu0 %v1188
    %1212 = vmatpush.msra.mxu0 %v1187
    %1213 = vmatpush.msra.mxu0 %v1186
    %1214 = vmatpush.msra.mxu0 %v1185
    %1215 = vmatpush.msra.mxu0 %v1184
    %1216 = vmatpush.msra.mxu0 %v1183
    %1217 = vmatpush.msra.mxu0 %v1182
    %1218 = vmatmul.f32.gmra.mxu0 %v1198
    %v1219 = vpop.f32.mrf.mxu0
    %v1220 = vadd.f32 0.0, %v1219
    %1221 = vmatmul.f32.gmra.mxu0 %v1199
    %v1222 = vpop.f32.mrf.mxu0
    %v1223 = vadd.f32 0.0, %v1222
    %1224 = vmatmul.f32.gmra.mxu0 %v1200
    %v1225 = vpop.f32.mrf.mxu0
    %v1226 = vadd.f32 0.0, %v1225
    %1227 = vmatmul.f32.gmra.mxu0 %v1201
    %v1228 = vpop.f32.mrf.mxu0
    %v1229 = vadd.f32 0.0, %v1228
    %1230 = vdwg.mxu0
    %v1231 = vld [vmem:[%s7] sm:$0xff]
    %v1232 = vld [vmem:[%s7 + $0x8] sm:$0xff]
    %v1233 = vld [vmem:[%s7 + $0x10] sm:$0xff]
    %v1234 = vld [vmem:[%s8] sm:$0x1]
    %v1236 = vperm.slane %v1234, 0
    %v1239 = vsel %vm1068, %v1220, 0
    %v1242 = vsel %vm1068, %v1223, 0
    %v1245 = vsel %vm1068, %v1226, 0
    %v1248 = vsel %vm1068, %v1229, 0
    %1250 = vmatpush.msra.mxu0 0.0
    %1251 = vmatpush.msra.mxu0 0.0
    %1252 = vmatpush.msra.mxu0 0.0
    %1253 = vmatpush.msra.mxu0 0.0
    %1254 = vmatpush.msra.mxu0 0.0
    %1255 = vmatpush.msra.mxu0 0.0
    %1256 = vmatpush.msra.mxu0 0.0
    %1257 = vmatpush.msra.mxu0 0.0
    %1258 = vmatpush.msra.mxu0 0.0
    %1259 = vmatpush.msra.mxu0 0.0
    %1260 = vmatpush.msra.mxu0 0.0
    %1261 = vmatpush.msra.mxu0 0.0
    %1262 = vmatpush.msra.mxu0 0.0
    %1263 = vmatpush.msra.mxu0 %v1233
    %1264 = vmatpush.msra.mxu0 %v1232
    %1265 = vmatpush.msra.mxu0 %v1231
    %1266 = vmatmul.f32.gmra.mxu0 %v1239
    %v1267 = vpop.f32.mrf.mxu0
    %v1268 = vadd.f32 %v1236, %v1267
    %1269 = vmatmul.f32.gmra.mxu0 %v1242
    %v1270 = vpop.f32.mrf.mxu0
    %v1271 = vadd.f32 %v1236, %v1270
    %1272 = vmatmul.f32.gmra.mxu0 %v1245
    %v1273 = vpop.f32.mrf.mxu0
    %v1274 = vadd.f32 %v1236, %v1273
    %1275 = vmatmul.f32.gmra.mxu0 %v1248
    %v1276 = vpop.f32.mrf.mxu0
    %v1277 = vadd.f32 %v1236, %v1276
    %1278 = vdwg.mxu0
    %v1279 = vmax.f32 %v1268, 0.0
    %v1280 = vmax.f32 %v1271, 0.0
    %v1281 = vmax.f32 %v1274, 0.0
    %v1282 = vmax.f32 %v1277, 0.0
    %v1283 = vld [vmem:[%s9] sm:$0xff]
    %v1284 = vld [vmem:[%s9 + $0x8] sm:$0xff]
    %v1285 = vld [vmem:[%s9 + $0x10] sm:$0xff]
    %v1286 = vld [vmem:[%s9 + $0x18] sm:$0xff]
    %v1287 = vld [vmem:[%s10] sm:$0x1]
    %v1289 = vperm.slane %v1287, 0
    %vm1291 = vcmask 261120
    %v1293 = vsel %vm1291, %v1279, 0
    %v1296 = vsel %vm1291, %v1280, 0
    %v1299 = vsel %vm1291, %v1281, 0
    %v1302 = vsel %vm1291, %v1282, 0
    %1304 = vmatpush.msra.mxu0 0.0
    %1305 = vmatpush.msra.mxu0 0.0
    %1306 = vmatpush.msra.mxu0 0.0
    %1307 = vmatpush.msra.mxu0 0.0
    %1308 = vmatpush.msra.mxu0 0.0
    %1309 = vmatpush.msra.mxu0 0.0
    %1310 = vmatpush.msra.mxu0 0.0
    %1311 = vmatpush.msra.mxu0 0.0
    %1312 = vmatpush.msra.mxu0 0.0
    %1313 = vmatpush.msra.mxu0 0.0
    %1314 = vmatpush.msra.mxu0 0.0
    %1315 = vmatpush.msra.mxu0 0.0
    %1316 = vmatpush.msra.mxu0 %v1286
    %1317 = vmatpush.msra.mxu0 %v1285
    %1318 = vmatpush.msra.mxu0 %v1284
    %1319 = vmatpush.msra.mxu0 %v1283
    %1320 = vmatmul.f32.gmra.mxu0 %v1293
    %v1321 = vpop.f32.mrf.mxu0
    %v1322 = vadd.f32 %v1289, %v1321
    %1323 = vmatmul.f32.gmra.mxu0 %v1296
    %v1324 = vpop.f32.mrf.mxu0
    %v1325 = vadd.f32 %v1289, %v1324
    %1326 = vmatmul.f32.gmra.mxu0 %v1299
    %v1327 = vpop.f32.mrf.mxu0
    %v1328 = vadd.f32 %v1289, %v1327
    %1329 = vmatmul.f32.gmra.mxu0 %v1302
    %v1330 = vpop.f32.mrf.mxu0
    %v1331 = vadd.f32 %v1289, %v1330
    %1332 = vdwg.mxu0
    %v1333 = vmax.f32 %v1322, 0.0
    %v1334 = vmax.f32 %v1325, 0.0
    %v1335 = vmax.f32 %v1328, 0.0
    %v1336 = vmax.f32 %v1331, 0.0
    %v1337 = vld [vmem:[%s13] sm:$0x3]
    %v1339 = vsel %vm1291, %v1337, 0
    %1341 = vmatpush.msra.mxu0 0.0
    %1342 = vmatpush.msra.mxu0 0.0
    %1343 = vmatpush.msra.mxu0 0.0
    %1344 = vmatpush.msra.mxu0 0.0
    %1345 = vmatpush.msra.mxu0 0.0
    %1346 = vmatpush.msra.mxu0 0.0
    %1347 = vmatpush.msra.mxu0 0.0
    %1348 = vmatpush.msra.mxu0 0.0
    %1349 = vmatpush.msra.mxu0 0.0
    %1350 = vmatpush.msra.mxu0 0.0
    %1351 = vmatpush.msra.mxu0 0.0
    %1352 = vmatpush.msra.mxu0 0.0
    %1353 = vmatpush.msra.mxu0 %v1336
    %1354 = vmatpush.msra.mxu0 %v1335
    %1355 = vmatpush.msra.mxu0 %v1334
    %1356 = vmatpush.msra.mxu0 %v1333
    %1357 = vmatmul.f32.gmra.mxu0 %v1339
    %v1358 = vpop.f32.mrf.mxu0
    %v1359 = vadd.f32 0.0, %v1358
    %1360 = vdwg.mxu0
    %v1361 = vld [vmem:[%s14] sm:$0xff]
    %v1362 = vld [vmem:[%s14 + $0x8] sm:$0xff]
    %v1363 = vld [vmem:[%s14 + $0x10] sm:$0xff]
    %v1364 = vld [vmem:[%s14 + $0x18] sm:$0xff]
    %v1365 = vld [vmem:[%s14 + $0x20] sm:$0xff]
    %v1366 = vld [vmem:[%s14 + $0x28] sm:$0xff]
    %v1367 = vld [vmem:[%s14 + $0x30] sm:$0xff]
    %v1368 = vld [vmem:[%s14 + $0x38] sm:$0xff]
    %v1369 = vld [vmem:[%s15] sm:$0x1]
    %v1371 = vperm.slane %v1369, 0
    %vm1373 = vcmask 523264
    %v1375 = vsel %vm1373, %v1359, 0
    %1377 = vmatpush.msra.mxu0 0.0
    %1378 = vmatpush.msra.mxu0 0.0
    %1379 = vmatpush.msra.mxu0 0.0
    %1380 = vmatpush.msra.mxu0 0.0
    %1381 = vmatpush.msra.mxu0 0.0
    %1382 = vmatpush.msra.mxu0 0.0
    %1383 = vmatpush.msra.mxu0 0.0
    %1384 = vmatpush.msra.mxu0 0.0
    %1385 = vmatpush.msra.mxu0 %v1368
    %1386 = vmatpush.msra.mxu0 %v1367
    %1387 = vmatpush.msra.mxu0 %v1366
    %1388 = vmatpush.msra.mxu0 %v1365
    %1389 = vmatpush.msra.mxu0 %v1364
    %1390 = vmatpush.msra.mxu0 %v1363
    %1391 = vmatpush.msra.mxu0 %v1362
    %1392 = vmatpush.msra.mxu0 %v1361
    %1393 = vmatmul.f32.gmra.mxu0 %v1375
    %v1394 = vpop.f32.mrf.mxu0
    %v1395 = vadd.f32 %v1371, %v1394
    %1396 = vdwg.mxu0
    %v1397 = vmax.f32 %v1395, 0.0
    %v1398 = vld [vmem:[%s16] sm:$0xff]
    %v1399 = vld [vmem:[%s16 + $0x8] sm:$0xff]
    %v1400 = vld [vmem:[%s16 + $0x10] sm:$0xff]
    %v1401 = vld [vmem:[%s16 + $0x18] sm:$0xff]
    %v1402 = vld [vmem:[%s16 + $0x20] sm:$0xff]
    %v1403 = vld [vmem:[%s16 + $0x28] sm:$0xff]
    %v1404 = vld [vmem:[%s16 + $0x30] sm:$0xff]
    %v1405 = vld [vmem:[%s16 + $0x38] sm:$0xff]
    %v1406 = vld [vmem:[%s17] sm:$0x1]
    %v1408 = vperm.slane %v1406, 0
    %v1411 = vsel %vm1373, %v1397, 0
    %1413 = vmatpush.msra.mxu0 0.0
    %1414 = vmatpush.msra.mxu0 0.0
    %1415 = vmatpush.msra.mxu0 0.0
    %1416 = vmatpush.msra.mxu0 0.0
    %1417 = vmatpush.msra.mxu0 0.0
    %1418 = vmatpush.msra.mxu0 0.0
    %1419 = vmatpush.msra.mxu0 0.0
    %1420 = vmatpush.msra.mxu0 0.0
    %1421 = vmatpush.msra.mxu0 %v1405
    %1422 = vmatpush.msra.mxu0 %v1404
    %1423 = vmatpush.msra.mxu0 %v1403
    %1424 = vmatpush.msra.mxu0 %v1402
    %1425 = vmatpush.msra.mxu0 %v1401
    %1426 = vmatpush.msra.mxu0 %v1400
    %1427 = vmatpush.msra.mxu0 %v1399
    %1428 = vmatpush.msra.mxu0 %v1398
    %1429 = vmatmul.f32.gmra.mxu0 %v1411
    %v1430 = vpop.f32.mrf.mxu0
    %v1431 = vadd.f32 %v1408, %v1430
    %1432 = vdwg.mxu0
    %v1433 = vmax.f32 %v1431, 0.0
    %v1434 = vld [vmem:[%s18] sm:$0xff]
    %v1435 = vld [vmem:[%s18 + $0x8] sm:$0xff]
    %v1436 = vld [vmem:[%s18 + $0x10] sm:$0xff]
    %v1437 = vld [vmem:[%s18 + $0x18] sm:$0xff]
    %v1438 = vld [vmem:[%s19] sm:$0x1]
    %v1440 = vperm.slane %v1438, 0
    %v1443 = vsel %vm1291, %v1433, 0
    %1445 = vmatpush.msra.mxu0 0.0
    %1446 = vmatpush.msra.mxu0 0.0
    %1447 = vmatpush.msra.mxu0 0.0
    %1448 = vmatpush.msra.mxu0 0.0
    %1449 = vmatpush.msra.mxu0 0.0
    %1450 = vmatpush.msra.mxu0 0.0
    %1451 = vmatpush.msra.mxu0 0.0
    %1452 = vmatpush.msra.mxu0 0.0
    %1453 = vmatpush.msra.mxu0 0.0
    %1454 = vmatpush.msra.mxu0 0.0
    %1455 = vmatpush.msra.mxu0 0.0
    %1456 = vmatpush.msra.mxu0 0.0
    %1457 = vmatpush.msra.mxu0 %v1437
    %1458 = vmatpush.msra.mxu0 %v1436
    %1459 = vmatpush.msra.mxu0 %v1435
    %1460 = vmatpush.msra.mxu0 %v1434
    %1461 = vmatmul.f32.gmra.mxu0 %v1443
    %v1462 = vpop.f32.mrf.mxu0
    %v1463 = vadd.f32 %v1440, %v1462
    %1464 = vdwg.mxu0
    %vm1465 = vcmask 9216
    %1466 = vst.msk [vmem:[#allocation2] sm:$0x3] %vm1465, %v1463
    // Predicated region
    $region82: #{forward.3} parent=1 // pred_check
      _
    $region83: #{forward.3} parent=1 // pred_check_branch
      %1468 = sbr.rel (0) target = $region85
    $region84: #{forward.3} parent=1 // pred_region
      %1470 = vsyncadd [#allocation3], 0
      %s1472 = sshll.u32 [#allocation2], 4
      %s1473 = int_to_ptr.vmem [resolvable:$true] %s1472
      %s1474 = sshll.u32 %s20, 4
      %s1475 = int_to_ptr.hbm [resolvable:$true] %s1474
      %1477 = dma.vmem_to_hbm [thread:$0]  %s1473, 32, %s1475, [#allocation3]
    $region85: #{forward.3} parent=1 // pred_fallthru
      _
    // Predicated region
    $region86: #{forward.3} parent=1 // pred_check
      _
    $region87: #{forward.3} parent=1 // pred_check_branch
      %1479 = sbr.rel (0) target = $region89
    $region88: #{forward.3} parent=1 // pred_region
      %1481 = dma.done [#allocation3], 32
    $region89: #{forward.3} parent=1 // pred_fallthru
      _
    %1482 = vsyncpa [#allocation3], 1

</llo_original>
